<compile_context>
chip_gen: v7x
topology: tpu7x:2x2x1
jax: 0.10.0
libtpu: 0.0.40
codegen_flags: <defaults>
</compile_context>

<pallas_src>
import jax
import jax.numpy as jnp
from jax.experimental import pallas as pl
from jax.experimental.pallas import tpu as pltpu

# Small stand-in for input_size=(128, 64): keep the 2:1 aspect ratio.
H_IN, W_IN = 16, 8
C_IN = 3
BATCH = 2

C1, C2, C3 = 16, 32, 64      # true conv output channels of the stand-in Net
CPAD = 128                   # lane-dense padded channel width
FEAT_DIM = C3
K = 3                        # all convs and the maxpool are 3x3

NORM_MEAN = jnp.array([0.485, 0.456, 0.406], dtype=jnp.float32)
NORM_STD = jnp.array([0.229, 0.224, 0.225], dtype=jnp.float32)


# ----------------------------------------------------------------------------
# Fused kernel: preprocess -> conv1 -> maxpool -> conv2 -> conv3 -> GAP+L2
# ----------------------------------------------------------------------------
def _fused_cnn_kernel(x_ref, prm_ref, prb_ref,
                      w1_ref, s1_ref, b1_ref,
                      w2_ref, s2_ref, b2_ref,
                      w3_ref, s3_ref, b3_ref,
                      o_ref,
                      p1, col1, p2, p3, col2, p4, col3):
    B, H, W, _ = x_ref.shape            # (2, 16, 8, 3)
    H2, W2 = H // 2, W // 2             # after maxpool:       8, 4
    H3, W3 = H // 4, W // 4             # after stride-2 conv: 4, 2
    taps = [(ky, kx) for ky in range(K) for kx in range(K)]

    # ---- preprocess: x * (1/std) + (-mean/std); zero-pad halo into p1 ------
    xn = (x_ref[...] * prm_ref[...].reshape(1, 1, 1, C_IN)
          + prb_ref[...].reshape(1, 1, 1, C_IN))
    p1[...] = jnp.zeros(p1.shape, p1.dtype)
    p1[:, 1:H + 1, 1:W + 1, :] = xn

    # ---- conv1 3x3/s1/p1 + BN + ReLU: single im2col matmul (K = 27) --------
    rows1 = B * H * W
    for t, (ky, kx) in enumerate(taps):
        patch = p1[:, ky:ky + H, kx:kx + W, :]                   # [B,H,W,3]
        col1[:, t * C_IN:(t + 1) * C_IN] = patch.reshape(rows1, C_IN)
    a1 = jnp.dot(col1[...].astype(jnp.bfloat16), w1_ref[...],
                 preferred_element_type=jnp.float32)             # [rows1, 128]
    a1 = jnp.maximum(a1 * s1_ref[...] + b1_ref[...], 0.0)

    # ---- maxpool 3x3/s2/p1: HxW -> H2xW2 ------------------------------------
    # Post-ReLU values are >= 0, so a zero halo is equivalent to -inf padding.
    p2[...] = jnp.zeros(p2.shape, p2.dtype)
    p2[:, 1:H + 1, 1:W + 1, :] = a1.reshape(B, H, W, CPAD)
    pooled = None
    for (ky, kx) in taps:
        patch = p2[:, pl.ds(ky, H2, stride=2), pl.ds(kx, W2, stride=2), :]
        pooled = patch if pooled is None else jnp.maximum(pooled, patch)

    # ---- conv2 3x3/s2/p1 + BN + ReLU: single im2col matmul (K = 144) --------
    p3[...] = jnp.zeros(p3.shape, p3.dtype)
    p3[:, 1:H2 + 1, 1:W2 + 1, :] = pooled
    rows2 = B * H3 * W3
    for t, (ky, kx) in enumerate(taps):
        patch = p3[:, pl.ds(ky, H3, stride=2), pl.ds(kx, W3, stride=2), :C1]
        col2[:, t * C1:(t + 1) * C1] = patch.reshape(rows2, C1)
    a2 = jnp.dot(col2[...].astype(jnp.bfloat16), w2_ref[...],
                 preferred_element_type=jnp.float32)             # [rows2, 128]
    a2 = jnp.maximum(a2 * s2_ref[...] + b2_ref[...], 0.0)

    # ---- conv3 3x3/s1/p1 + BN + ReLU: single im2col matmul (K = 288) --------
    p4[...] = jnp.zeros(p4.shape, p4.dtype)
    p4[:, 1:H3 + 1, 1:W3 + 1, :] = a2.reshape(B, H3, W3, CPAD)
    for t, (ky, kx) in enumerate(taps):
        patch = p4[:, ky:ky + H3, kx:kx + W3, :C2]
        col3[:, t * C2:(t + 1) * C2] = patch.reshape(rows2, C2)
    a3 = jnp.dot(col3[...].astype(jnp.bfloat16), w3_ref[...],
                 preferred_element_type=jnp.float32)             # [rows2, 128]
    a3 = jnp.maximum(a3 * s3_ref[...] + b3_ref[...], 0.0)

    # ---- global average pool + L2 normalize (F.normalize, eps=1e-12) --------
    feat = jnp.sum(a3.reshape(B, H3 * W3, CPAD), axis=1) * (1.0 / (H3 * W3))
    feat = feat[:, :FEAT_DIM]                        # drop zero-padded channels
    ssq = jnp.sum(feat * feat, axis=1, keepdims=True)
    inv = jax.lax.rsqrt(jnp.maximum(ssq, 1e-24))     # == 1 / max(||x||, 1e-12)
    o_ref[...] = feat * inv


# ----------------------------------------------------------------------------
# Wrapper: one pallas_call, whole-array VMEM specs, VMEM scratch intermediates.
# ----------------------------------------------------------------------------
def wrapped_simple_cnn_forward(x_nchw, params):
    # x_nchw: [B, 3, H, W] float32 in [0, 1], already at input_size.
    # TODO(synk): the image resize / uint8->float conversion inside the torch
    #             preprocess() has no clean Pallas equivalent; inputs are
    #             assumed pre-resized and scaled to [0, 1].
    x = jnp.transpose(x_nchw, (0, 2, 3, 1)).astype(jnp.float32)  # -> NHWC
    B, H, W, _ = x.shape
    H2, W2, H3, W3 = H // 2, W // 2, H // 4, W // 4

    out = jax.ShapeDtypeStruct((B, FEAT_DIM), jnp.float32)
    scratch = [
        pltpu.VMEM((B, H + 2, W + 2, C_IN), jnp.float32),     # p1: norm'd padded input
        pltpu.VMEM((B * H * W, K * K * C_IN), jnp.float32),   # col1 (im2col, K=27)
        pltpu.VMEM((B, H + 2, W + 2, CPAD), jnp.float32),     # p2: conv1 out, padded
        pltpu.VMEM((B, H2 + 2, W2 + 2, CPAD), jnp.float32),   # p3: maxpool out, padded
        pltpu.VMEM((B * H3 * W3, K * K * C1), jnp.float32),   # col2 (im2col, K=144)
        pltpu.VMEM((B, H3 + 2, W3 + 2, CPAD), jnp.float32),   # p4: conv2 out, padded
        pltpu.VMEM((B * H3 * W3, K * K * C2), jnp.float32),   # col3 (im2col, K=288)
    ]
    in_specs = [pl.BlockSpec(memory_space=pltpu.MemorySpace.VMEM)
                for _ in range(12)]
    out_spec = pl.BlockSpec(memory_space=pltpu.MemorySpace.VMEM)

    return pl.pallas_call(
        _fused_cnn_kernel,
        out_shape=out,
        in_specs=in_specs,
        out_specs=out_spec,
        scratch_shapes=scratch,
    )(x, params["pre_scale"], params["pre_shift"],
      params["conv1"]["w"], params["conv1"]["scale"], params["conv1"]["shift"],
      params["conv2"]["w"], params["conv2"]["scale"], params["conv2"]["shift"],
      params["conv3"]["w"], params["conv3"]["scale"], params["conv3"]["shift"])


# ----------------------------------------------------------------------------
# Deterministic parameter init (synthetic weights; no .pt loading)
# ----------------------------------------------------------------------------
def init_params(key):
    def conv_block(k, cin, cout):
        kw, kg, kb, km, kv = jax.random.split(k, 5)
        fan_in = K * K * cin
        w = jax.random.normal(kw, (K, K, cin, cout), jnp.float32)
        w = w / jnp.sqrt(float(fan_in))
        gamma = 1.0 + 0.1 * jax.random.normal(kg, (cout,), jnp.float32)
        beta = 0.05 * jax.random.normal(kb, (cout,), jnp.float32)
        rmean = 0.1 * jax.random.normal(km, (cout,), jnp.float32)
        rvar = 1.0 + 0.1 * jax.random.uniform(kv, (cout,), jnp.float32)
        scale = gamma / jnp.sqrt(rvar + 1e-5)          # folded eval-mode BN
        shift = beta - rmean * scale
        # im2col layout [K*K*cin, cout]; Cout zero-padded to 128 so every
        # stored activation slab is lane-dense; weights in bf16 for the MXU.
        w_mat = jnp.pad(w.reshape(K * K * cin, cout),
                        ((0, 0), (0, CPAD - cout))).astype(jnp.bfloat16)
        scale_p = jnp.pad(scale, (0, CPAD - cout)).reshape(1, CPAD)
        shift_p = jnp.pad(shift, (0, CPAD - cout)).reshape(1, CPAD)
        return dict(w=w_mat, scale=scale_p, shift=shift_p)

    k1, k2, k3 = jax.random.split(key, 3)
    return dict(
        # preprocess folded into a multiply-add: x * (1/std) + (-mean/std)
        pre_scale=(1.0 / NORM_STD).reshape(1, C_IN).astype(jnp.float32),
        pre_shift=(-NORM_MEAN / NORM_STD).reshape(1, C_IN).astype(jnp.float32),
        conv1=conv_block(k1, C_IN, C1),
        conv2=conv_block(k2, C1, C2),
        conv3=conv_block(k3, C2, C3),
    )


if __name__ == "__main__":
    key = jax.random.PRNGKey(0)
    pkey, xkey = jax.random.split(key)
    params = init_params(pkey)

    x = jax.random.uniform(xkey, (BATCH, C_IN, H_IN, W_IN), dtype=jnp.float32)

    fwd = jax.jit(lambda inp: wrapped_simple_cnn_forward(inp, params))
    out = jax.block_until_ready(fwd(x))

    assert out.shape == (BATCH, FEAT_DIM), out.shape
    norms = jnp.linalg.norm(out, axis=1)
    assert jnp.allclose(norms, 1.0, atol=1e-4), norms  # F.normalize semantics
    print("KERNEL_OK")
</pallas_src>

<mosaic_0001>
module attributes {stable_mosaic.version = 11 : i64} {
  func.func @_fused_cnn_kernel(%arg0: memref<2x16x8x3xf32, #tpu.memory_space<vmem>>, %arg1: memref<1x3xf32, #tpu.memory_space<vmem>>, %arg2: memref<1x3xf32, #tpu.memory_space<vmem>>, %arg3: memref<27x128xbf16, #tpu.memory_space<vmem>>, %arg4: memref<1x128xf32, #tpu.memory_space<vmem>>, %arg5: memref<1x128xf32, #tpu.memory_space<vmem>>, %arg6: memref<144x128xbf16, #tpu.memory_space<vmem>>, %arg7: memref<1x128xf32, #tpu.memory_space<vmem>>, %arg8: memref<1x128xf32, #tpu.memory_space<vmem>>, %arg9: memref<288x128xbf16, #tpu.memory_space<vmem>>, %arg10: memref<1x128xf32, #tpu.memory_space<vmem>>, %arg11: memref<1x128xf32, #tpu.memory_space<vmem>>, %arg12: memref<2x64xf32, #tpu.memory_space<vmem>>, %arg13: memref<2x18x10x3xf32, #tpu.memory_space<vmem>>, %arg14: memref<256x27xf32, #tpu.memory_space<vmem>>, %arg15: memref<2x18x10x128xf32, #tpu.memory_space<vmem>>, %arg16: memref<2x10x6x128xf32, #tpu.memory_space<vmem>>, %arg17: memref<16x144xf32, #tpu.memory_space<vmem>>, %arg18: memref<2x6x4x128xf32, #tpu.memory_space<vmem>>, %arg19: memref<16x288xf32, #tpu.memory_space<vmem>>) attributes {dimension_semantics = [], scalar_prefetch = 0 : i64, scratch_operands = 7 : i64, tpu.core_type = #tpu.core_type<tc>} {
    %c0 = arith.constant 0 : index
    %c0_0 = arith.constant 0 : index
    %c0_1 = arith.constant 0 : index
    %c0_2 = arith.constant 0 : index
    %0 = vector.load %arg0[%c0, %c0_0, %c0_1, %c0_2] : memref<2x16x8x3xf32, #tpu.memory_space<vmem>>, vector<2x16x8x3xf32>
    %c0_3 = arith.constant 0 : index
    %c0_4 = arith.constant 0 : index
    %1 = vector.load %arg1[%c0_3, %c0_4] : memref<1x3xf32, #tpu.memory_space<vmem>>, vector<1x3xf32>
    %2 = vector.shape_cast %1 : vector<1x3xf32> to vector<1x1x1x3xf32>
    %3 = vector.broadcast %2 : vector<1x1x1x3xf32> to vector<2x16x8x3xf32>
    %4 = arith.mulf %0, %3 : vector<2x16x8x3xf32>
    %c0_5 = arith.constant 0 : index
    %c0_6 = arith.constant 0 : index
    %5 = vector.load %arg2[%c0_5, %c0_6] : memref<1x3xf32, #tpu.memory_space<vmem>>, vector<1x3xf32>
    %6 = vector.shape_cast %5 : vector<1x3xf32> to vector<1x1x1x3xf32>
    %7 = vector.broadcast %6 : vector<1x1x1x3xf32> to vector<2x16x8x3xf32>
    %8 = arith.addf %4, %7 : vector<2x16x8x3xf32>
    %cst = arith.constant 0.000000e+00 : f32
    %9 = vector.broadcast %cst : f32 to vector<2x18x10x3xf32>
    %c0_7 = arith.constant 0 : index
    %c0_8 = arith.constant 0 : index
    %c0_9 = arith.constant 0 : index
    %c0_10 = arith.constant 0 : index
    %10 = vector.load %arg13[%c0_7, %c0_8, %c0_9, %c0_10] : memref<2x18x10x3xf32, #tpu.memory_space<vmem>>, vector<2x18x10x3xf32>
    tpu.vector_store %arg13[%c0_7, %c0_8, %c0_9, %c0_10], %9 {strides = array<i32>} : memref<2x18x10x3xf32, #tpu.memory_space<vmem>>, vector<2x18x10x3xf32>,
    %c0_11 = arith.constant 0 : index
    %c1 = arith.constant 1 : index
    %c1_12 = arith.constant 1 : index
    %c0_13 = arith.constant 0 : index
    %11 = vector.load %arg13[%c0_11, %c1, %c1_12, %c0_13] : memref<2x18x10x3xf32, #tpu.memory_space<vmem>>, vector<2x16x8x3xf32>
    tpu.vector_store %arg13[%c0_11, %c1, %c1_12, %c0_13], %8 {strides = array<i32>} : memref<2x18x10x3xf32, #tpu.memory_space<vmem>>, vector<2x16x8x3xf32>,
    %c0_14 = arith.constant 0 : index
    %c0_15 = arith.constant 0 : index
    %c0_16 = arith.constant 0 : index
    %c0_17 = arith.constant 0 : index
    %12 = vector.load %arg13[%c0_14, %c0_15, %c0_16, %c0_17] : memref<2x18x10x3xf32, #tpu.memory_space<vmem>>, vector<2x16x8x3xf32>
    %13 = vector.shape_cast %12 : vector<2x16x8x3xf32> to vector<256x3xf32>
    %c0_18 = arith.constant 0 : index
    %c0_19 = arith.constant 0 : index
    %14 = vector.load %arg14[%c0_18, %c0_19] : memref<256x27xf32, #tpu.memory_space<vmem>>, vector<256x3xf32>
    tpu.vector_store %arg14[%c0_18, %c0_19], %13 {strides = array<i32>} : memref<256x27xf32, #tpu.memory_space<vmem>>, vector<256x3xf32>,
    %c0_20 = arith.constant 0 : index
    %c0_21 = arith.constant 0 : index
    %c1_22 = arith.constant 1 : index
    %c0_23 = arith.constant 0 : index
    %15 = vector.load %arg13[%c0_20, %c0_21, %c1_22, %c0_23] : memref<2x18x10x3xf32, #tpu.memory_space<vmem>>, vector<2x16x8x3xf32>
    %16 = vector.shape_cast %15 : vector<2x16x8x3xf32> to vector<256x3xf32>
    %c0_24 = arith.constant 0 : index
    %c3 = arith.constant 3 : index
    %17 = vector.load %arg14[%c0_24, %c3] : memref<256x27xf32, #tpu.memory_space<vmem>>, vector<256x3xf32>
    tpu.vector_store %arg14[%c0_24, %c3], %16 {strides = array<i32>} : memref<256x27xf32, #tpu.memory_space<vmem>>, vector<256x3xf32>,
    %c0_25 = arith.constant 0 : index
    %c0_26 = arith.constant 0 : index
    %c2 = arith.constant 2 : index
    %c0_27 = arith.constant 0 : index
    %18 = vector.load %arg13[%c0_25, %c0_26, %c2, %c0_27] : memref<2x18x10x3xf32, #tpu.memory_space<vmem>>, vector<2x16x8x3xf32>
    %19 = vector.shape_cast %18 : vector<2x16x8x3xf32> to vector<256x3xf32>
    %c0_28 = arith.constant 0 : index
    %c6 = arith.constant 6 : index
    %20 = vector.load %arg14[%c0_28, %c6] : memref<256x27xf32, #tpu.memory_space<vmem>>, vector<256x3xf32>
    tpu.vector_store %arg14[%c0_28, %c6], %19 {strides = array<i32>} : memref<256x27xf32, #tpu.memory_space<vmem>>, vector<256x3xf32>,
    %c0_29 = arith.constant 0 : index
    %c1_30 = arith.constant 1 : index
    %c0_31 = arith.constant 0 : index
    %c0_32 = arith.constant 0 : index
    %21 = vector.load %arg13[%c0_29, %c1_30, %c0_31, %c0_32] : memref<2x18x10x3xf32, #tpu.memory_space<vmem>>, vector<2x16x8x3xf32>
    %22 = vector.shape_cast %21 : vector<2x16x8x3xf32> to vector<256x3xf32>
    %c0_33 = arith.constant 0 : index
    %c9 = arith.constant 9 : index
    %23 = vector.load %arg14[%c0_33, %c9] : memref<256x27xf32, #tpu.memory_space<vmem>>, vector<256x3xf32>
    tpu.vector_store %arg14[%c0_33, %c9], %22 {strides = array<i32>} : memref<256x27xf32, #tpu.memory_space<vmem>>, vector<256x3xf32>,
    %c0_34 = arith.constant 0 : index
    %c1_35 = arith.constant 1 : index
    %c1_36 = arith.constant 1 : index
    %c0_37 = arith.constant 0 : index
    %24 = vector.load %arg13[%c0_34, %c1_35, %c1_36, %c0_37] : memref<2x18x10x3xf32, #tpu.memory_space<vmem>>, vector<2x16x8x3xf32>
    %25 = vector.shape_cast %24 : vector<2x16x8x3xf32> to vector<256x3xf32>
    %c0_38 = arith.constant 0 : index
    %c12 = arith.constant 12 : index
    %26 = vector.load %arg14[%c0_38, %c12] : memref<256x27xf32, #tpu.memory_space<vmem>>, vector<256x3xf32>
    tpu.vector_store %arg14[%c0_38, %c12], %25 {strides = array<i32>} : memref<256x27xf32, #tpu.memory_space<vmem>>, vector<256x3xf32>,
    %c0_39 = arith.constant 0 : index
    %c1_40 = arith.constant 1 : index
    %c2_41 = arith.constant 2 : index
    %c0_42 = arith.constant 0 : index
    %27 = vector.load %arg13[%c0_39, %c1_40, %c2_41, %c0_42] : memref<2x18x10x3xf32, #tpu.memory_space<vmem>>, vector<2x16x8x3xf32>
    %28 = vector.shape_cast %27 : vector<2x16x8x3xf32> to vector<256x3xf32>
    %c0_43 = arith.constant 0 : index
    %c15 = arith.constant 15 : index
    %29 = vector.load %arg14[%c0_43, %c15] : memref<256x27xf32, #tpu.memory_space<vmem>>, vector<256x3xf32>
    tpu.vector_store %arg14[%c0_43, %c15], %28 {strides = array<i32>} : memref<256x27xf32, #tpu.memory_space<vmem>>, vector<256x3xf32>,
    %c0_44 = arith.constant 0 : index
    %c2_45 = arith.constant 2 : index
    %c0_46 = arith.constant 0 : index
    %c0_47 = arith.constant 0 : index
    %30 = vector.load %arg13[%c0_44, %c2_45, %c0_46, %c0_47] : memref<2x18x10x3xf32, #tpu.memory_space<vmem>>, vector<2x16x8x3xf32>
    %31 = vector.shape_cast %30 : vector<2x16x8x3xf32> to vector<256x3xf32>
    %c0_48 = arith.constant 0 : index
    %c18 = arith.constant 18 : index
    %32 = vector.load %arg14[%c0_48, %c18] : memref<256x27xf32, #tpu.memory_space<vmem>>, vector<256x3xf32>
    tpu.vector_store %arg14[%c0_48, %c18], %31 {strides = array<i32>} : memref<256x27xf32, #tpu.memory_space<vmem>>, vector<256x3xf32>,
    %c0_49 = arith.constant 0 : index
    %c2_50 = arith.constant 2 : index
    %c1_51 = arith.constant 1 : index
    %c0_52 = arith.constant 0 : index
    %33 = vector.load %arg13[%c0_49, %c2_50, %c1_51, %c0_52] : memref<2x18x10x3xf32, #tpu.memory_space<vmem>>, vector<2x16x8x3xf32>
    %34 = vector.shape_cast %33 : vector<2x16x8x3xf32> to vector<256x3xf32>
    %c0_53 = arith.constant 0 : index
    %c21 = arith.constant 21 : index
    %35 = vector.load %arg14[%c0_53, %c21] : memref<256x27xf32, #tpu.memory_space<vmem>>, vector<256x3xf32>
    tpu.vector_store %arg14[%c0_53, %c21], %34 {strides = array<i32>} : memref<256x27xf32, #tpu.memory_space<vmem>>, vector<256x3xf32>,
    %c0_54 = arith.constant 0 : index
    %c2_55 = arith.constant 2 : index
    %c2_56 = arith.constant 2 : index
    %c0_57 = arith.constant 0 : index
    %36 = vector.load %arg13[%c0_54, %c2_55, %c2_56, %c0_57] : memref<2x18x10x3xf32, #tpu.memory_space<vmem>>, vector<2x16x8x3xf32>
    %37 = vector.shape_cast %36 : vector<2x16x8x3xf32> to vector<256x3xf32>
    %c0_58 = arith.constant 0 : index
    %c24 = arith.constant 24 : index
    %38 = vector.load %arg14[%c0_58, %c24] : memref<256x27xf32, #tpu.memory_space<vmem>>, vector<256x3xf32>
    tpu.vector_store %arg14[%c0_58, %c24], %37 {strides = array<i32>} : memref<256x27xf32, #tpu.memory_space<vmem>>, vector<256x3xf32>,
    %c0_59 = arith.constant 0 : index
    %c0_60 = arith.constant 0 : index
    %39 = vector.load %arg14[%c0_59, %c0_60] : memref<256x27xf32, #tpu.memory_space<vmem>>, vector<256x27xf32>
    %40 = arith.truncf %39 : vector<256x27xf32> to vector<256x27xbf16>
    %c0_61 = arith.constant 0 : index
    %c0_62 = arith.constant 0 : index
    %41 = vector.load %arg3[%c0_61, %c0_62] : memref<27x128xbf16, #tpu.memory_space<vmem>>, vector<27x128xbf16>
    %cst_63 = arith.constant dense<0.000000e+00> : vector<256x128xf32>
    %42 = tpu.matmul %40, %41, %cst_63 {dimension_numbers = #tpu.dot_dimension_numbers<[1], [0], [0], [1], [0, 0, 1, 1], [], []>} : vector<256x27xbf16>, vector<27x128xbf16>, vector<256x128xf32> -> vector<256x128xf32>
    %c0_64 = arith.constant 0 : index
    %c0_65 = arith.constant 0 : index
    %43 = vector.load %arg4[%c0_64, %c0_65] : memref<1x128xf32, #tpu.memory_space<vmem>>, vector<1x128xf32>
    %44 = vector.broadcast %43 : vector<1x128xf32> to vector<256x128xf32>
    %45 = arith.mulf %42, %44 : vector<256x128xf32>
    %c0_66 = arith.constant 0 : index
    %c0_67 = arith.constant 0 : index
    %46 = vector.load %arg5[%c0_66, %c0_67] : memref<1x128xf32, #tpu.memory_space<vmem>>, vector<1x128xf32>
    %47 = vector.broadcast %46 : vector<1x128xf32> to vector<256x128xf32>
    %48 = arith.addf %45, %47 : vector<256x128xf32>
    %cst_68 = arith.constant 0.000000e+00 : f32
    %49 = vector.broadcast %cst_68 : f32 to vector<256x128xf32>
    %50 = arith.maximumf %48, %49 : vector<256x128xf32>
    %cst_69 = arith.constant 0.000000e+00 : f32
    %51 = vector.broadcast %cst_69 : f32 to vector<2x18x10x128xf32>
    %c0_70 = arith.constant 0 : index
    %c0_71 = arith.constant 0 : index
    %c0_72 = arith.constant 0 : index
    %c0_73 = arith.constant 0 : index
    %52 = vector.load %arg15[%c0_70, %c0_71, %c0_72, %c0_73] : memref<2x18x10x128xf32, #tpu.memory_space<vmem>>, vector<2x18x10x128xf32>
    tpu.vector_store %arg15[%c0_70, %c0_71, %c0_72, %c0_73], %51 {strides = array<i32>} : memref<2x18x10x128xf32, #tpu.memory_space<vmem>>, vector<2x18x10x128xf32>,
    %53 = vector.shape_cast %50 : vector<256x128xf32> to vector<2x16x8x128xf32>
    %c0_74 = arith.constant 0 : index
    %c1_75 = arith.constant 1 : index
    %c1_76 = arith.constant 1 : index
    %c0_77 = arith.constant 0 : index
    %54 = vector.load %arg15[%c0_74, %c1_75, %c1_76, %c0_77] : memref<2x18x10x128xf32, #tpu.memory_space<vmem>>, vector<2x16x8x128xf32>
    tpu.vector_store %arg15[%c0_74, %c1_75, %c1_76, %c0_77], %53 {strides = array<i32>} : memref<2x18x10x128xf32, #tpu.memory_space<vmem>>, vector<2x16x8x128xf32>,
    %c0_78 = arith.constant 0 : index
    %c0_79 = arith.constant 0 : index
    %c0_80 = arith.constant 0 : index
    %c0_81 = arith.constant 0 : index
    %55 = tpu.strided_load %arg15[%c0_78, %c0_79, %c0_80, %c0_81] {strides = array<i32: 1, 2, 2, 1>} : memref<2x18x10x128xf32, #tpu.memory_space<vmem>>, vector<2x8x4x128xf32>
    %c0_82 = arith.constant 0 : index
    %c0_83 = arith.constant 0 : index
    %c1_84 = arith.constant 1 : index
    %c0_85 = arith.constant 0 : index
    %56 = tpu.strided_load %arg15[%c0_82, %c0_83, %c1_84, %c0_85] {strides = array<i32: 1, 2, 2, 1>} : memref<2x18x10x128xf32, #tpu.memory_space<vmem>>, vector<2x8x4x128xf32>
    %57 = arith.maximumf %55, %56 : vector<2x8x4x128xf32>
    %c0_86 = arith.constant 0 : index
    %c0_87 = arith.constant 0 : index
    %c2_88 = arith.constant 2 : index
    %c0_89 = arith.constant 0 : index
    %58 = tpu.strided_load %arg15[%c0_86, %c0_87, %c2_88, %c0_89] {strides = array<i32: 1, 2, 2, 1>} : memref<2x18x10x128xf32, #tpu.memory_space<vmem>>, vector<2x8x4x128xf32>
    %59 = arith.maximumf %57, %58 : vector<2x8x4x128xf32>
    %c0_90 = arith.constant 0 : index
    %c1_91 = arith.constant 1 : index
    %c0_92 = arith.constant 0 : index
    %c0_93 = arith.constant 0 : index
    %60 = tpu.strided_load %arg15[%c0_90, %c1_91, %c0_92, %c0_93] {strides = array<i32: 1, 2, 2, 1>} : memref<2x18x10x128xf32, #tpu.memory_space<vmem>>, vector<2x8x4x128xf32>
    %61 = arith.maximumf %59, %60 : vector<2x8x4x128xf32>
    %c0_94 = arith.constant 0 : index
    %c1_95 = arith.constant 1 : index
    %c1_96 = arith.constant 1 : index
    %c0_97 = arith.constant 0 : index
    %62 = tpu.strided_load %arg15[%c0_94, %c1_95, %c1_96, %c0_97] {strides = array<i32: 1, 2, 2, 1>} : memref<2x18x10x128xf32, #tpu.memory_space<vmem>>, vector<2x8x4x128xf32>
    %63 = arith.maximumf %61, %62 : vector<2x8x4x128xf32>
    %c0_98 = arith.constant 0 : index
    %c1_99 = arith.constant 1 : index
    %c2_100 = arith.constant 2 : index
    %c0_101 = arith.constant 0 : index
    %64 = tpu.strided_load %arg15[%c0_98, %c1_99, %c2_100, %c0_101] {strides = array<i32: 1, 2, 2, 1>} : memref<2x18x10x128xf32, #tpu.memory_space<vmem>>, vector<2x8x4x128xf32>
    %65 = arith.maximumf %63, %64 : vector<2x8x4x128xf32>
    %c0_102 = arith.constant 0 : index
    %c2_103 = arith.constant 2 : index
    %c0_104 = arith.constant 0 : index
    %c0_105 = arith.constant 0 : index
    %66 = tpu.strided_load %arg15[%c0_102, %c2_103, %c0_104, %c0_105] {strides = array<i32: 1, 2, 2, 1>} : memref<2x18x10x128xf32, #tpu.memory_space<vmem>>, vector<2x8x4x128xf32>
    %67 = arith.maximumf %65, %66 : vector<2x8x4x128xf32>
    %c0_106 = arith.constant 0 : index
    %c2_107 = arith.constant 2 : index
    %c1_108 = arith.constant 1 : index
    %c0_109 = arith.constant 0 : index
    %68 = tpu.strided_load %arg15[%c0_106, %c2_107, %c1_108, %c0_109] {strides = array<i32: 1, 2, 2, 1>} : memref<2x18x10x128xf32, #tpu.memory_space<vmem>>, vector<2x8x4x128xf32>
    %69 = arith.maximumf %67, %68 : vector<2x8x4x128xf32>
    %c0_110 = arith.constant 0 : index
    %c2_111 = arith.constant 2 : index
    %c2_112 = arith.constant 2 : index
    %c0_113 = arith.constant 0 : index
    %70 = tpu.strided_load %arg15[%c0_110, %c2_111, %c2_112, %c0_113] {strides = array<i32: 1, 2, 2, 1>} : memref<2x18x10x128xf32, #tpu.memory_space<vmem>>, vector<2x8x4x128xf32>
    %71 = arith.maximumf %69, %70 : vector<2x8x4x128xf32>
    %cst_114 = arith.constant 0.000000e+00 : f32
    %72 = vector.broadcast %cst_114 : f32 to vector<2x10x6x128xf32>
    %c0_115 = arith.constant 0 : index
    %c0_116 = arith.constant 0 : index
    %c0_117 = arith.constant 0 : index
    %c0_118 = arith.constant 0 : index
    %73 = vector.load %arg16[%c0_115, %c0_116, %c0_117, %c0_118] : memref<2x10x6x128xf32, #tpu.memory_space<vmem>>, vector<2x10x6x128xf32>
    tpu.vector_store %arg16[%c0_115, %c0_116, %c0_117, %c0_118], %72 {strides = array<i32>} : memref<2x10x6x128xf32, #tpu.memory_space<vmem>>, vector<2x10x6x128xf32>,
    %c0_119 = arith.constant 0 : index
    %c1_120 = arith.constant 1 : index
    %c1_121 = arith.constant 1 : index
    %c0_122 = arith.constant 0 : index
    %74 = vector.load %arg16[%c0_119, %c1_120, %c1_121, %c0_122] : memref<2x10x6x128xf32, #tpu.memory_space<vmem>>, vector<2x8x4x128xf32>
    tpu.vector_store %arg16[%c0_119, %c1_120, %c1_121, %c0_122], %71 {strides = array<i32>} : memref<2x10x6x128xf32, #tpu.memory_space<vmem>>, vector<2x8x4x128xf32>,
    %c0_123 = arith.constant 0 : index
    %c0_124 = arith.constant 0 : index
    %c0_125 = arith.constant 0 : index
    %c0_126 = arith.constant 0 : index
    %75 = tpu.strided_load %arg16[%c0_123, %c0_124, %c0_125, %c0_126] {strides = array<i32: 1, 2, 2, 1>} : memref<2x10x6x128xf32, #tpu.memory_space<vmem>>, vector<2x4x2x16xf32>
    %76 = vector.shape_cast %75 : vector<2x4x2x16xf32> to vector<16x16xf32>
    %c0_127 = arith.constant 0 : index
    %c0_128 = arith.constant 0 : index
    %77 = vector.load %arg17[%c0_127, %c0_128] : memref<16x144xf32, #tpu.memory_space<vmem>>, vector<16x16xf32>
    tpu.vector_store %arg17[%c0_127, %c0_128], %76 {strides = array<i32>} : memref<16x144xf32, #tpu.memory_space<vmem>>, vector<16x16xf32>,
    %c0_129 = arith.constant 0 : index
    %c0_130 = arith.constant 0 : index
    %c1_131 = arith.constant 1 : index
    %c0_132 = arith.constant 0 : index
    %78 = tpu.strided_load %arg16[%c0_129, %c0_130, %c1_131, %c0_132] {strides = array<i32: 1, 2, 2, 1>} : memref<2x10x6x128xf32, #tpu.memory_space<vmem>>, vector<2x4x2x16xf32>
    %79 = vector.shape_cast %78 : vector<2x4x2x16xf32> to vector<16x16xf32>
    %c0_133 = arith.constant 0 : index
    %c16 = arith.constant 16 : index
    %80 = vector.load %arg17[%c0_133, %c16] : memref<16x144xf32, #tpu.memory_space<vmem>>, vector<16x16xf32>
    tpu.vector_store %arg17[%c0_133, %c16], %79 {strides = array<i32>} : memref<16x144xf32, #tpu.memory_space<vmem>>, vector<16x16xf32>,
    %c0_134 = arith.constant 0 : index
    %c0_135 = arith.constant 0 : index
    %c2_136 = arith.constant 2 : index
    %c0_137 = arith.constant 0 : index
    %81 = tpu.strided_load %arg16[%c0_134, %c0_135, %c2_136, %c0_137] {strides = array<i32: 1, 2, 2, 1>} : memref<2x10x6x128xf32, #tpu.memory_space<vmem>>, vector<2x4x2x16xf32>
    %82 = vector.shape_cast %81 : vector<2x4x2x16xf32> to vector<16x16xf32>
    %c0_138 = arith.constant 0 : index
    %c32 = arith.constant 32 : index
    %83 = vector.load %arg17[%c0_138, %c32] : memref<16x144xf32, #tpu.memory_space<vmem>>, vector<16x16xf32>
    tpu.vector_store %arg17[%c0_138, %c32], %82 {strides = array<i32>} : memref<16x144xf32, #tpu.memory_space<vmem>>, vector<16x16xf32>,
    %c0_139 = arith.constant 0 : index
    %c1_140 = arith.constant 1 : index
    %c0_141 = arith.constant 0 : index
    %c0_142 = arith.constant 0 : index
    %84 = tpu.strided_load %arg16[%c0_139, %c1_140, %c0_141, %c0_142] {strides = array<i32: 1, 2, 2, 1>} : memref<2x10x6x128xf32, #tpu.memory_space<vmem>>, vector<2x4x2x16xf32>
    %85 = vector.shape_cast %84 : vector<2x4x2x16xf32> to vector<16x16xf32>
    %c0_143 = arith.constant 0 : index
    %c48 = arith.constant 48 : index
    %86 = vector.load %arg17[%c0_143, %c48] : memref<16x144xf32, #tpu.memory_space<vmem>>, vector<16x16xf32>
    tpu.vector_store %arg17[%c0_143, %c48], %85 {strides = array<i32>} : memref<16x144xf32, #tpu.memory_space<vmem>>, vector<16x16xf32>,
    %c0_144 = arith.constant 0 : index
    %c1_145 = arith.constant 1 : index
    %c1_146 = arith.constant 1 : index
    %c0_147 = arith.constant 0 : index
    %87 = tpu.strided_load %arg16[%c0_144, %c1_145, %c1_146, %c0_147] {strides = array<i32: 1, 2, 2, 1>} : memref<2x10x6x128xf32, #tpu.memory_space<vmem>>, vector<2x4x2x16xf32>
    %88 = vector.shape_cast %87 : vector<2x4x2x16xf32> to vector<16x16xf32>
    %c0_148 = arith.constant 0 : index
    %c64 = arith.constant 64 : index
    %89 = vector.load %arg17[%c0_148, %c64] : memref<16x144xf32, #tpu.memory_space<vmem>>, vector<16x16xf32>
    tpu.vector_store %arg17[%c0_148, %c64], %88 {strides = array<i32>} : memref<16x144xf32, #tpu.memory_space<vmem>>, vector<16x16xf32>,
    %c0_149 = arith.constant 0 : index
    %c1_150 = arith.constant 1 : index
    %c2_151 = arith.constant 2 : index
    %c0_152 = arith.constant 0 : index
    %90 = tpu.strided_load %arg16[%c0_149, %c1_150, %c2_151, %c0_152] {strides = array<i32: 1, 2, 2, 1>} : memref<2x10x6x128xf32, #tpu.memory_space<vmem>>, vector<2x4x2x16xf32>
    %91 = vector.shape_cast %90 : vector<2x4x2x16xf32> to vector<16x16xf32>
    %c0_153 = arith.constant 0 : index
    %c80 = arith.constant 80 : index
    %92 = vector.load %arg17[%c0_153, %c80] : memref<16x144xf32, #tpu.memory_space<vmem>>, vector<16x16xf32>
    tpu.vector_store %arg17[%c0_153, %c80], %91 {strides = array<i32>} : memref<16x144xf32, #tpu.memory_space<vmem>>, vector<16x16xf32>,
    %c0_154 = arith.constant 0 : index
    %c2_155 = arith.constant 2 : index
    %c0_156 = arith.constant 0 : index
    %c0_157 = arith.constant 0 : index
    %93 = tpu.strided_load %arg16[%c0_154, %c2_155, %c0_156, %c0_157] {strides = array<i32: 1, 2, 2, 1>} : memref<2x10x6x128xf32, #tpu.memory_space<vmem>>, vector<2x4x2x16xf32>
    %94 = vector.shape_cast %93 : vector<2x4x2x16xf32> to vector<16x16xf32>
    %c0_158 = arith.constant 0 : index
    %c96 = arith.constant 96 : index
    %95 = vector.load %arg17[%c0_158, %c96] : memref<16x144xf32, #tpu.memory_space<vmem>>, vector<16x16xf32>
    tpu.vector_store %arg17[%c0_158, %c96], %94 {strides = array<i32>} : memref<16x144xf32, #tpu.memory_space<vmem>>, vector<16x16xf32>,
    %c0_159 = arith.constant 0 : index
    %c2_160 = arith.constant 2 : index
    %c1_161 = arith.constant 1 : index
    %c0_162 = arith.constant 0 : index
    %96 = tpu.strided_load %arg16[%c0_159, %c2_160, %c1_161, %c0_162] {strides = array<i32: 1, 2, 2, 1>} : memref<2x10x6x128xf32, #tpu.memory_space<vmem>>, vector<2x4x2x16xf32>
    %97 = vector.shape_cast %96 : vector<2x4x2x16xf32> to vector<16x16xf32>
    %c0_163 = arith.constant 0 : index
    %c112 = arith.constant 112 : index
    %98 = vector.load %arg17[%c0_163, %c112] : memref<16x144xf32, #tpu.memory_space<vmem>>, vector<16x16xf32>
    tpu.vector_store %arg17[%c0_163, %c112], %97 {strides = array<i32>} : memref<16x144xf32, #tpu.memory_space<vmem>>, vector<16x16xf32>,
    %c0_164 = arith.constant 0 : index
    %c2_165 = arith.constant 2 : index
    %c2_166 = arith.constant 2 : index
    %c0_167 = arith.constant 0 : index
    %99 = tpu.strided_load %arg16[%c0_164, %c2_165, %c2_166, %c0_167] {strides = array<i32: 1, 2, 2, 1>} : memref<2x10x6x128xf32, #tpu.memory_space<vmem>>, vector<2x4x2x16xf32>
    %100 = vector.shape_cast %99 : vector<2x4x2x16xf32> to vector<16x16xf32>
    %c0_168 = arith.constant 0 : index
    %c128 = arith.constant 128 : index
    %101 = vector.load %arg17[%c0_168, %c128] : memref<16x144xf32, #tpu.memory_space<vmem>>, vector<16x16xf32>
    tpu.vector_store %arg17[%c0_168, %c128], %100 {strides = array<i32>} : memref<16x144xf32, #tpu.memory_space<vmem>>, vector<16x16xf32>,
    %c0_169 = arith.constant 0 : index
    %c0_170 = arith.constant 0 : index
    %102 = vector.load %arg17[%c0_169, %c0_170] : memref<16x144xf32, #tpu.memory_space<vmem>>, vector<16x144xf32>
    %103 = arith.truncf %102 : vector<16x144xf32> to vector<16x144xbf16>
    %c0_171 = arith.constant 0 : index
    %c0_172 = arith.constant 0 : index
    %104 = vector.load %arg6[%c0_171, %c0_172] : memref<144x128xbf16, #tpu.memory_space<vmem>>, vector<144x128xbf16>
    %cst_173 = arith.constant dense<0.000000e+00> : vector<16x128xf32>
    %105 = tpu.matmul %103, %104, %cst_173 {dimension_numbers = #tpu.dot_dimension_numbers<[1], [0], [0], [1], [0, 0, 1, 1], [], []>} : vector<16x144xbf16>, vector<144x128xbf16>, vector<16x128xf32> -> vector<16x128xf32>
    %c0_174 = arith.constant 0 : index
    %c0_175 = arith.constant 0 : index
    %106 = vector.load %arg7[%c0_174, %c0_175] : memref<1x128xf32, #tpu.memory_space<vmem>>, vector<1x128xf32>
    %107 = vector.broadcast %106 : vector<1x128xf32> to vector<16x128xf32>
    %108 = arith.mulf %105, %107 : vector<16x128xf32>
    %c0_176 = arith.constant 0 : index
    %c0_177 = arith.constant 0 : index
    %109 = vector.load %arg8[%c0_176, %c0_177] : memref<1x128xf32, #tpu.memory_space<vmem>>, vector<1x128xf32>
    %110 = vector.broadcast %109 : vector<1x128xf32> to vector<16x128xf32>
    %111 = arith.addf %108, %110 : vector<16x128xf32>
    %cst_178 = arith.constant 0.000000e+00 : f32
    %112 = vector.broadcast %cst_178 : f32 to vector<16x128xf32>
    %113 = arith.maximumf %111, %112 : vector<16x128xf32>
    %cst_179 = arith.constant 0.000000e+00 : f32
    %114 = vector.broadcast %cst_179 : f32 to vector<2x6x4x128xf32>
    %c0_180 = arith.constant 0 : index
    %c0_181 = arith.constant 0 : index
    %c0_182 = arith.constant 0 : index
    %c0_183 = arith.constant 0 : index
    %115 = vector.load %arg18[%c0_180, %c0_181, %c0_182, %c0_183] : memref<2x6x4x128xf32, #tpu.memory_space<vmem>>, vector<2x6x4x128xf32>
    tpu.vector_store %arg18[%c0_180, %c0_181, %c0_182, %c0_183], %114 {strides = array<i32>} : memref<2x6x4x128xf32, #tpu.memory_space<vmem>>, vector<2x6x4x128xf32>,
    %116 = vector.shape_cast %113 : vector<16x128xf32> to vector<2x4x2x128xf32>
    %c0_184 = arith.constant 0 : index
    %c1_185 = arith.constant 1 : index
    %c1_186 = arith.constant 1 : index
    %c0_187 = arith.constant 0 : index
    %117 = vector.load %arg18[%c0_184, %c1_185, %c1_186, %c0_187] : memref<2x6x4x128xf32, #tpu.memory_space<vmem>>, vector<2x4x2x128xf32>
    tpu.vector_store %arg18[%c0_184, %c1_185, %c1_186, %c0_187], %116 {strides = array<i32>} : memref<2x6x4x128xf32, #tpu.memory_space<vmem>>, vector<2x4x2x128xf32>,
    %c0_188 = arith.constant 0 : index
    %c0_189 = arith.constant 0 : index
    %c0_190 = arith.constant 0 : index
    %c0_191 = arith.constant 0 : index
    %118 = vector.load %arg18[%c0_188, %c0_189, %c0_190, %c0_191] : memref<2x6x4x128xf32, #tpu.memory_space<vmem>>, vector<2x4x2x32xf32>
    %119 = vector.shape_cast %118 : vector<2x4x2x32xf32> to vector<16x32xf32>
    %c0_192 = arith.constant 0 : index
    %c0_193 = arith.constant 0 : index
    %120 = vector.load %arg19[%c0_192, %c0_193] : memref<16x288xf32, #tpu.memory_space<vmem>>, vector<16x32xf32>
    tpu.vector_store %arg19[%c0_192, %c0_193], %119 {strides = array<i32>} : memref<16x288xf32, #tpu.memory_space<vmem>>, vector<16x32xf32>,
    %c0_194 = arith.constant 0 : index
    %c0_195 = arith.constant 0 : index
    %c1_196 = arith.constant 1 : index
    %c0_197 = arith.constant 0 : index
    %121 = vector.load %arg18[%c0_194, %c0_195, %c1_196, %c0_197] : memref<2x6x4x128xf32, #tpu.memory_space<vmem>>, vector<2x4x2x32xf32>
    %122 = vector.shape_cast %121 : vector<2x4x2x32xf32> to vector<16x32xf32>
    %c0_198 = arith.constant 0 : index
    %c32_199 = arith.constant 32 : index
    %123 = vector.load %arg19[%c0_198, %c32_199] : memref<16x288xf32, #tpu.memory_space<vmem>>, vector<16x32xf32>
    tpu.vector_store %arg19[%c0_198, %c32_199], %122 {strides = array<i32>} : memref<16x288xf32, #tpu.memory_space<vmem>>, vector<16x32xf32>,
    %c0_200 = arith.constant 0 : index
    %c0_201 = arith.constant 0 : index
    %c2_202 = arith.constant 2 : index
    %c0_203 = arith.constant 0 : index
    %124 = vector.load %arg18[%c0_200, %c0_201, %c2_202, %c0_203] : memref<2x6x4x128xf32, #tpu.memory_space<vmem>>, vector<2x4x2x32xf32>
    %125 = vector.shape_cast %124 : vector<2x4x2x32xf32> to vector<16x32xf32>
    %c0_204 = arith.constant 0 : index
    %c64_205 = arith.constant 64 : index
    %126 = vector.load %arg19[%c0_204, %c64_205] : memref<16x288xf32, #tpu.memory_space<vmem>>, vector<16x32xf32>
    tpu.vector_store %arg19[%c0_204, %c64_205], %125 {strides = array<i32>} : memref<16x288xf32, #tpu.memory_space<vmem>>, vector<16x32xf32>,
    %c0_206 = arith.constant 0 : index
    %c1_207 = arith.constant 1 : index
    %c0_208 = arith.constant 0 : index
    %c0_209 = arith.constant 0 : index
    %127 = vector.load %arg18[%c0_206, %c1_207, %c0_208, %c0_209] : memref<2x6x4x128xf32, #tpu.memory_space<vmem>>, vector<2x4x2x32xf32>
    %128 = vector.shape_cast %127 : vector<2x4x2x32xf32> to vector<16x32xf32>
    %c0_210 = arith.constant 0 : index
    %c96_211 = arith.constant 96 : index
    %129 = vector.load %arg19[%c0_210, %c96_211] : memref<16x288xf32, #tpu.memory_space<vmem>>, vector<16x32xf32>
    tpu.vector_store %arg19[%c0_210, %c96_211], %128 {strides = array<i32>} : memref<16x288xf32, #tpu.memory_space<vmem>>, vector<16x32xf32>,
    %c0_212 = arith.constant 0 : index
    %c1_213 = arith.constant 1 : index
    %c1_214 = arith.constant 1 : index
    %c0_215 = arith.constant 0 : index
    %130 = vector.load %arg18[%c0_212, %c1_213, %c1_214, %c0_215] : memref<2x6x4x128xf32, #tpu.memory_space<vmem>>, vector<2x4x2x32xf32>
    %131 = vector.shape_cast %130 : vector<2x4x2x32xf32> to vector<16x32xf32>
    %c0_216 = arith.constant 0 : index
    %c128_217 = arith.constant 128 : index
    %132 = vector.load %arg19[%c0_216, %c128_217] : memref<16x288xf32, #tpu.memory_space<vmem>>, vector<16x32xf32>
    tpu.vector_store %arg19[%c0_216, %c128_217], %131 {strides = array<i32>} : memref<16x288xf32, #tpu.memory_space<vmem>>, vector<16x32xf32>,
    %c0_218 = arith.constant 0 : index
    %c1_219 = arith.constant 1 : index
    %c2_220 = arith.constant 2 : index
    %c0_221 = arith.constant 0 : index
    %133 = vector.load %arg18[%c0_218, %c1_219, %c2_220, %c0_221] : memref<2x6x4x128xf32, #tpu.memory_space<vmem>>, vector<2x4x2x32xf32>
    %134 = vector.shape_cast %133 : vector<2x4x2x32xf32> to vector<16x32xf32>
    %c0_222 = arith.constant 0 : index
    %c160 = arith.constant 160 : index
    %135 = vector.load %arg19[%c0_222, %c160] : memref<16x288xf32, #tpu.memory_space<vmem>>, vector<16x32xf32>
    tpu.vector_store %arg19[%c0_222, %c160], %134 {strides = array<i32>} : memref<16x288xf32, #tpu.memory_space<vmem>>, vector<16x32xf32>,
    %c0_223 = arith.constant 0 : index
    %c2_224 = arith.constant 2 : index
    %c0_225 = arith.constant 0 : index
    %c0_226 = arith.constant 0 : index
    %136 = vector.load %arg18[%c0_223, %c2_224, %c0_225, %c0_226] : memref<2x6x4x128xf32, #tpu.memory_space<vmem>>, vector<2x4x2x32xf32>
    %137 = vector.shape_cast %136 : vector<2x4x2x32xf32> to vector<16x32xf32>
    %c0_227 = arith.constant 0 : index
    %c192 = arith.constant 192 : index
    %138 = vector.load %arg19[%c0_227, %c192] : memref<16x288xf32, #tpu.memory_space<vmem>>, vector<16x32xf32>
    tpu.vector_store %arg19[%c0_227, %c192], %137 {strides = array<i32>} : memref<16x288xf32, #tpu.memory_space<vmem>>, vector<16x32xf32>,
    %c0_228 = arith.constant 0 : index
    %c2_229 = arith.constant 2 : index
    %c1_230 = arith.constant 1 : index
    %c0_231 = arith.constant 0 : index
    %139 = vector.load %arg18[%c0_228, %c2_229, %c1_230, %c0_231] : memref<2x6x4x128xf32, #tpu.memory_space<vmem>>, vector<2x4x2x32xf32>
    %140 = vector.shape_cast %139 : vector<2x4x2x32xf32> to vector<16x32xf32>
    %c0_232 = arith.constant 0 : index
    %c224 = arith.constant 224 : index
    %141 = vector.load %arg19[%c0_232, %c224] : memref<16x288xf32, #tpu.memory_space<vmem>>, vector<16x32xf32>
    tpu.vector_store %arg19[%c0_232, %c224], %140 {strides = array<i32>} : memref<16x288xf32, #tpu.memory_space<vmem>>, vector<16x32xf32>,
    %c0_233 = arith.constant 0 : index
    %c2_234 = arith.constant 2 : index
    %c2_235 = arith.constant 2 : index
    %c0_236 = arith.constant 0 : index
    %142 = vector.load %arg18[%c0_233, %c2_234, %c2_235, %c0_236] : memref<2x6x4x128xf32, #tpu.memory_space<vmem>>, vector<2x4x2x32xf32>
    %143 = vector.shape_cast %142 : vector<2x4x2x32xf32> to vector<16x32xf32>
    %c0_237 = arith.constant 0 : index
    %c256 = arith.constant 256 : index
    %144 = vector.load %arg19[%c0_237, %c256] : memref<16x288xf32, #tpu.memory_space<vmem>>, vector<16x32xf32>
    tpu.vector_store %arg19[%c0_237, %c256], %143 {strides = array<i32>} : memref<16x288xf32, #tpu.memory_space<vmem>>, vector<16x32xf32>,
    %c0_238 = arith.constant 0 : index
    %c0_239 = arith.constant 0 : index
    %145 = vector.load %arg19[%c0_238, %c0_239] : memref<16x288xf32, #tpu.memory_space<vmem>>, vector<16x288xf32>
    %146 = arith.truncf %145 : vector<16x288xf32> to vector<16x288xbf16>
    %c0_240 = arith.constant 0 : index
    %c0_241 = arith.constant 0 : index
    %147 = vector.load %arg9[%c0_240, %c0_241] : memref<288x128xbf16, #tpu.memory_space<vmem>>, vector<288x128xbf16>
    %cst_242 = arith.constant dense<0.000000e+00> : vector<16x128xf32>
    %148 = tpu.matmul %146, %147, %cst_242 {dimension_numbers = #tpu.dot_dimension_numbers<[1], [0], [0], [1], [0, 0, 1, 1], [], []>} : vector<16x288xbf16>, vector<288x128xbf16>, vector<16x128xf32> -> vector<16x128xf32>
    %c0_243 = arith.constant 0 : index
    %c0_244 = arith.constant 0 : index
    %149 = vector.load %arg10[%c0_243, %c0_244] : memref<1x128xf32, #tpu.memory_space<vmem>>, vector<1x128xf32>
    %150 = vector.broadcast %149 : vector<1x128xf32> to vector<16x128xf32>
    %151 = arith.mulf %148, %150 : vector<16x128xf32>
    %c0_245 = arith.constant 0 : index
    %c0_246 = arith.constant 0 : index
    %152 = vector.load %arg11[%c0_245, %c0_246] : memref<1x128xf32, #tpu.memory_space<vmem>>, vector<1x128xf32>
    %153 = vector.broadcast %152 : vector<1x128xf32> to vector<16x128xf32>
    %154 = arith.addf %151, %153 : vector<16x128xf32>
    %cst_247 = arith.constant 0.000000e+00 : f32
    %155 = vector.broadcast %cst_247 : f32 to vector<16x128xf32>
    %156 = arith.maximumf %154, %155 : vector<16x128xf32>
    %157 = vector.shape_cast %156 : vector<16x128xf32> to vector<2x8x128xf32>
    %cst_248 = arith.constant dense<0.000000e+00> : vector<2x128xf32>
    %158 = vector.multi_reduction <add>, %157, %cst_248 [1] : vector<2x8x128xf32> to vector<2x128xf32>
    %cst_249 = arith.constant 1.250000e-01 : f32
    %159 = vector.broadcast %cst_249 : f32 to vector<2x128xf32>
    %160 = arith.mulf %158, %159 : vector<2x128xf32>
    %161 = vector.extract_strided_slice %160 {offsets = [0, 0], sizes = [2, 64], strides = [1, 1]} : vector<2x128xf32> to vector<2x64xf32>
    %162 = arith.mulf %161, %161 : vector<2x64xf32>
    %cst_250 = arith.constant dense<0.000000e+00> : vector<2xf32>
    %163 = vector.multi_reduction <add>, %162, %cst_250 [1] : vector<2x64xf32> to vector<2xf32>
    %164 = vector.shape_cast %163 : vector<2xf32> to vector<2x1xf32>
    %cst_251 = arith.constant 1.000000e-24 : f32
    %165 = vector.broadcast %cst_251 : f32 to vector<2x1xf32>
    %166 = arith.maximumf %164, %165 : vector<2x1xf32>
    %167 = math.rsqrt %166 : vector<2x1xf32>
    %168 = vector.broadcast %167 : vector<2x1xf32> to vector<2x64xf32>
    %169 = arith.mulf %161, %168 : vector<2x64xf32>
    %c0_252 = arith.constant 0 : index
    %c0_253 = arith.constant 0 : index
    %170 = vector.load %arg12[%c0_252, %c0_253] : memref<2x64xf32, #tpu.memory_space<vmem>>, vector<2x64xf32>
    tpu.vector_store %arg12[%c0_252, %c0_253], %169 {strides = array<i32>} : memref<2x64xf32, #tpu.memory_space<vmem>>, vector<2x64xf32>,
    return
  }
}

</mosaic_0001>

<llo_original>
// kernel: _lambda_.1
$region0: #{_lambda_.1}
  #allocation0 [shape = 'u32[]', space=smem, size = 0x4, offset = 0x4, fixed_abs, tag = 'smem constant byte address 0x4 - core index']
  #allocation1 [shape = 'u32[144,128]{1,0:T(1,128)}', space=vmem, size = 0x12000, scoped, tag = 'internal scratch']
  #allocation2 [shape = 'f32[2,18,10,3]{3,2,1,0:T(8,128)}', space=vmem, size = 0x48000, scoped, tag = 'scratch operand']
  #allocation3 [shape = 'f32[256,27]{1,0:T(8,128)}', space=vmem, size = 0x20000, scoped, tag = 'scratch operand']
  #allocation4 [shape = 'f32[2,18,10,128]{3,2,1,0:T(8,128)}', space=vmem, size = 0x48000, scoped, tag = 'scratch operand']
  #allocation5 [shape = 'f32[2,10,6,128]{3,2,1,0:T(8,128)}', space=vmem, size = 0x14000, scoped, tag = 'scratch operand']
  #allocation6 [shape = 'f32[16,144]{1,0:T(8,128)}', space=vmem, size = 0x4000, scoped, tag = 'scratch operand']
  #allocation7 [shape = 'f32[2,6,4,128]{3,2,1,0:T(4,128)}', space=vmem, size = 0x6000, scoped, tag = 'scratch operand']
  #allocation8 [shape = 'f32[16,288]{1,0:T(8,128)}', space=vmem, size = 0x6000, scoped, tag = 'scratch operand']
  %s0 = inlined_call_operand.vmem [shape: f32[2,16,8,3], index: 0, kind: input, shape index: {}]
  %s1 = inlined_call_operand.vmem [shape: f32[1,3], index: 1, kind: input, shape index: {}]
  %s2 = inlined_call_operand.vmem [shape: f32[1,3], index: 2, kind: input, shape index: {}]
  %s3 = inlined_call_operand.vmem [shape: bf16[27,128], index: 3, kind: input, shape index: {}]
  %s4 = inlined_call_operand.vmem [shape: f32[1,128], index: 4, kind: input, shape index: {}]
  %s5 = inlined_call_operand.vmem [shape: f32[1,128], index: 5, kind: input, shape index: {}]
  %s6 = inlined_call_operand.vmem [shape: bf16[144,128], index: 6, kind: input, shape index: {}]
  %s7 = inlined_call_operand.vmem [shape: f32[1,128], index: 7, kind: input, shape index: {}]
  %s8 = inlined_call_operand.vmem [shape: f32[1,128], index: 8, kind: input, shape index: {}]
  %s9 = inlined_call_operand.vmem [shape: bf16[288,128], index: 9, kind: input, shape index: {}]
  %s10 = inlined_call_operand.vmem [shape: f32[1,128], index: 10, kind: input, shape index: {}]
  %s11 = inlined_call_operand.vmem [shape: f32[1,128], index: 11, kind: input, shape index: {}]
  %s12 = inlined_call_operand.hbm [shape: f32[2,64], index: 12, kind: output, shape index: {}]
  %s13 = sld [smem:[#allocation0]]
  $region58: #{_lambda_.1} parent=0
    _
  %s15 = ssub.s32 1, %s13
  %s16 = scalar_select 0, %s15, %s13
  $region1: #{_lambda_.1} parent=0
    #allocation9 [shape = 'u8[1024]{0}', space=vmem, size = 0x400, scoped, tag = 'output window, operand 0, single buffered']
    #allocation10 [shape = 's32[1]{0}', space=sflag, size = 0x4, scoped, tag = 'scoped memory for _lambda_.1']
    %17 = vsyncpa [#allocation10], 0
    // Predicated region
    $region2: #{_lambda_.1} parent=1 // pred_check
      _
    $region3: #{_lambda_.1} parent=1 // pred_check_branch
      %19 = sbr.rel (0) target = $region5
    $region4: #{_lambda_.1} parent=1 // pred_region
      _
    $region5: #{_lambda_.1} parent=1 // pred_fallthru
      _
    // Predicated region
    $region6: #{_lambda_.1} parent=1 // pred_check
      _
    $region7: #{_lambda_.1} parent=1 // pred_check_branch
      %21 = sbr.rel (0) target = $region9
    $region8: #{_lambda_.1} parent=1 // pred_region
      _
    $region9: #{_lambda_.1} parent=1 // pred_fallthru
      _
    // Predicated region
    $region10: #{_lambda_.1} parent=1 // pred_check
      _
    $region11: #{_lambda_.1} parent=1 // pred_check_branch
      %23 = sbr.rel (0) target = $region13
    $region12: #{_lambda_.1} parent=1 // pred_region
      _
    $region13: #{_lambda_.1} parent=1 // pred_fallthru
      _
    // Predicated region
    $region14: #{_lambda_.1} parent=1 // pred_check
      _
    $region15: #{_lambda_.1} parent=1 // pred_check_branch
      %25 = sbr.rel (0) target = $region17
    $region16: #{_lambda_.1} parent=1 // pred_region
      _
    $region17: #{_lambda_.1} parent=1 // pred_fallthru
      _
    // Predicated region
    $region18: #{_lambda_.1} parent=1 // pred_check
      _
    $region19: #{_lambda_.1} parent=1 // pred_check_branch
      %27 = sbr.rel (0) target = $region21
    $region20: #{_lambda_.1} parent=1 // pred_region
      _
    $region21: #{_lambda_.1} parent=1 // pred_fallthru
      _
    // Predicated region
    $region22: #{_lambda_.1} parent=1 // pred_check
      _
    $region23: #{_lambda_.1} parent=1 // pred_check_branch
      %29 = sbr.rel (0) target = $region25
    $region24: #{_lambda_.1} parent=1 // pred_region
      _
    $region25: #{_lambda_.1} parent=1 // pred_fallthru
      _
    // Predicated region
    $region26: #{_lambda_.1} parent=1 // pred_check
      _
    $region27: #{_lambda_.1} parent=1 // pred_check_branch
      %31 = sbr.rel (0) target = $region29
    $region28: #{_lambda_.1} parent=1 // pred_region
      _
    $region29: #{_lambda_.1} parent=1 // pred_fallthru
      _
    // Predicated region
    $region30: #{_lambda_.1} parent=1 // pred_check
      _
    $region31: #{_lambda_.1} parent=1 // pred_check_branch
      %33 = sbr.rel (0) target = $region33
    $region32: #{_lambda_.1} parent=1 // pred_region
      _
    $region33: #{_lambda_.1} parent=1 // pred_fallthru
      _
    // Predicated region
    $region34: #{_lambda_.1} parent=1 // pred_check
      _
    $region35: #{_lambda_.1} parent=1 // pred_check_branch
      %35 = sbr.rel (0) target = $region37
    $region36: #{_lambda_.1} parent=1 // pred_region
      _
    $region37: #{_lambda_.1} parent=1 // pred_fallthru
      _
    // Predicated region
    $region38: #{_lambda_.1} parent=1 // pred_check
      _
    $region39: #{_lambda_.1} parent=1 // pred_check_branch
      %37 = sbr.rel (0) target = $region41
    $region40: #{_lambda_.1} parent=1 // pred_region
      _
    $region41: #{_lambda_.1} parent=1 // pred_fallthru
      _
    // Predicated region
    $region42: #{_lambda_.1} parent=1 // pred_check
      _
    $region43: #{_lambda_.1} parent=1 // pred_check_branch
      %39 = sbr.rel (0) target = $region45
    $region44: #{_lambda_.1} parent=1 // pred_region
      _
    $region45: #{_lambda_.1} parent=1 // pred_fallthru
      _
    // Predicated region
    $region46: #{_lambda_.1} parent=1 // pred_check
      _
    $region47: #{_lambda_.1} parent=1 // pred_check_branch
      %41 = sbr.rel (0) target = $region49
    $region48: #{_lambda_.1} parent=1 // pred_region
      _
    $region49: #{_lambda_.1} parent=1 // pred_fallthru
      _
    %v43 = vld [vmem:[%s0] sm:$0xff]
    %v44 = vld [vmem:[%s0 + $0x8] sm:$0xff]
    %v45 = vld [vmem:[%s0 + $0x10] sm:$0xff]
    %v46 = vld [vmem:[%s0 + $0x18] sm:$0xff]
    %v47 = vld [vmem:[%s0 + $0x20] sm:$0xff]
    %v48 = vld [vmem:[%s0 + $0x28] sm:$0xff]
    %v49 = vld [vmem:[%s0 + $0x30] sm:$0xff]
    %v50 = vld [vmem:[%s0 + $0x38] sm:$0xff]
    %v51 = vld [vmem:[%s0 + $0x40] sm:$0xff]
    %v52 = vld [vmem:[%s0 + $0x48] sm:$0xff]
    %v53 = vld [vmem:[%s0 + $0x50] sm:$0xff]
    %v54 = vld [vmem:[%s0 + $0x58] sm:$0xff]
    %v55 = vld [vmem:[%s0 + $0x60] sm:$0xff]
    %v56 = vld [vmem:[%s0 + $0x68] sm:$0xff]
    %v57 = vld [vmem:[%s0 + $0x70] sm:$0xff]
    %v58 = vld [vmem:[%s0 + $0x78] sm:$0xff]
    %v59 = vld [vmem:[%s0 + $0x80] sm:$0xff]
    %v60 = vld [vmem:[%s0 + $0x88] sm:$0xff]
    %v61 = vld [vmem:[%s0 + $0x90] sm:$0xff]
    %v62 = vld [vmem:[%s0 + $0x98] sm:$0xff]
    %v63 = vld [vmem:[%s0 + $0xa0] sm:$0xff]
    %v64 = vld [vmem:[%s0 + $0xa8] sm:$0xff]
    %v65 = vld [vmem:[%s0 + $0xb0] sm:$0xff]
    %v66 = vld [vmem:[%s0 + $0xb8] sm:$0xff]
    %v67 = vld [vmem:[%s0 + $0xc0] sm:$0xff]
    %v68 = vld [vmem:[%s0 + $0xc8] sm:$0xff]
    %v69 = vld [vmem:[%s0 + $0xd0] sm:$0xff]
    %v70 = vld [vmem:[%s0 + $0xd8] sm:$0xff]
    %v71 = vld [vmem:[%s0 + $0xe0] sm:$0xff]
    %v72 = vld [vmem:[%s0 + $0xe8] sm:$0xff]
    %v73 = vld [vmem:[%s0 + $0xf0] sm:$0xff]
    %v74 = vld [vmem:[%s0 + $0xf8] sm:$0xff]
    %v75 = vld [vmem:[%s1] sm:$0x1]
    %v77 = vlaneseq
    %v78 = vshrl.u32 %v77, 7
    %v79 = vsub.s32 0, %v78
    %v80 = vrot.slane %v75, %v79
    %v82 = vmul.f32 %v43, %v80
    %v83 = vmul.f32 %v44, %v80
    %v84 = vmul.f32 %v45, %v80
    %v85 = vmul.f32 %v46, %v80
    %v86 = vmul.f32 %v47, %v80
    %v87 = vmul.f32 %v48, %v80
    %v88 = vmul.f32 %v49, %v80
    %v89 = vmul.f32 %v50, %v80
    %v90 = vmul.f32 %v51, %v80
    %v91 = vmul.f32 %v52, %v80
    %v92 = vmul.f32 %v53, %v80
    %v93 = vmul.f32 %v54, %v80
    %v94 = vmul.f32 %v55, %v80
    %v95 = vmul.f32 %v56, %v80
    %v96 = vmul.f32 %v57, %v80
    %v97 = vmul.f32 %v58, %v80
    %v98 = vmul.f32 %v59, %v80
    %v99 = vmul.f32 %v60, %v80
    %v100 = vmul.f32 %v61, %v80
    %v101 = vmul.f32 %v62, %v80
    %v102 = vmul.f32 %v63, %v80
    %v103 = vmul.f32 %v64, %v80
    %v104 = vmul.f32 %v65, %v80
    %v105 = vmul.f32 %v66, %v80
    %v106 = vmul.f32 %v67, %v80
    %v107 = vmul.f32 %v68, %v80
    %v108 = vmul.f32 %v69, %v80
    %v109 = vmul.f32 %v70, %v80
    %v110 = vmul.f32 %v71, %v80
    %v111 = vmul.f32 %v72, %v80
    %v112 = vmul.f32 %v73, %v80
    %v113 = vmul.f32 %v74, %v80
    %v114 = vld [vmem:[%s2] sm:$0x1]
    %v116 = vlaneseq
    %v117 = vshrl.u32 %v116, 7
    %v118 = vsub.s32 0, %v117
    %v119 = vrot.slane %v114, %v118
    %v121 = vadd.f32 %v82, %v119
    %v122 = vadd.f32 %v83, %v119
    %v123 = vadd.f32 %v84, %v119
    %v124 = vadd.f32 %v85, %v119
    %v125 = vadd.f32 %v86, %v119
    %v126 = vadd.f32 %v87, %v119
    %v127 = vadd.f32 %v88, %v119
    %v128 = vadd.f32 %v89, %v119
    %v129 = vadd.f32 %v90, %v119
    %v130 = vadd.f32 %v91, %v119
    %v131 = vadd.f32 %v92, %v119
    %v132 = vadd.f32 %v93, %v119
    %v133 = vadd.f32 %v94, %v119
    %v134 = vadd.f32 %v95, %v119
    %v135 = vadd.f32 %v96, %v119
    %v136 = vadd.f32 %v97, %v119
    %v137 = vadd.f32 %v98, %v119
    %v138 = vadd.f32 %v99, %v119
    %v139 = vadd.f32 %v100, %v119
    %v140 = vadd.f32 %v101, %v119
    %v141 = vadd.f32 %v102, %v119
    %v142 = vadd.f32 %v103, %v119
    %v143 = vadd.f32 %v104, %v119
    %v144 = vadd.f32 %v105, %v119
    %v145 = vadd.f32 %v106, %v119
    %v146 = vadd.f32 %v107, %v119
    %v147 = vadd.f32 %v108, %v119
    %v148 = vadd.f32 %v109, %v119
    %v149 = vadd.f32 %v110, %v119
    %v150 = vadd.f32 %v111, %v119
    %v151 = vadd.f32 %v112, %v119
    %v152 = vadd.f32 %v113, %v119
    %vm153 = vcmask 23552
    %154 = vst.msk [vmem:[#allocation2] sm:$0xff] %vm153, 0.0
    %vm155 = vcmask 17408
    %156 = vst.msk [vmem:[#allocation2 + $0x8] sm:$0x3] %vm155, 0.0
    %157 = vst.msk [vmem:[#allocation2 + $0x10] sm:$0xff] %vm153, 0.0
    %158 = vst.msk [vmem:[#allocation2 + $0x18] sm:$0x3] %vm155, 0.0
    %159 = vst.msk [vmem:[#allocation2 + $0x20] sm:$0xff] %vm153, 0.0
    %160 = vst.msk [vmem:[#allocation2 + $0x28] sm:$0x3] %vm155, 0.0
    %161 = vst.msk [vmem:[#allocation2 + $0x30] sm:$0xff] %vm153, 0.0
    %162 = vst.msk [vmem:[#allocation2 + $0x38] sm:$0x3] %vm155, 0.0
    %163 = vst.msk [vmem:[#allocation2 + $0x40] sm:$0xff] %vm153, 0.0
    %164 = vst.msk [vmem:[#allocation2 + $0x48] sm:$0x3] %vm155, 0.0
    %165 = vst.msk [vmem:[#allocation2 + $0x50] sm:$0xff] %vm153, 0.0
    %166 = vst.msk [vmem:[#allocation2 + $0x58] sm:$0x3] %vm155, 0.0
    %167 = vst.msk [vmem:[#allocation2 + $0x60] sm:$0xff] %vm153, 0.0
    %168 = vst.msk [vmem:[#allocation2 + $0x68] sm:$0x3] %vm155, 0.0
    %169 = vst.msk [vmem:[#allocation2 + $0x70] sm:$0xff] %vm153, 0.0
    %170 = vst.msk [vmem:[#allocation2 + $0x78] sm:$0x3] %vm155, 0.0
    %171 = vst.msk [vmem:[#allocation2 + $0x80] sm:$0xff] %vm153, 0.0
    %172 = vst.msk [vmem:[#allocation2 + $0x88] sm:$0x3] %vm155, 0.0
    %173 = vst.msk [vmem:[#allocation2 + $0x90] sm:$0xff] %vm153, 0.0
    %174 = vst.msk [vmem:[#allocation2 + $0x98] sm:$0x3] %vm155, 0.0
    %175 = vst.msk [vmem:[#allocation2 + $0xa0] sm:$0xff] %vm153, 0.0
    %176 = vst.msk [vmem:[#allocation2 + $0xa8] sm:$0x3] %vm155, 0.0
    %177 = vst.msk [vmem:[#allocation2 + $0xb0] sm:$0xff] %vm153, 0.0
    %178 = vst.msk [vmem:[#allocation2 + $0xb8] sm:$0x3] %vm155, 0.0
    %179 = vst.msk [vmem:[#allocation2 + $0xc0] sm:$0xff] %vm153, 0.0
    %180 = vst.msk [vmem:[#allocation2 + $0xc8] sm:$0x3] %vm155, 0.0
    %181 = vst.msk [vmem:[#allocation2 + $0xd0] sm:$0xff] %vm153, 0.0
    %182 = vst.msk [vmem:[#allocation2 + $0xd8] sm:$0x3] %vm155, 0.0
    %183 = vst.msk [vmem:[#allocation2 + $0xe0] sm:$0xff] %vm153, 0.0
    %184 = vst.msk [vmem:[#allocation2 + $0xe8] sm:$0x3] %vm155, 0.0
    %185 = vst.msk [vmem:[#allocation2 + $0xf0] sm:$0xff] %vm153, 0.0
    %186 = vst.msk [vmem:[#allocation2 + $0xf8] sm:$0x3] %vm155, 0.0
    %187 = vst.msk [vmem:[#allocation2 + $0x100] sm:$0xff] %vm153, 0.0
    %188 = vst.msk [vmem:[#allocation2 + $0x108] sm:$0x3] %vm155, 0.0
    %189 = vst.msk [vmem:[#allocation2 + $0x110] sm:$0xff] %vm153, 0.0
    %190 = vst.msk [vmem:[#allocation2 + $0x118] sm:$0x3] %vm155, 0.0
    %191 = vst.msk [vmem:[#allocation2 + $0x120] sm:$0xff] %vm153, 0.0
    %192 = vst.msk [vmem:[#allocation2 + $0x128] sm:$0x3] %vm155, 0.0
    %193 = vst.msk [vmem:[#allocation2 + $0x130] sm:$0xff] %vm153, 0.0
    %194 = vst.msk [vmem:[#allocation2 + $0x138] sm:$0x3] %vm155, 0.0
    %195 = vst.msk [vmem:[#allocation2 + $0x140] sm:$0xff] %vm153, 0.0
    %196 = vst.msk [vmem:[#allocation2 + $0x148] sm:$0x3] %vm155, 0.0
    %197 = vst.msk [vmem:[#allocation2 + $0x150] sm:$0xff] %vm153, 0.0
    %198 = vst.msk [vmem:[#allocation2 + $0x158] sm:$0x3] %vm155, 0.0
    %199 = vst.msk [vmem:[#allocation2 + $0x160] sm:$0xff] %vm153, 0.0
    %200 = vst.msk [vmem:[#allocation2 + $0x168] sm:$0x3] %vm155, 0.0
    %201 = vst.msk [vmem:[#allocation2 + $0x170] sm:$0xff] %vm153, 0.0
    %202 = vst.msk [vmem:[#allocation2 + $0x178] sm:$0x3] %vm155, 0.0
    %203 = vst.msk [vmem:[#allocation2 + $0x180] sm:$0xff] %vm153, 0.0
    %204 = vst.msk [vmem:[#allocation2 + $0x188] sm:$0x3] %vm155, 0.0
    %205 = vst.msk [vmem:[#allocation2 + $0x190] sm:$0xff] %vm153, 0.0
    %206 = vst.msk [vmem:[#allocation2 + $0x198] sm:$0x3] %vm155, 0.0
    %207 = vst.msk [vmem:[#allocation2 + $0x1a0] sm:$0xff] %vm153, 0.0
    %208 = vst.msk [vmem:[#allocation2 + $0x1a8] sm:$0x3] %vm155, 0.0
    %209 = vst.msk [vmem:[#allocation2 + $0x1b0] sm:$0xff] %vm153, 0.0
    %210 = vst.msk [vmem:[#allocation2 + $0x1b8] sm:$0x3] %vm155, 0.0
    %211 = vst.msk [vmem:[#allocation2 + $0x1c0] sm:$0xff] %vm153, 0.0
    %212 = vst.msk [vmem:[#allocation2 + $0x1c8] sm:$0x3] %vm155, 0.0
    %213 = vst.msk [vmem:[#allocation2 + $0x1d0] sm:$0xff] %vm153, 0.0
    %214 = vst.msk [vmem:[#allocation2 + $0x1d8] sm:$0x3] %vm155, 0.0
    %215 = vst.msk [vmem:[#allocation2 + $0x1e0] sm:$0xff] %vm153, 0.0
    %216 = vst.msk [vmem:[#allocation2 + $0x1e8] sm:$0x3] %vm155, 0.0
    %217 = vst.msk [vmem:[#allocation2 + $0x1f0] sm:$0xff] %vm153, 0.0
    %218 = vst.msk [vmem:[#allocation2 + $0x1f8] sm:$0x3] %vm155, 0.0
    %219 = vst.msk [vmem:[#allocation2 + $0x200] sm:$0xff] %vm153, 0.0
    %220 = vst.msk [vmem:[#allocation2 + $0x208] sm:$0x3] %vm155, 0.0
    %221 = vst.msk [vmem:[#allocation2 + $0x210] sm:$0xff] %vm153, 0.0
    %222 = vst.msk [vmem:[#allocation2 + $0x218] sm:$0x3] %vm155, 0.0
    %223 = vst.msk [vmem:[#allocation2 + $0x220] sm:$0xff] %vm153, 0.0
    %224 = vst.msk [vmem:[#allocation2 + $0x228] sm:$0x3] %vm155, 0.0
    %225 = vst.msk [vmem:[#allocation2 + $0x230] sm:$0xff] %vm153, 0.0
    %226 = vst.msk [vmem:[#allocation2 + $0x238] sm:$0x3] %vm155, 0.0
    %s227 = scalar_lea.vmem [#allocation2], 16
    %228 = vst.msk [vmem:[%s227 + $0x1] sm:$0xff] %vm153, %v121
    %229 = vst.msk [vmem:[%s227 + $0x11] sm:$0xff] %vm153, %v122
    %230 = vst.msk [vmem:[%s227 + $0x21] sm:$0xff] %vm153, %v123
    %231 = vst.msk [vmem:[%s227 + $0x31] sm:$0xff] %vm153, %v124
    %232 = vst.msk [vmem:[%s227 + $0x41] sm:$0xff] %vm153, %v125
    %233 = vst.msk [vmem:[%s227 + $0x51] sm:$0xff] %vm153, %v126
    %234 = vst.msk [vmem:[%s227 + $0x61] sm:$0xff] %vm153, %v127
    %235 = vst.msk [vmem:[%s227 + $0x71] sm:$0xff] %vm153, %v128
    %236 = vst.msk [vmem:[%s227 + $0x81] sm:$0xff] %vm153, %v129
    %237 = vst.msk [vmem:[%s227 + $0x91] sm:$0xff] %vm153, %v130
    %238 = vst.msk [vmem:[%s227 + $0xa1] sm:$0xff] %vm153, %v131
    %239 = vst.msk [vmem:[%s227 + $0xb1] sm:$0xff] %vm153, %v132
    %240 = vst.msk [vmem:[%s227 + $0xc1] sm:$0xff] %vm153, %v133
    %241 = vst.msk [vmem:[%s227 + $0xd1] sm:$0xff] %vm153, %v134
    %242 = vst.msk [vmem:[%s227 + $0xe1] sm:$0xff] %vm153, %v135
    %243 = vst.msk [vmem:[%s227 + $0xf1] sm:$0xff] %vm153, %v136
    %244 = vst.msk [vmem:[%s227 + $0x121] sm:$0xff] %vm153, %v137
    %245 = vst.msk [vmem:[%s227 + $0x131] sm:$0xff] %vm153, %v138
    %246 = vst.msk [vmem:[%s227 + $0x141] sm:$0xff] %vm153, %v139
    %247 = vst.msk [vmem:[%s227 + $0x151] sm:$0xff] %vm153, %v140
    %248 = vst.msk [vmem:[%s227 + $0x161] sm:$0xff] %vm153, %v141
    %249 = vst.msk [vmem:[%s227 + $0x171] sm:$0xff] %vm153, %v142
    %250 = vst.msk [vmem:[%s227 + $0x181] sm:$0xff] %vm153, %v143
    %251 = vst.msk [vmem:[%s227 + $0x191] sm:$0xff] %vm153, %v144
    %252 = vst.msk [vmem:[%s227 + $0x1a1] sm:$0xff] %vm153, %v145
    %253 = vst.msk [vmem:[%s227 + $0x1b1] sm:$0xff] %vm153, %v146
    %254 = vst.msk [vmem:[%s227 + $0x1c1] sm:$0xff] %vm153, %v147
    %255 = vst.msk [vmem:[%s227 + $0x1d1] sm:$0xff] %vm153, %v148
    %256 = vst.msk [vmem:[%s227 + $0x1e1] sm:$0xff] %vm153, %v149
    %257 = vst.msk [vmem:[%s227 + $0x1f1] sm:$0xff] %vm153, %v150
    %258 = vst.msk [vmem:[%s227 + $0x201] sm:$0xff] %vm153, %v151
    %259 = vst.msk [vmem:[%s227 + $0x211] sm:$0xff] %vm153, %v152
    %v260 = vld [vmem:[#allocation2] sm:$0xff]
    %v261 = vld [vmem:[#allocation2 + $0x10] sm:$0xff]
    %v262 = vld [vmem:[#allocation2 + $0x20] sm:$0xff]
    %v263 = vld [vmem:[#allocation2 + $0x30] sm:$0xff]
    %v264 = vld [vmem:[#allocation2 + $0x40] sm:$0xff]
    %v265 = vld [vmem:[#allocation2 + $0x50] sm:$0xff]
    %v266 = vld [vmem:[#allocation2 + $0x60] sm:$0xff]
    %v267 = vld [vmem:[#allocation2 + $0x70] sm:$0xff]
    %v268 = vld [vmem:[#allocation2 + $0x80] sm:$0xff]
    %v269 = vld [vmem:[#allocation2 + $0x90] sm:$0xff]
    %v270 = vld [vmem:[#allocation2 + $0xa0] sm:$0xff]
    %v271 = vld [vmem:[#allocation2 + $0xb0] sm:$0xff]
    %v272 = vld [vmem:[#allocation2 + $0xc0] sm:$0xff]
    %v273 = vld [vmem:[#allocation2 + $0xd0] sm:$0xff]
    %v274 = vld [vmem:[#allocation2 + $0xe0] sm:$0xff]
    %v275 = vld [vmem:[#allocation2 + $0xf0] sm:$0xff]
    %v276 = vld [vmem:[#allocation2 + $0x120] sm:$0xff]
    %v277 = vld [vmem:[#allocation2 + $0x130] sm:$0xff]
    %v278 = vld [vmem:[#allocation2 + $0x140] sm:$0xff]
    %v279 = vld [vmem:[#allocation2 + $0x150] sm:$0xff]
    %v280 = vld [vmem:[#allocation2 + $0x160] sm:$0xff]
    %v281 = vld [vmem:[#allocation2 + $0x170] sm:$0xff]
    %v282 = vld [vmem:[#allocation2 + $0x180] sm:$0xff]
    %v283 = vld [vmem:[#allocation2 + $0x190] sm:$0xff]
    %v284 = vld [vmem:[#allocation2 + $0x1a0] sm:$0xff]
    %v285 = vld [vmem:[#allocation2 + $0x1b0] sm:$0xff]
    %v286 = vld [vmem:[#allocation2 + $0x1c0] sm:$0xff]
    %v287 = vld [vmem:[#allocation2 + $0x1d0] sm:$0xff]
    %v288 = vld [vmem:[#allocation2 + $0x1e0] sm:$0xff]
    %v289 = vld [vmem:[#allocation2 + $0x1f0] sm:$0xff]
    %v290 = vld [vmem:[#allocation2 + $0x200] sm:$0xff]
    %v291 = vld [vmem:[#allocation2 + $0x210] sm:$0xff]
    %292 = vst.msk [vmem:[#allocation3] sm:$0xff] %vm153, %v260
    %293 = vst.msk [vmem:[#allocation3 + $0x8] sm:$0xff] %vm153, %v261
    %294 = vst.msk [vmem:[#allocation3 + $0x10] sm:$0xff] %vm153, %v262
    %295 = vst.msk [vmem:[#allocation3 + $0x18] sm:$0xff] %vm153, %v263
    %296 = vst.msk [vmem:[#allocation3 + $0x20] sm:$0xff] %vm153, %v264
    %297 = vst.msk [vmem:[#allocation3 + $0x28] sm:$0xff] %vm153, %v265
    %298 = vst.msk [vmem:[#allocation3 + $0x30] sm:$0xff] %vm153, %v266
    %299 = vst.msk [vmem:[#allocation3 + $0x38] sm:$0xff] %vm153, %v267
    %300 = vst.msk [vmem:[#allocation3 + $0x40] sm:$0xff] %vm153, %v268
    %301 = vst.msk [vmem:[#allocation3 + $0x48] sm:$0xff] %vm153, %v269
    %302 = vst.msk [vmem:[#allocation3 + $0x50] sm:$0xff] %vm153, %v270
    %303 = vst.msk [vmem:[#allocation3 + $0x58] sm:$0xff] %vm153, %v271
    %304 = vst.msk [vmem:[#allocation3 + $0x60] sm:$0xff] %vm153, %v272
    %305 = vst.msk [vmem:[#allocation3 + $0x68] sm:$0xff] %vm153, %v273
    %306 = vst.msk [vmem:[#allocation3 + $0x70] sm:$0xff] %vm153, %v274
    %307 = vst.msk [vmem:[#allocation3 + $0x78] sm:$0xff] %vm153, %v275
    %308 = vst.msk [vmem:[#allocation3 + $0x80] sm:$0xff] %vm153, %v276
    %309 = vst.msk [vmem:[#allocation3 + $0x88] sm:$0xff] %vm153, %v277
    %310 = vst.msk [vmem:[#allocation3 + $0x90] sm:$0xff] %vm153, %v278
    %311 = vst.msk [vmem:[#allocation3 + $0x98] sm:$0xff] %vm153, %v279
    %312 = vst.msk [vmem:[#allocation3 + $0xa0] sm:$0xff] %vm153, %v280
    %313 = vst.msk [vmem:[#allocation3 + $0xa8] sm:$0xff] %vm153, %v281
    %314 = vst.msk [vmem:[#allocation3 + $0xb0] sm:$0xff] %vm153, %v282
    %315 = vst.msk [vmem:[#allocation3 + $0xb8] sm:$0xff] %vm153, %v283
    %316 = vst.msk [vmem:[#allocation3 + $0xc0] sm:$0xff] %vm153, %v284
    %317 = vst.msk [vmem:[#allocation3 + $0xc8] sm:$0xff] %vm153, %v285
    %318 = vst.msk [vmem:[#allocation3 + $0xd0] sm:$0xff] %vm153, %v286
    %319 = vst.msk [vmem:[#allocation3 + $0xd8] sm:$0xff] %vm153, %v287
    %320 = vst.msk [vmem:[#allocation3 + $0xe0] sm:$0xff] %vm153, %v288
    %321 = vst.msk [vmem:[#allocation3 + $0xe8] sm:$0xff] %vm153, %v289
    %322 = vst.msk [vmem:[#allocation3 + $0xf0] sm:$0xff] %vm153, %v290
    %323 = vst.msk [vmem:[#allocation3 + $0xf8] sm:$0xff] %vm153, %v291
    %v324 = vld [vmem:[#allocation2 + $0x1] sm:$0xff]
    %v325 = vld [vmem:[#allocation2 + $0x11] sm:$0xff]
    %v326 = vld [vmem:[#allocation2 + $0x21] sm:$0xff]
    %v327 = vld [vmem:[#allocation2 + $0x31] sm:$0xff]
    %v328 = vld [vmem:[#allocation2 + $0x41] sm:$0xff]
    %v329 = vld [vmem:[#allocation2 + $0x51] sm:$0xff]
    %v330 = vld [vmem:[#allocation2 + $0x61] sm:$0xff]
    %v331 = vld [vmem:[#allocation2 + $0x71] sm:$0xff]
    %v332 = vld [vmem:[#allocation2 + $0x81] sm:$0xff]
    %v333 = vld [vmem:[#allocation2 + $0x91] sm:$0xff]
    %v334 = vld [vmem:[#allocation2 + $0xa1] sm:$0xff]
    %v335 = vld [vmem:[#allocation2 + $0xb1] sm:$0xff]
    %v336 = vld [vmem:[#allocation2 + $0xc1] sm:$0xff]
    %v337 = vld [vmem:[#allocation2 + $0xd1] sm:$0xff]
    %v338 = vld [vmem:[#allocation2 + $0xe1] sm:$0xff]
    %v339 = vld [vmem:[#allocation2 + $0xf1] sm:$0xff]
    %v340 = vld [vmem:[#allocation2 + $0x121] sm:$0xff]
    %v341 = vld [vmem:[#allocation2 + $0x131] sm:$0xff]
    %v342 = vld [vmem:[#allocation2 + $0x141] sm:$0xff]
    %v343 = vld [vmem:[#allocation2 + $0x151] sm:$0xff]
    %v344 = vld [vmem:[#allocation2 + $0x161] sm:$0xff]
    %v345 = vld [vmem:[#allocation2 + $0x171] sm:$0xff]
    %v346 = vld [vmem:[#allocation2 + $0x181] sm:$0xff]
    %v347 = vld [vmem:[#allocation2 + $0x191] sm:$0xff]
    %v348 = vld [vmem:[#allocation2 + $0x1a1] sm:$0xff]
    %v349 = vld [vmem:[#allocation2 + $0x1b1] sm:$0xff]
    %v350 = vld [vmem:[#allocation2 + $0x1c1] sm:$0xff]
    %v351 = vld [vmem:[#allocation2 + $0x1d1] sm:$0xff]
    %v352 = vld [vmem:[#allocation2 + $0x1e1] sm:$0xff]
    %v353 = vld [vmem:[#allocation2 + $0x1f1] sm:$0xff]
    %v354 = vld [vmem:[#allocation2 + $0x201] sm:$0xff]
    %v355 = vld [vmem:[#allocation2 + $0x211] sm:$0xff]
    %388 = vrot.lane.b32.xlu0 %v324, 3
    %v389 = vpop.permute.xlu0 %388
    %390 = vrot.lane.b32.xlu0 %v325, 3
    %v391 = vpop.permute.xlu0 %390
    %392 = vrot.lane.b32.xlu0 %v326, 3
    %v393 = vpop.permute.xlu0 %392
    %394 = vrot.lane.b32.xlu0 %v327, 3
    %v395 = vpop.permute.xlu0 %394
    %396 = vrot.lane.b32.xlu0 %v328, 3
    %v397 = vpop.permute.xlu0 %396
    %398 = vrot.lane.b32.xlu0 %v329, 3
    %v399 = vpop.permute.xlu0 %398
    %400 = vrot.lane.b32.xlu0 %v330, 3
    %v401 = vpop.permute.xlu0 %400
    %402 = vrot.lane.b32.xlu0 %v331, 3
    %v403 = vpop.permute.xlu0 %402
    %404 = vrot.lane.b32.xlu0 %v332, 3
    %v405 = vpop.permute.xlu0 %404
    %406 = vrot.lane.b32.xlu0 %v333, 3
    %v407 = vpop.permute.xlu0 %406
    %408 = vrot.lane.b32.xlu0 %v334, 3
    %v409 = vpop.permute.xlu0 %408
    %410 = vrot.lane.b32.xlu0 %v335, 3
    %v411 = vpop.permute.xlu0 %410
    %412 = vrot.lane.b32.xlu0 %v336, 3
    %v413 = vpop.permute.xlu0 %412
    %414 = vrot.lane.b32.xlu0 %v337, 3
    %v415 = vpop.permute.xlu0 %414
    %416 = vrot.lane.b32.xlu0 %v338, 3
    %v417 = vpop.permute.xlu0 %416
    %418 = vrot.lane.b32.xlu0 %v339, 3
    %v419 = vpop.permute.xlu0 %418
    %420 = vrot.lane.b32.xlu0 %v340, 3
    %v421 = vpop.permute.xlu0 %420
    %422 = vrot.lane.b32.xlu0 %v341, 3
    %v423 = vpop.permute.xlu0 %422
    %424 = vrot.lane.b32.xlu0 %v342, 3
    %v425 = vpop.permute.xlu0 %424
    %426 = vrot.lane.b32.xlu0 %v343, 3
    %v427 = vpop.permute.xlu0 %426
    %428 = vrot.lane.b32.xlu0 %v344, 3
    %v429 = vpop.permute.xlu0 %428
    %430 = vrot.lane.b32.xlu0 %v345, 3
    %v431 = vpop.permute.xlu0 %430
    %432 = vrot.lane.b32.xlu0 %v346, 3
    %v433 = vpop.permute.xlu0 %432
    %434 = vrot.lane.b32.xlu0 %v347, 3
    %v435 = vpop.permute.xlu0 %434
    %436 = vrot.lane.b32.xlu0 %v348, 3
    %v437 = vpop.permute.xlu0 %436
    %438 = vrot.lane.b32.xlu0 %v349, 3
    %v439 = vpop.permute.xlu0 %438
    %440 = vrot.lane.b32.xlu0 %v350, 3
    %v441 = vpop.permute.xlu0 %440
    %442 = vrot.lane.b32.xlu0 %v351, 3
    %v443 = vpop.permute.xlu0 %442
    %444 = vrot.lane.b32.xlu0 %v352, 3
    %v445 = vpop.permute.xlu0 %444
    %446 = vrot.lane.b32.xlu0 %v353, 3
    %v447 = vpop.permute.xlu0 %446
    %448 = vrot.lane.b32.xlu0 %v354, 3
    %v449 = vpop.permute.xlu0 %448
    %450 = vrot.lane.b32.xlu0 %v355, 3
    %v451 = vpop.permute.xlu0 %450
    %vm484 = vcmask 48152
    %485 = vst.msk [vmem:[#allocation3] sm:$0xff] %vm484, %v389
    %486 = vst.msk [vmem:[#allocation3 + $0x8] sm:$0xff] %vm484, %v391
    %487 = vst.msk [vmem:[#allocation3 + $0x10] sm:$0xff] %vm484, %v393
    %488 = vst.msk [vmem:[#allocation3 + $0x18] sm:$0xff] %vm484, %v395
    %489 = vst.msk [vmem:[#allocation3 + $0x20] sm:$0xff] %vm484, %v397
    %490 = vst.msk [vmem:[#allocation3 + $0x28] sm:$0xff] %vm484, %v399
    %491 = vst.msk [vmem:[#allocation3 + $0x30] sm:$0xff] %vm484, %v401
    %492 = vst.msk [vmem:[#allocation3 + $0x38] sm:$0xff] %vm484, %v403
    %493 = vst.msk [vmem:[#allocation3 + $0x40] sm:$0xff] %vm484, %v405
    %494 = vst.msk [vmem:[#allocation3 + $0x48] sm:$0xff] %vm484, %v407
    %495 = vst.msk [vmem:[#allocation3 + $0x50] sm:$0xff] %vm484, %v409
    %496 = vst.msk [vmem:[#allocation3 + $0x58] sm:$0xff] %vm484, %v411
    %497 = vst.msk [vmem:[#allocation3 + $0x60] sm:$0xff] %vm484, %v413
    %498 = vst.msk [vmem:[#allocation3 + $0x68] sm:$0xff] %vm484, %v415
    %499 = vst.msk [vmem:[#allocation3 + $0x70] sm:$0xff] %vm484, %v417
    %500 = vst.msk [vmem:[#allocation3 + $0x78] sm:$0xff] %vm484, %v419
    %501 = vst.msk [vmem:[#allocation3 + $0x80] sm:$0xff] %vm484, %v421
    %502 = vst.msk [vmem:[#allocation3 + $0x88] sm:$0xff] %vm484, %v423
    %503 = vst.msk [vmem:[#allocation3 + $0x90] sm:$0xff] %vm484, %v425
    %504 = vst.msk [vmem:[#allocation3 + $0x98] sm:$0xff] %vm484, %v427
    %505 = vst.msk [vmem:[#allocation3 + $0xa0] sm:$0xff] %vm484, %v429
    %506 = vst.msk [vmem:[#allocation3 + $0xa8] sm:$0xff] %vm484, %v431
    %507 = vst.msk [vmem:[#allocation3 + $0xb0] sm:$0xff] %vm484, %v433
    %508 = vst.msk [vmem:[#allocation3 + $0xb8] sm:$0xff] %vm484, %v435
    %509 = vst.msk [vmem:[#allocation3 + $0xc0] sm:$0xff] %vm484, %v437
    %510 = vst.msk [vmem:[#allocation3 + $0xc8] sm:$0xff] %vm484, %v439
    %511 = vst.msk [vmem:[#allocation3 + $0xd0] sm:$0xff] %vm484, %v441
    %512 = vst.msk [vmem:[#allocation3 + $0xd8] sm:$0xff] %vm484, %v443
    %513 = vst.msk [vmem:[#allocation3 + $0xe0] sm:$0xff] %vm484, %v445
    %514 = vst.msk [vmem:[#allocation3 + $0xe8] sm:$0xff] %vm484, %v447
    %515 = vst.msk [vmem:[#allocation3 + $0xf0] sm:$0xff] %vm484, %v449
    %516 = vst.msk [vmem:[#allocation3 + $0xf8] sm:$0xff] %vm484, %v451
    %v517 = vld [vmem:[#allocation2 + $0x2] sm:$0xff]
    %v518 = vld [vmem:[#allocation2 + $0x12] sm:$0xff]
    %v519 = vld [vmem:[#allocation2 + $0x22] sm:$0xff]
    %v520 = vld [vmem:[#allocation2 + $0x32] sm:$0xff]
    %v521 = vld [vmem:[#allocation2 + $0x42] sm:$0xff]
    %v522 = vld [vmem:[#allocation2 + $0x52] sm:$0xff]
    %v523 = vld [vmem:[#allocation2 + $0x62] sm:$0xff]
    %v524 = vld [vmem:[#allocation2 + $0x72] sm:$0xff]
    %v525 = vld [vmem:[#allocation2 + $0x82] sm:$0xff]
    %v526 = vld [vmem:[#allocation2 + $0x92] sm:$0xff]
    %v527 = vld [vmem:[#allocation2 + $0xa2] sm:$0xff]
    %v528 = vld [vmem:[#allocation2 + $0xb2] sm:$0xff]
    %v529 = vld [vmem:[#allocation2 + $0xc2] sm:$0xff]
    %v530 = vld [vmem:[#allocation2 + $0xd2] sm:$0xff]
    %v531 = vld [vmem:[#allocation2 + $0xe2] sm:$0xff]
    %v532 = vld [vmem:[#allocation2 + $0xf2] sm:$0xff]
    %v533 = vld [vmem:[#allocation2 + $0x122] sm:$0xff]
    %v534 = vld [vmem:[#allocation2 + $0x132] sm:$0xff]
    %v535 = vld [vmem:[#allocation2 + $0x142] sm:$0xff]
    %v536 = vld [vmem:[#allocation2 + $0x152] sm:$0xff]
    %v537 = vld [vmem:[#allocation2 + $0x162] sm:$0xff]
    %v538 = vld [vmem:[#allocation2 + $0x172] sm:$0xff]
    %v539 = vld [vmem:[#allocation2 + $0x182] sm:$0xff]
    %v540 = vld [vmem:[#allocation2 + $0x192] sm:$0xff]
    %v541 = vld [vmem:[#allocation2 + $0x1a2] sm:$0xff]
    %v542 = vld [vmem:[#allocation2 + $0x1b2] sm:$0xff]
    %v543 = vld [vmem:[#allocation2 + $0x1c2] sm:$0xff]
    %v544 = vld [vmem:[#allocation2 + $0x1d2] sm:$0xff]
    %v545 = vld [vmem:[#allocation2 + $0x1e2] sm:$0xff]
    %v546 = vld [vmem:[#allocation2 + $0x1f2] sm:$0xff]
    %v547 = vld [vmem:[#allocation2 + $0x202] sm:$0xff]
    %v548 = vld [vmem:[#allocation2 + $0x212] sm:$0xff]
    %581 = vrot.lane.b32.xlu0 %v517, 6
    %v582 = vpop.permute.xlu0 %581
    %583 = vrot.lane.b32.xlu0 %v518, 6
    %v584 = vpop.permute.xlu0 %583
    %585 = vrot.lane.b32.xlu0 %v519, 6
    %v586 = vpop.permute.xlu0 %585
    %587 = vrot.lane.b32.xlu0 %v520, 6
    %v588 = vpop.permute.xlu0 %587
    %589 = vrot.lane.b32.xlu0 %v521, 6
    %v590 = vpop.permute.xlu0 %589
    %591 = vrot.lane.b32.xlu0 %v522, 6
    %v592 = vpop.permute.xlu0 %591
    %593 = vrot.lane.b32.xlu0 %v523, 6
    %v594 = vpop.permute.xlu0 %593
    %595 = vrot.lane.b32.xlu0 %v524, 6
    %v596 = vpop.permute.xlu0 %595
    %597 = vrot.lane.b32.xlu0 %v525, 6
    %v598 = vpop.permute.xlu0 %597
    %599 = vrot.lane.b32.xlu0 %v526, 6
    %v600 = vpop.permute.xlu0 %599
    %601 = vrot.lane.b32.xlu0 %v527, 6
    %v602 = vpop.permute.xlu0 %601
    %603 = vrot.lane.b32.xlu0 %v528, 6
    %v604 = vpop.permute.xlu0 %603
    %605 = vrot.lane.b32.xlu0 %v529, 6
    %v606 = vpop.permute.xlu0 %605
    %607 = vrot.lane.b32.xlu0 %v530, 6
    %v608 = vpop.permute.xlu0 %607
    %609 = vrot.lane.b32.xlu0 %v531, 6
    %v610 = vpop.permute.xlu0 %609
    %611 = vrot.lane.b32.xlu0 %v532, 6
    %v612 = vpop.permute.xlu0 %611
    %613 = vrot.lane.b32.xlu0 %v533, 6
    %v614 = vpop.permute.xlu0 %613
    %615 = vrot.lane.b32.xlu0 %v534, 6
    %v616 = vpop.permute.xlu0 %615
    %617 = vrot.lane.b32.xlu0 %v535, 6
    %v618 = vpop.permute.xlu0 %617
    %619 = vrot.lane.b32.xlu0 %v536, 6
    %v620 = vpop.permute.xlu0 %619
    %621 = vrot.lane.b32.xlu0 %v537, 6
    %v622 = vpop.permute.xlu0 %621
    %623 = vrot.lane.b32.xlu0 %v538, 6
    %v624 = vpop.permute.xlu0 %623
    %625 = vrot.lane.b32.xlu0 %v539, 6
    %v626 = vpop.permute.xlu0 %625
    %627 = vrot.lane.b32.xlu0 %v540, 6
    %v628 = vpop.permute.xlu0 %627
    %629 = vrot.lane.b32.xlu0 %v541, 6
    %v630 = vpop.permute.xlu0 %629
    %631 = vrot.lane.b32.xlu0 %v542, 6
    %v632 = vpop.permute.xlu0 %631
    %633 = vrot.lane.b32.xlu0 %v543, 6
    %v634 = vpop.permute.xlu0 %633
    %635 = vrot.lane.b32.xlu0 %v544, 6
    %v636 = vpop.permute.xlu0 %635
    %637 = vrot.lane.b32.xlu0 %v545, 6
    %v638 = vpop.permute.xlu0 %637
    %639 = vrot.lane.b32.xlu0 %v546, 6
    %v640 = vpop.permute.xlu0 %639
    %641 = vrot.lane.b32.xlu0 %v547, 6
    %v642 = vpop.permute.xlu0 %641
    %643 = vrot.lane.b32.xlu0 %v548, 6
    %v644 = vpop.permute.xlu0 %643
    %vm677 = vcmask 72752
    %678 = vst.msk [vmem:[#allocation3] sm:$0xff] %vm677, %v582
    %679 = vst.msk [vmem:[#allocation3 + $0x8] sm:$0xff] %vm677, %v584
    %680 = vst.msk [vmem:[#allocation3 + $0x10] sm:$0xff] %vm677, %v586
    %681 = vst.msk [vmem:[#allocation3 + $0x18] sm:$0xff] %vm677, %v588
    %682 = vst.msk [vmem:[#allocation3 + $0x20] sm:$0xff] %vm677, %v590
    %683 = vst.msk [vmem:[#allocation3 + $0x28] sm:$0xff] %vm677, %v592
    %684 = vst.msk [vmem:[#allocation3 + $0x30] sm:$0xff] %vm677, %v594
    %685 = vst.msk [vmem:[#allocation3 + $0x38] sm:$0xff] %vm677, %v596
    %686 = vst.msk [vmem:[#allocation3 + $0x40] sm:$0xff] %vm677, %v598
    %687 = vst.msk [vmem:[#allocation3 + $0x48] sm:$0xff] %vm677, %v600
    %688 = vst.msk [vmem:[#allocation3 + $0x50] sm:$0xff] %vm677, %v602
    %689 = vst.msk [vmem:[#allocation3 + $0x58] sm:$0xff] %vm677, %v604
    %690 = vst.msk [vmem:[#allocation3 + $0x60] sm:$0xff] %vm677, %v606
    %691 = vst.msk [vmem:[#allocation3 + $0x68] sm:$0xff] %vm677, %v608
    %692 = vst.msk [vmem:[#allocation3 + $0x70] sm:$0xff] %vm677, %v610
    %693 = vst.msk [vmem:[#allocation3 + $0x78] sm:$0xff] %vm677, %v612
    %694 = vst.msk [vmem:[#allocation3 + $0x80] sm:$0xff] %vm677, %v614
    %695 = vst.msk [vmem:[#allocation3 + $0x88] sm:$0xff] %vm677, %v616
    %696 = vst.msk [vmem:[#allocation3 + $0x90] sm:$0xff] %vm677, %v618
    %697 = vst.msk [vmem:[#allocation3 + $0x98] sm:$0xff] %vm677, %v620
    %698 = vst.msk [vmem:[#allocation3 + $0xa0] sm:$0xff] %vm677, %v622
    %699 = vst.msk [vmem:[#allocation3 + $0xa8] sm:$0xff] %vm677, %v624
    %700 = vst.msk [vmem:[#allocation3 + $0xb0] sm:$0xff] %vm677, %v626
    %701 = vst.msk [vmem:[#allocation3 + $0xb8] sm:$0xff] %vm677, %v628
    %702 = vst.msk [vmem:[#allocation3 + $0xc0] sm:$0xff] %vm677, %v630
    %703 = vst.msk [vmem:[#allocation3 + $0xc8] sm:$0xff] %vm677, %v632
    %704 = vst.msk [vmem:[#allocation3 + $0xd0] sm:$0xff] %vm677, %v634
    %705 = vst.msk [vmem:[#allocation3 + $0xd8] sm:$0xff] %vm677, %v636
    %706 = vst.msk [vmem:[#allocation3 + $0xe0] sm:$0xff] %vm677, %v638
    %707 = vst.msk [vmem:[#allocation3 + $0xe8] sm:$0xff] %vm677, %v640
    %708 = vst.msk [vmem:[#allocation3 + $0xf0] sm:$0xff] %vm677, %v642
    %709 = vst.msk [vmem:[#allocation3 + $0xf8] sm:$0xff] %vm677, %v644
    %v710 = vld [vmem:[%s227] sm:$0xff]
    %v711 = vld [vmem:[%s227 + $0x10] sm:$0xff]
    %v712 = vld [vmem:[%s227 + $0x20] sm:$0xff]
    %v713 = vld [vmem:[%s227 + $0x30] sm:$0xff]
    %v714 = vld [vmem:[%s227 + $0x40] sm:$0xff]
    %v715 = vld [vmem:[%s227 + $0x50] sm:$0xff]
    %v716 = vld [vmem:[%s227 + $0x60] sm:$0xff]
    %v717 = vld [vmem:[%s227 + $0x70] sm:$0xff]
    %v718 = vld [vmem:[%s227 + $0x80] sm:$0xff]
    %v719 = vld [vmem:[%s227 + $0x90] sm:$0xff]
    %v720 = vld [vmem:[%s227 + $0xa0] sm:$0xff]
    %v721 = vld [vmem:[%s227 + $0xb0] sm:$0xff]
    %v722 = vld [vmem:[%s227 + $0xc0] sm:$0xff]
    %v723 = vld [vmem:[%s227 + $0xd0] sm:$0xff]
    %v724 = vld [vmem:[%s227 + $0xe0] sm:$0xff]
    %v725 = vld [vmem:[%s227 + $0xf0] sm:$0xff]
    %v726 = vld [vmem:[%s227 + $0x120] sm:$0xff]
    %v727 = vld [vmem:[%s227 + $0x130] sm:$0xff]
    %v728 = vld [vmem:[%s227 + $0x140] sm:$0xff]
    %v729 = vld [vmem:[%s227 + $0x150] sm:$0xff]
    %v730 = vld [vmem:[%s227 + $0x160] sm:$0xff]
    %v731 = vld [vmem:[%s227 + $0x170] sm:$0xff]
    %v732 = vld [vmem:[%s227 + $0x180] sm:$0xff]
    %v733 = vld [vmem:[%s227 + $0x190] sm:$0xff]
    %v734 = vld [vmem:[%s227 + $0x1a0] sm:$0xff]
    %v735 = vld [vmem:[%s227 + $0x1b0] sm:$0xff]
    %v736 = vld [vmem:[%s227 + $0x1c0] sm:$0xff]
    %v737 = vld [vmem:[%s227 + $0x1d0] sm:$0xff]
    %v738 = vld [vmem:[%s227 + $0x1e0] sm:$0xff]
    %v739 = vld [vmem:[%s227 + $0x1f0] sm:$0xff]
    %v740 = vld [vmem:[%s227 + $0x200] sm:$0xff]
    %v741 = vld [vmem:[%s227 + $0x210] sm:$0xff]
    %774 = vrot.lane.b32.xlu0 %v710, 9
    %v775 = vpop.permute.xlu0 %774
    %776 = vrot.lane.b32.xlu0 %v711, 9
    %v777 = vpop.permute.xlu0 %776
    %778 = vrot.lane.b32.xlu0 %v712, 9
    %v779 = vpop.permute.xlu0 %778
    %780 = vrot.lane.b32.xlu0 %v713, 9
    %v781 = vpop.permute.xlu0 %780
    %782 = vrot.lane.b32.xlu0 %v714, 9
    %v783 = vpop.permute.xlu0 %782
    %784 = vrot.lane.b32.xlu0 %v715, 9
    %v785 = vpop.permute.xlu0 %784
    %786 = vrot.lane.b32.xlu0 %v716, 9
    %v787 = vpop.permute.xlu0 %786
    %788 = vrot.lane.b32.xlu0 %v717, 9
    %v789 = vpop.permute.xlu0 %788
    %790 = vrot.lane.b32.xlu0 %v718, 9
    %v791 = vpop.permute.xlu0 %790
    %792 = vrot.lane.b32.xlu0 %v719, 9
    %v793 = vpop.permute.xlu0 %792
    %794 = vrot.lane.b32.xlu0 %v720, 9
    %v795 = vpop.permute.xlu0 %794
    %796 = vrot.lane.b32.xlu0 %v721, 9
    %v797 = vpop.permute.xlu0 %796
    %798 = vrot.lane.b32.xlu0 %v722, 9
    %v799 = vpop.permute.xlu0 %798
    %800 = vrot.lane.b32.xlu0 %v723, 9
    %v801 = vpop.permute.xlu0 %800
    %802 = vrot.lane.b32.xlu0 %v724, 9
    %v803 = vpop.permute.xlu0 %802
    %804 = vrot.lane.b32.xlu0 %v725, 9
    %v805 = vpop.permute.xlu0 %804
    %806 = vrot.lane.b32.xlu0 %v726, 9
    %v807 = vpop.permute.xlu0 %806
    %808 = vrot.lane.b32.xlu0 %v727, 9
    %v809 = vpop.permute.xlu0 %808
    %810 = vrot.lane.b32.xlu0 %v728, 9
    %v811 = vpop.permute.xlu0 %810
    %812 = vrot.lane.b32.xlu0 %v729, 9
    %v813 = vpop.permute.xlu0 %812
    %814 = vrot.lane.b32.xlu0 %v730, 9
    %v815 = vpop.permute.xlu0 %814
    %816 = vrot.lane.b32.xlu0 %v731, 9
    %v817 = vpop.permute.xlu0 %816
    %818 = vrot.lane.b32.xlu0 %v732, 9
    %v819 = vpop.permute.xlu0 %818
    %820 = vrot.lane.b32.xlu0 %v733, 9
    %v821 = vpop.permute.xlu0 %820
    %822 = vrot.lane.b32.xlu0 %v734, 9
    %v823 = vpop.permute.xlu0 %822
    %824 = vrot.lane.b32.xlu0 %v735, 9
    %v825 = vpop.permute.xlu0 %824
    %826 = vrot.lane.b32.xlu0 %v736, 9
    %v827 = vpop.permute.xlu0 %826
    %828 = vrot.lane.b32.xlu0 %v737, 9
    %v829 = vpop.permute.xlu0 %828
    %830 = vrot.lane.b32.xlu0 %v738, 9
    %v831 = vpop.permute.xlu0 %830
    %832 = vrot.lane.b32.xlu0 %v739, 9
    %v833 = vpop.permute.xlu0 %832
    %834 = vrot.lane.b32.xlu0 %v740, 9
    %v835 = vpop.permute.xlu0 %834
    %836 = vrot.lane.b32.xlu0 %v741, 9
    %v837 = vpop.permute.xlu0 %836
    %vm870 = vcmask 97352
    %871 = vst.msk [vmem:[#allocation3] sm:$0xff] %vm870, %v775
    %872 = vst.msk [vmem:[#allocation3 + $0x8] sm:$0xff] %vm870, %v777
    %873 = vst.msk [vmem:[#allocation3 + $0x10] sm:$0xff] %vm870, %v779
    %874 = vst.msk [vmem:[#allocation3 + $0x18] sm:$0xff] %vm870, %v781
    %875 = vst.msk [vmem:[#allocation3 + $0x20] sm:$0xff] %vm870, %v783
    %876 = vst.msk [vmem:[#allocation3 + $0x28] sm:$0xff] %vm870, %v785
    %877 = vst.msk [vmem:[#allocation3 + $0x30] sm:$0xff] %vm870, %v787
    %878 = vst.msk [vmem:[#allocation3 + $0x38] sm:$0xff] %vm870, %v789
    %879 = vst.msk [vmem:[#allocation3 + $0x40] sm:$0xff] %vm870, %v791
    %880 = vst.msk [vmem:[#allocation3 + $0x48] sm:$0xff] %vm870, %v793
    %881 = vst.msk [vmem:[#allocation3 + $0x50] sm:$0xff] %vm870, %v795
    %882 = vst.msk [vmem:[#allocation3 + $0x58] sm:$0xff] %vm870, %v797
    %883 = vst.msk [vmem:[#allocation3 + $0x60] sm:$0xff] %vm870, %v799
    %884 = vst.msk [vmem:[#allocation3 + $0x68] sm:$0xff] %vm870, %v801
    %885 = vst.msk [vmem:[#allocation3 + $0x70] sm:$0xff] %vm870, %v803
    %886 = vst.msk [vmem:[#allocation3 + $0x78] sm:$0xff] %vm870, %v805
    %887 = vst.msk [vmem:[#allocation3 + $0x80] sm:$0xff] %vm870, %v807
    %888 = vst.msk [vmem:[#allocation3 + $0x88] sm:$0xff] %vm870, %v809
    %889 = vst.msk [vmem:[#allocation3 + $0x90] sm:$0xff] %vm870, %v811
    %890 = vst.msk [vmem:[#allocation3 + $0x98] sm:$0xff] %vm870, %v813
    %891 = vst.msk [vmem:[#allocation3 + $0xa0] sm:$0xff] %vm870, %v815
    %892 = vst.msk [vmem:[#allocation3 + $0xa8] sm:$0xff] %vm870, %v817
    %893 = vst.msk [vmem:[#allocation3 + $0xb0] sm:$0xff] %vm870, %v819
    %894 = vst.msk [vmem:[#allocation3 + $0xb8] sm:$0xff] %vm870, %v821
    %895 = vst.msk [vmem:[#allocation3 + $0xc0] sm:$0xff] %vm870, %v823
    %896 = vst.msk [vmem:[#allocation3 + $0xc8] sm:$0xff] %vm870, %v825
    %897 = vst.msk [vmem:[#allocation3 + $0xd0] sm:$0xff] %vm870, %v827
    %898 = vst.msk [vmem:[#allocation3 + $0xd8] sm:$0xff] %vm870, %v829
    %899 = vst.msk [vmem:[#allocation3 + $0xe0] sm:$0xff] %vm870, %v831
    %900 = vst.msk [vmem:[#allocation3 + $0xe8] sm:$0xff] %vm870, %v833
    %901 = vst.msk [vmem:[#allocation3 + $0xf0] sm:$0xff] %vm870, %v835
    %902 = vst.msk [vmem:[#allocation3 + $0xf8] sm:$0xff] %vm870, %v837
    %v903 = vld [vmem:[%s227 + $0x1] sm:$0xff]
    %v904 = vld [vmem:[%s227 + $0x11] sm:$0xff]
    %v905 = vld [vmem:[%s227 + $0x21] sm:$0xff]
    %v906 = vld [vmem:[%s227 + $0x31] sm:$0xff]
    %v907 = vld [vmem:[%s227 + $0x41] sm:$0xff]
    %v908 = vld [vmem:[%s227 + $0x51] sm:$0xff]
    %v909 = vld [vmem:[%s227 + $0x61] sm:$0xff]
    %v910 = vld [vmem:[%s227 + $0x71] sm:$0xff]
    %v911 = vld [vmem:[%s227 + $0x81] sm:$0xff]
    %v912 = vld [vmem:[%s227 + $0x91] sm:$0xff]
    %v913 = vld [vmem:[%s227 + $0xa1] sm:$0xff]
    %v914 = vld [vmem:[%s227 + $0xb1] sm:$0xff]
    %v915 = vld [vmem:[%s227 + $0xc1] sm:$0xff]
    %v916 = vld [vmem:[%s227 + $0xd1] sm:$0xff]
    %v917 = vld [vmem:[%s227 + $0xe1] sm:$0xff]
    %v918 = vld [vmem:[%s227 + $0xf1] sm:$0xff]
    %v919 = vld [vmem:[%s227 + $0x121] sm:$0xff]
    %v920 = vld [vmem:[%s227 + $0x131] sm:$0xff]
    %v921 = vld [vmem:[%s227 + $0x141] sm:$0xff]
    %v922 = vld [vmem:[%s227 + $0x151] sm:$0xff]
    %v923 = vld [vmem:[%s227 + $0x161] sm:$0xff]
    %v924 = vld [vmem:[%s227 + $0x171] sm:$0xff]
    %v925 = vld [vmem:[%s227 + $0x181] sm:$0xff]
    %v926 = vld [vmem:[%s227 + $0x191] sm:$0xff]
    %v927 = vld [vmem:[%s227 + $0x1a1] sm:$0xff]
    %v928 = vld [vmem:[%s227 + $0x1b1] sm:$0xff]
    %v929 = vld [vmem:[%s227 + $0x1c1] sm:$0xff]
    %v930 = vld [vmem:[%s227 + $0x1d1] sm:$0xff]
    %v931 = vld [vmem:[%s227 + $0x1e1] sm:$0xff]
    %v932 = vld [vmem:[%s227 + $0x1f1] sm:$0xff]
    %v933 = vld [vmem:[%s227 + $0x201] sm:$0xff]
    %v934 = vld [vmem:[%s227 + $0x211] sm:$0xff]
    %967 = vrot.lane.b32.xlu0 %v903, 12
    %v968 = vpop.permute.xlu0 %967
    %969 = vrot.lane.b32.xlu0 %v904, 12
    %v970 = vpop.permute.xlu0 %969
    %971 = vrot.lane.b32.xlu0 %v905, 12
    %v972 = vpop.permute.xlu0 %971
    %973 = vrot.lane.b32.xlu0 %v906, 12
    %v974 = vpop.permute.xlu0 %973
    %975 = vrot.lane.b32.xlu0 %v907, 12
    %v976 = vpop.permute.xlu0 %975
    %977 = vrot.lane.b32.xlu0 %v908, 12
    %v978 = vpop.permute.xlu0 %977
    %979 = vrot.lane.b32.xlu0 %v909, 12
    %v980 = vpop.permute.xlu0 %979
    %981 = vrot.lane.b32.xlu0 %v910, 12
    %v982 = vpop.permute.xlu0 %981
    %983 = vrot.lane.b32.xlu0 %v911, 12
    %v984 = vpop.permute.xlu0 %983
    %985 = vrot.lane.b32.xlu0 %v912, 12
    %v986 = vpop.permute.xlu0 %985
    %987 = vrot.lane.b32.xlu0 %v913, 12
    %v988 = vpop.permute.xlu0 %987
    %989 = vrot.lane.b32.xlu0 %v914, 12
    %v990 = vpop.permute.xlu0 %989
    %991 = vrot.lane.b32.xlu0 %v915, 12
    %v992 = vpop.permute.xlu0 %991
    %993 = vrot.lane.b32.xlu0 %v916, 12
    %v994 = vpop.permute.xlu0 %993
    %995 = vrot.lane.b32.xlu0 %v917, 12
    %v996 = vpop.permute.xlu0 %995
    %997 = vrot.lane.b32.xlu0 %v918, 12
    %v998 = vpop.permute.xlu0 %997
    %999 = vrot.lane.b32.xlu0 %v919, 12
    %v1000 = vpop.permute.xlu0 %999
    %1001 = vrot.lane.b32.xlu0 %v920, 12
    %v1002 = vpop.permute.xlu0 %1001
    %1003 = vrot.lane.b32.xlu0 %v921, 12
    %v1004 = vpop.permute.xlu0 %1003
    %1005 = vrot.lane.b32.xlu0 %v922, 12
    %v1006 = vpop.permute.xlu0 %1005
    %1007 = vrot.lane.b32.xlu0 %v923, 12
    %v1008 = vpop.permute.xlu0 %1007
    %1009 = vrot.lane.b32.xlu0 %v924, 12
    %v1010 = vpop.permute.xlu0 %1009
    %1011 = vrot.lane.b32.xlu0 %v925, 12
    %v1012 = vpop.permute.xlu0 %1011
    %1013 = vrot.lane.b32.xlu0 %v926, 12
    %v1014 = vpop.permute.xlu0 %1013
    %1015 = vrot.lane.b32.xlu0 %v927, 12
    %v1016 = vpop.permute.xlu0 %1015
    %1017 = vrot.lane.b32.xlu0 %v928, 12
    %v1018 = vpop.permute.xlu0 %1017
    %1019 = vrot.lane.b32.xlu0 %v929, 12
    %v1020 = vpop.permute.xlu0 %1019
    %1021 = vrot.lane.b32.xlu0 %v930, 12
    %v1022 = vpop.permute.xlu0 %1021
    %1023 = vrot.lane.b32.xlu0 %v931, 12
    %v1024 = vpop.permute.xlu0 %1023
    %1025 = vrot.lane.b32.xlu0 %v932, 12
    %v1026 = vpop.permute.xlu0 %1025
    %1027 = vrot.lane.b32.xlu0 %v933, 12
    %v1028 = vpop.permute.xlu0 %1027
    %1029 = vrot.lane.b32.xlu0 %v934, 12
    %v1030 = vpop.permute.xlu0 %1029
    %vm1063 = vcmask 121952
    %1064 = vst.msk [vmem:[#allocation3] sm:$0xff] %vm1063, %v968
    %1065 = vst.msk [vmem:[#allocation3 + $0x8] sm:$0xff] %vm1063, %v970
    %1066 = vst.msk [vmem:[#allocation3 + $0x10] sm:$0xff] %vm1063, %v972
    %1067 = vst.msk [vmem:[#allocation3 + $0x18] sm:$0xff] %vm1063, %v974
    %1068 = vst.msk [vmem:[#allocation3 + $0x20] sm:$0xff] %vm1063, %v976
    %1069 = vst.msk [vmem:[#allocation3 + $0x28] sm:$0xff] %vm1063, %v978
    %1070 = vst.msk [vmem:[#allocation3 + $0x30] sm:$0xff] %vm1063, %v980
    %1071 = vst.msk [vmem:[#allocation3 + $0x38] sm:$0xff] %vm1063, %v982
    %1072 = vst.msk [vmem:[#allocation3 + $0x40] sm:$0xff] %vm1063, %v984
    %1073 = vst.msk [vmem:[#allocation3 + $0x48] sm:$0xff] %vm1063, %v986
    %1074 = vst.msk [vmem:[#allocation3 + $0x50] sm:$0xff] %vm1063, %v988
    %1075 = vst.msk [vmem:[#allocation3 + $0x58] sm:$0xff] %vm1063, %v990
    %1076 = vst.msk [vmem:[#allocation3 + $0x60] sm:$0xff] %vm1063, %v992
    %1077 = vst.msk [vmem:[#allocation3 + $0x68] sm:$0xff] %vm1063, %v994
    %1078 = vst.msk [vmem:[#allocation3 + $0x70] sm:$0xff] %vm1063, %v996
    %1079 = vst.msk [vmem:[#allocation3 + $0x78] sm:$0xff] %vm1063, %v998
    %1080 = vst.msk [vmem:[#allocation3 + $0x80] sm:$0xff] %vm1063, %v1000
    %1081 = vst.msk [vmem:[#allocation3 + $0x88] sm:$0xff] %vm1063, %v1002
    %1082 = vst.msk [vmem:[#allocation3 + $0x90] sm:$0xff] %vm1063, %v1004
    %1083 = vst.msk [vmem:[#allocation3 + $0x98] sm:$0xff] %vm1063, %v1006
    %1084 = vst.msk [vmem:[#allocation3 + $0xa0] sm:$0xff] %vm1063, %v1008
    %1085 = vst.msk [vmem:[#allocation3 + $0xa8] sm:$0xff] %vm1063, %v1010
    %1086 = vst.msk [vmem:[#allocation3 + $0xb0] sm:$0xff] %vm1063, %v1012
    %1087 = vst.msk [vmem:[#allocation3 + $0xb8] sm:$0xff] %vm1063, %v1014
    %1088 = vst.msk [vmem:[#allocation3 + $0xc0] sm:$0xff] %vm1063, %v1016
    %1089 = vst.msk [vmem:[#allocation3 + $0xc8] sm:$0xff] %vm1063, %v1018
    %1090 = vst.msk [vmem:[#allocation3 + $0xd0] sm:$0xff] %vm1063, %v1020
    %1091 = vst.msk [vmem:[#allocation3 + $0xd8] sm:$0xff] %vm1063, %v1022
    %1092 = vst.msk [vmem:[#allocation3 + $0xe0] sm:$0xff] %vm1063, %v1024
    %1093 = vst.msk [vmem:[#allocation3 + $0xe8] sm:$0xff] %vm1063, %v1026
    %1094 = vst.msk [vmem:[#allocation3 + $0xf0] sm:$0xff] %vm1063, %v1028
    %1095 = vst.msk [vmem:[#allocation3 + $0xf8] sm:$0xff] %vm1063, %v1030
    %v1096 = vld [vmem:[%s227 + $0x2] sm:$0xff]
    %v1097 = vld [vmem:[%s227 + $0x12] sm:$0xff]
    %v1098 = vld [vmem:[%s227 + $0x22] sm:$0xff]
    %v1099 = vld [vmem:[%s227 + $0x32] sm:$0xff]
    %v1100 = vld [vmem:[%s227 + $0x42] sm:$0xff]
    %v1101 = vld [vmem:[%s227 + $0x52] sm:$0xff]
    %v1102 = vld [vmem:[%s227 + $0x62] sm:$0xff]
    %v1103 = vld [vmem:[%s227 + $0x72] sm:$0xff]
    %v1104 = vld [vmem:[%s227 + $0x82] sm:$0xff]
    %v1105 = vld [vmem:[%s227 + $0x92] sm:$0xff]
    %v1106 = vld [vmem:[%s227 + $0xa2] sm:$0xff]
    %v1107 = vld [vmem:[%s227 + $0xb2] sm:$0xff]
    %v1108 = vld [vmem:[%s227 + $0xc2] sm:$0xff]
    %v1109 = vld [vmem:[%s227 + $0xd2] sm:$0xff]
    %v1110 = vld [vmem:[%s227 + $0xe2] sm:$0xff]
    %v1111 = vld [vmem:[%s227 + $0xf2] sm:$0xff]
    %v1112 = vld [vmem:[%s227 + $0x122] sm:$0xff]
    %v1113 = vld [vmem:[%s227 + $0x132] sm:$0xff]
    %v1114 = vld [vmem:[%s227 + $0x142] sm:$0xff]
    %v1115 = vld [vmem:[%s227 + $0x152] sm:$0xff]
    %v1116 = vld [vmem:[%s227 + $0x162] sm:$0xff]
    %v1117 = vld [vmem:[%s227 + $0x172] sm:$0xff]
    %v1118 = vld [vmem:[%s227 + $0x182] sm:$0xff]
    %v1119 = vld [vmem:[%s227 + $0x192] sm:$0xff]
    %v1120 = vld [vmem:[%s227 + $0x1a2] sm:$0xff]
    %v1121 = vld [vmem:[%s227 + $0x1b2] sm:$0xff]
    %v1122 = vld [vmem:[%s227 + $0x1c2] sm:$0xff]
    %v1123 = vld [vmem:[%s227 + $0x1d2] sm:$0xff]
    %v1124 = vld [vmem:[%s227 + $0x1e2] sm:$0xff]
    %v1125 = vld [vmem:[%s227 + $0x1f2] sm:$0xff]
    %v1126 = vld [vmem:[%s227 + $0x202] sm:$0xff]
    %v1127 = vld [vmem:[%s227 + $0x212] sm:$0xff]
    %1160 = vrot.lane.b32.xlu0 %v1096, 15
    %v1161 = vpop.permute.xlu0 %1160
    %1162 = vrot.lane.b32.xlu0 %v1097, 15
    %v1163 = vpop.permute.xlu0 %1162
    %1164 = vrot.lane.b32.xlu0 %v1098, 15
    %v1165 = vpop.permute.xlu0 %1164
    %1166 = vrot.lane.b32.xlu0 %v1099, 15
    %v1167 = vpop.permute.xlu0 %1166
    %1168 = vrot.lane.b32.xlu0 %v1100, 15
    %v1169 = vpop.permute.xlu0 %1168
    %1170 = vrot.lane.b32.xlu0 %v1101, 15
    %v1171 = vpop.permute.xlu0 %1170
    %1172 = vrot.lane.b32.xlu0 %v1102, 15
    %v1173 = vpop.permute.xlu0 %1172
    %1174 = vrot.lane.b32.xlu0 %v1103, 15
    %v1175 = vpop.permute.xlu0 %1174
    %1176 = vrot.lane.b32.xlu0 %v1104, 15
    %v1177 = vpop.permute.xlu0 %1176
    %1178 = vrot.lane.b32.xlu0 %v1105, 15
    %v1179 = vpop.permute.xlu0 %1178
    %1180 = vrot.lane.b32.xlu0 %v1106, 15
    %v1181 = vpop.permute.xlu0 %1180
    %1182 = vrot.lane.b32.xlu0 %v1107, 15
    %v1183 = vpop.permute.xlu0 %1182
    %1184 = vrot.lane.b32.xlu0 %v1108, 15
    %v1185 = vpop.permute.xlu0 %1184
    %1186 = vrot.lane.b32.xlu0 %v1109, 15
    %v1187 = vpop.permute.xlu0 %1186
    %1188 = vrot.lane.b32.xlu0 %v1110, 15
    %v1189 = vpop.permute.xlu0 %1188
    %1190 = vrot.lane.b32.xlu0 %v1111, 15
    %v1191 = vpop.permute.xlu0 %1190
    %1192 = vrot.lane.b32.xlu0 %v1112, 15
    %v1193 = vpop.permute.xlu0 %1192
    %1194 = vrot.lane.b32.xlu0 %v1113, 15
    %v1195 = vpop.permute.xlu0 %1194
    %1196 = vrot.lane.b32.xlu0 %v1114, 15
    %v1197 = vpop.permute.xlu0 %1196
    %1198 = vrot.lane.b32.xlu0 %v1115, 15
    %v1199 = vpop.permute.xlu0 %1198
    %1200 = vrot.lane.b32.xlu0 %v1116, 15
    %v1201 = vpop.permute.xlu0 %1200
    %1202 = vrot.lane.b32.xlu0 %v1117, 15
    %v1203 = vpop.permute.xlu0 %1202
    %1204 = vrot.lane.b32.xlu0 %v1118, 15
    %v1205 = vpop.permute.xlu0 %1204
    %1206 = vrot.lane.b32.xlu0 %v1119, 15
    %v1207 = vpop.permute.xlu0 %1206
    %1208 = vrot.lane.b32.xlu0 %v1120, 15
    %v1209 = vpop.permute.xlu0 %1208
    %1210 = vrot.lane.b32.xlu0 %v1121, 15
    %v1211 = vpop.permute.xlu0 %1210
    %1212 = vrot.lane.b32.xlu0 %v1122, 15
    %v1213 = vpop.permute.xlu0 %1212
    %1214 = vrot.lane.b32.xlu0 %v1123, 15
    %v1215 = vpop.permute.xlu0 %1214
    %1216 = vrot.lane.b32.xlu0 %v1124, 15
    %v1217 = vpop.permute.xlu0 %1216
    %1218 = vrot.lane.b32.xlu0 %v1125, 15
    %v1219 = vpop.permute.xlu0 %1218
    %1220 = vrot.lane.b32.xlu0 %v1126, 15
    %v1221 = vpop.permute.xlu0 %1220
    %1222 = vrot.lane.b32.xlu0 %v1127, 15
    %v1223 = vpop.permute.xlu0 %1222
    %vm1256 = vcmask 146552
    %1257 = vst.msk [vmem:[#allocation3] sm:$0xff] %vm1256, %v1161
    %1258 = vst.msk [vmem:[#allocation3 + $0x8] sm:$0xff] %vm1256, %v1163
    %1259 = vst.msk [vmem:[#allocation3 + $0x10] sm:$0xff] %vm1256, %v1165
    %1260 = vst.msk [vmem:[#allocation3 + $0x18] sm:$0xff] %vm1256, %v1167
    %1261 = vst.msk [vmem:[#allocation3 + $0x20] sm:$0xff] %vm1256, %v1169
    %1262 = vst.msk [vmem:[#allocation3 + $0x28] sm:$0xff] %vm1256, %v1171
    %1263 = vst.msk [vmem:[#allocation3 + $0x30] sm:$0xff] %vm1256, %v1173
    %1264 = vst.msk [vmem:[#allocation3 + $0x38] sm:$0xff] %vm1256, %v1175
    %1265 = vst.msk [vmem:[#allocation3 + $0x40] sm:$0xff] %vm1256, %v1177
    %1266 = vst.msk [vmem:[#allocation3 + $0x48] sm:$0xff] %vm1256, %v1179
    %1267 = vst.msk [vmem:[#allocation3 + $0x50] sm:$0xff] %vm1256, %v1181
    %1268 = vst.msk [vmem:[#allocation3 + $0x58] sm:$0xff] %vm1256, %v1183
    %1269 = vst.msk [vmem:[#allocation3 + $0x60] sm:$0xff] %vm1256, %v1185
    %1270 = vst.msk [vmem:[#allocation3 + $0x68] sm:$0xff] %vm1256, %v1187
    %1271 = vst.msk [vmem:[#allocation3 + $0x70] sm:$0xff] %vm1256, %v1189
    %1272 = vst.msk [vmem:[#allocation3 + $0x78] sm:$0xff] %vm1256, %v1191
    %1273 = vst.msk [vmem:[#allocation3 + $0x80] sm:$0xff] %vm1256, %v1193
    %1274 = vst.msk [vmem:[#allocation3 + $0x88] sm:$0xff] %vm1256, %v1195
    %1275 = vst.msk [vmem:[#allocation3 + $0x90] sm:$0xff] %vm1256, %v1197
    %1276 = vst.msk [vmem:[#allocation3 + $0x98] sm:$0xff] %vm1256, %v1199
    %1277 = vst.msk [vmem:[#allocation3 + $0xa0] sm:$0xff] %vm1256, %v1201
    %1278 = vst.msk [vmem:[#allocation3 + $0xa8] sm:$0xff] %vm1256, %v1203
    %1279 = vst.msk [vmem:[#allocation3 + $0xb0] sm:$0xff] %vm1256, %v1205
    %1280 = vst.msk [vmem:[#allocation3 + $0xb8] sm:$0xff] %vm1256, %v1207
    %1281 = vst.msk [vmem:[#allocation3 + $0xc0] sm:$0xff] %vm1256, %v1209
    %1282 = vst.msk [vmem:[#allocation3 + $0xc8] sm:$0xff] %vm1256, %v1211
    %1283 = vst.msk [vmem:[#allocation3 + $0xd0] sm:$0xff] %vm1256, %v1213
    %1284 = vst.msk [vmem:[#allocation3 + $0xd8] sm:$0xff] %vm1256, %v1215
    %1285 = vst.msk [vmem:[#allocation3 + $0xe0] sm:$0xff] %vm1256, %v1217
    %1286 = vst.msk [vmem:[#allocation3 + $0xe8] sm:$0xff] %vm1256, %v1219
    %1287 = vst.msk [vmem:[#allocation3 + $0xf0] sm:$0xff] %vm1256, %v1221
    %1288 = vst.msk [vmem:[#allocation3 + $0xf8] sm:$0xff] %vm1256, %v1223
    %s1289 = scalar_lea.vmem [#allocation2], 32
    %v1290 = vld [vmem:[%s1289] sm:$0xff]
    %v1291 = vld [vmem:[%s1289 + $0x10] sm:$0xff]
    %v1292 = vld [vmem:[%s1289 + $0x20] sm:$0xff]
    %v1293 = vld [vmem:[%s1289 + $0x30] sm:$0xff]
    %v1294 = vld [vmem:[%s1289 + $0x40] sm:$0xff]
    %v1295 = vld [vmem:[%s1289 + $0x50] sm:$0xff]
    %v1296 = vld [vmem:[%s1289 + $0x60] sm:$0xff]
    %v1297 = vld [vmem:[%s1289 + $0x70] sm:$0xff]
    %v1298 = vld [vmem:[%s1289 + $0x80] sm:$0xff]
    %v1299 = vld [vmem:[%s1289 + $0x90] sm:$0xff]
    %v1300 = vld [vmem:[%s1289 + $0xa0] sm:$0xff]
    %v1301 = vld [vmem:[%s1289 + $0xb0] sm:$0xff]
    %v1302 = vld [vmem:[%s1289 + $0xc0] sm:$0xff]
    %v1303 = vld [vmem:[%s1289 + $0xd0] sm:$0xff]
    %v1304 = vld [vmem:[%s1289 + $0xe0] sm:$0xff]
    %v1305 = vld [vmem:[%s1289 + $0xf0] sm:$0xff]
    %v1306 = vld [vmem:[%s1289 + $0x120] sm:$0xff]
    %v1307 = vld [vmem:[%s1289 + $0x130] sm:$0xff]
    %v1308 = vld [vmem:[%s1289 + $0x140] sm:$0xff]
    %v1309 = vld [vmem:[%s1289 + $0x150] sm:$0xff]
    %v1310 = vld [vmem:[%s1289 + $0x160] sm:$0xff]
    %v1311 = vld [vmem:[%s1289 + $0x170] sm:$0xff]
    %v1312 = vld [vmem:[%s1289 + $0x180] sm:$0xff]
    %v1313 = vld [vmem:[%s1289 + $0x190] sm:$0xff]
    %v1314 = vld [vmem:[%s1289 + $0x1a0] sm:$0xff]
    %v1315 = vld [vmem:[%s1289 + $0x1b0] sm:$0xff]
    %v1316 = vld [vmem:[%s1289 + $0x1c0] sm:$0xff]
    %v1317 = vld [vmem:[%s1289 + $0x1d0] sm:$0xff]
    %v1318 = vld [vmem:[%s1289 + $0x1e0] sm:$0xff]
    %v1319 = vld [vmem:[%s1289 + $0x1f0] sm:$0xff]
    %v1320 = vld [vmem:[%s1289 + $0x200] sm:$0xff]
    %v1321 = vld [vmem:[%s1289 + $0x210] sm:$0xff]
    %1354 = vrot.lane.b32.xlu0 %v1290, 18
    %v1355 = vpop.permute.xlu0 %1354
    %1356 = vrot.lane.b32.xlu0 %v1291, 18
    %v1357 = vpop.permute.xlu0 %1356
    %1358 = vrot.lane.b32.xlu0 %v1292, 18
    %v1359 = vpop.permute.xlu0 %1358
    %1360 = vrot.lane.b32.xlu0 %v1293, 18
    %v1361 = vpop.permute.xlu0 %1360
    %1362 = vrot.lane.b32.xlu0 %v1294, 18
    %v1363 = vpop.permute.xlu0 %1362
    %1364 = vrot.lane.b32.xlu0 %v1295, 18
    %v1365 = vpop.permute.xlu0 %1364
    %1366 = vrot.lane.b32.xlu0 %v1296, 18
    %v1367 = vpop.permute.xlu0 %1366
    %1368 = vrot.lane.b32.xlu0 %v1297, 18
    %v1369 = vpop.permute.xlu0 %1368
    %1370 = vrot.lane.b32.xlu0 %v1298, 18
    %v1371 = vpop.permute.xlu0 %1370
    %1372 = vrot.lane.b32.xlu0 %v1299, 18
    %v1373 = vpop.permute.xlu0 %1372
    %1374 = vrot.lane.b32.xlu0 %v1300, 18
    %v1375 = vpop.permute.xlu0 %1374
    %1376 = vrot.lane.b32.xlu0 %v1301, 18
    %v1377 = vpop.permute.xlu0 %1376
    %1378 = vrot.lane.b32.xlu0 %v1302, 18
    %v1379 = vpop.permute.xlu0 %1378
    %1380 = vrot.lane.b32.xlu0 %v1303, 18
    %v1381 = vpop.permute.xlu0 %1380
    %1382 = vrot.lane.b32.xlu0 %v1304, 18
    %v1383 = vpop.permute.xlu0 %1382
    %1384 = vrot.lane.b32.xlu0 %v1305, 18
    %v1385 = vpop.permute.xlu0 %1384
    %1386 = vrot.lane.b32.xlu0 %v1306, 18
    %v1387 = vpop.permute.xlu0 %1386
    %1388 = vrot.lane.b32.xlu0 %v1307, 18
    %v1389 = vpop.permute.xlu0 %1388
    %1390 = vrot.lane.b32.xlu0 %v1308, 18
    %v1391 = vpop.permute.xlu0 %1390
    %1392 = vrot.lane.b32.xlu0 %v1309, 18
    %v1393 = vpop.permute.xlu0 %1392
    %1394 = vrot.lane.b32.xlu0 %v1310, 18
    %v1395 = vpop.permute.xlu0 %1394
    %1396 = vrot.lane.b32.xlu0 %v1311, 18
    %v1397 = vpop.permute.xlu0 %1396
    %1398 = vrot.lane.b32.xlu0 %v1312, 18
    %v1399 = vpop.permute.xlu0 %1398
    %1400 = vrot.lane.b32.xlu0 %v1313, 18
    %v1401 = vpop.permute.xlu0 %1400
    %1402 = vrot.lane.b32.xlu0 %v1314, 18
    %v1403 = vpop.permute.xlu0 %1402
    %1404 = vrot.lane.b32.xlu0 %v1315, 18
    %v1405 = vpop.permute.xlu0 %1404
    %1406 = vrot.lane.b32.xlu0 %v1316, 18
    %v1407 = vpop.permute.xlu0 %1406
    %1408 = vrot.lane.b32.xlu0 %v1317, 18
    %v1409 = vpop.permute.xlu0 %1408
    %1410 = vrot.lane.b32.xlu0 %v1318, 18
    %v1411 = vpop.permute.xlu0 %1410
    %1412 = vrot.lane.b32.xlu0 %v1319, 18
    %v1413 = vpop.permute.xlu0 %1412
    %1414 = vrot.lane.b32.xlu0 %v1320, 18
    %v1415 = vpop.permute.xlu0 %1414
    %1416 = vrot.lane.b32.xlu0 %v1321, 18
    %v1417 = vpop.permute.xlu0 %1416
    %vm1450 = vcmask 171152
    %1451 = vst.msk [vmem:[#allocation3] sm:$0xff] %vm1450, %v1355
    %1452 = vst.msk [vmem:[#allocation3 + $0x8] sm:$0xff] %vm1450, %v1357
    %1453 = vst.msk [vmem:[#allocation3 + $0x10] sm:$0xff] %vm1450, %v1359
    %1454 = vst.msk [vmem:[#allocation3 + $0x18] sm:$0xff] %vm1450, %v1361
    %1455 = vst.msk [vmem:[#allocation3 + $0x20] sm:$0xff] %vm1450, %v1363
    %1456 = vst.msk [vmem:[#allocation3 + $0x28] sm:$0xff] %vm1450, %v1365
    %1457 = vst.msk [vmem:[#allocation3 + $0x30] sm:$0xff] %vm1450, %v1367
    %1458 = vst.msk [vmem:[#allocation3 + $0x38] sm:$0xff] %vm1450, %v1369
    %1459 = vst.msk [vmem:[#allocation3 + $0x40] sm:$0xff] %vm1450, %v1371
    %1460 = vst.msk [vmem:[#allocation3 + $0x48] sm:$0xff] %vm1450, %v1373
    %1461 = vst.msk [vmem:[#allocation3 + $0x50] sm:$0xff] %vm1450, %v1375
    %1462 = vst.msk [vmem:[#allocation3 + $0x58] sm:$0xff] %vm1450, %v1377
    %1463 = vst.msk [vmem:[#allocation3 + $0x60] sm:$0xff] %vm1450, %v1379
    %1464 = vst.msk [vmem:[#allocation3 + $0x68] sm:$0xff] %vm1450, %v1381
    %1465 = vst.msk [vmem:[#allocation3 + $0x70] sm:$0xff] %vm1450, %v1383
    %1466 = vst.msk [vmem:[#allocation3 + $0x78] sm:$0xff] %vm1450, %v1385
    %1467 = vst.msk [vmem:[#allocation3 + $0x80] sm:$0xff] %vm1450, %v1387
    %1468 = vst.msk [vmem:[#allocation3 + $0x88] sm:$0xff] %vm1450, %v1389
    %1469 = vst.msk [vmem:[#allocation3 + $0x90] sm:$0xff] %vm1450, %v1391
    %1470 = vst.msk [vmem:[#allocation3 + $0x98] sm:$0xff] %vm1450, %v1393
    %1471 = vst.msk [vmem:[#allocation3 + $0xa0] sm:$0xff] %vm1450, %v1395
    %1472 = vst.msk [vmem:[#allocation3 + $0xa8] sm:$0xff] %vm1450, %v1397
    %1473 = vst.msk [vmem:[#allocation3 + $0xb0] sm:$0xff] %vm1450, %v1399
    %1474 = vst.msk [vmem:[#allocation3 + $0xb8] sm:$0xff] %vm1450, %v1401
    %1475 = vst.msk [vmem:[#allocation3 + $0xc0] sm:$0xff] %vm1450, %v1403
    %1476 = vst.msk [vmem:[#allocation3 + $0xc8] sm:$0xff] %vm1450, %v1405
    %1477 = vst.msk [vmem:[#allocation3 + $0xd0] sm:$0xff] %vm1450, %v1407
    %1478 = vst.msk [vmem:[#allocation3 + $0xd8] sm:$0xff] %vm1450, %v1409
    %1479 = vst.msk [vmem:[#allocation3 + $0xe0] sm:$0xff] %vm1450, %v1411
    %1480 = vst.msk [vmem:[#allocation3 + $0xe8] sm:$0xff] %vm1450, %v1413
    %1481 = vst.msk [vmem:[#allocation3 + $0xf0] sm:$0xff] %vm1450, %v1415
    %1482 = vst.msk [vmem:[#allocation3 + $0xf8] sm:$0xff] %vm1450, %v1417
    %v1483 = vld [vmem:[%s1289 + $0x1] sm:$0xff]
    %v1484 = vld [vmem:[%s1289 + $0x11] sm:$0xff]
    %v1485 = vld [vmem:[%s1289 + $0x21] sm:$0xff]
    %v1486 = vld [vmem:[%s1289 + $0x31] sm:$0xff]
    %v1487 = vld [vmem:[%s1289 + $0x41] sm:$0xff]
    %v1488 = vld [vmem:[%s1289 + $0x51] sm:$0xff]
    %v1489 = vld [vmem:[%s1289 + $0x61] sm:$0xff]
    %v1490 = vld [vmem:[%s1289 + $0x71] sm:$0xff]
    %v1491 = vld [vmem:[%s1289 + $0x81] sm:$0xff]
    %v1492 = vld [vmem:[%s1289 + $0x91] sm:$0xff]
    %v1493 = vld [vmem:[%s1289 + $0xa1] sm:$0xff]
    %v1494 = vld [vmem:[%s1289 + $0xb1] sm:$0xff]
    %v1495 = vld [vmem:[%s1289 + $0xc1] sm:$0xff]
    %v1496 = vld [vmem:[%s1289 + $0xd1] sm:$0xff]
    %v1497 = vld [vmem:[%s1289 + $0xe1] sm:$0xff]
    %v1498 = vld [vmem:[%s1289 + $0xf1] sm:$0xff]
    %v1499 = vld [vmem:[%s1289 + $0x121] sm:$0xff]
    %v1500 = vld [vmem:[%s1289 + $0x131] sm:$0xff]
    %v1501 = vld [vmem:[%s1289 + $0x141] sm:$0xff]
    %v1502 = vld [vmem:[%s1289 + $0x151] sm:$0xff]
    %v1503 = vld [vmem:[%s1289 + $0x161] sm:$0xff]
    %v1504 = vld [vmem:[%s1289 + $0x171] sm:$0xff]
    %v1505 = vld [vmem:[%s1289 + $0x181] sm:$0xff]
    %v1506 = vld [vmem:[%s1289 + $0x191] sm:$0xff]
    %v1507 = vld [vmem:[%s1289 + $0x1a1] sm:$0xff]
    %v1508 = vld [vmem:[%s1289 + $0x1b1] sm:$0xff]
    %v1509 = vld [vmem:[%s1289 + $0x1c1] sm:$0xff]
    %v1510 = vld [vmem:[%s1289 + $0x1d1] sm:$0xff]
    %v1511 = vld [vmem:[%s1289 + $0x1e1] sm:$0xff]
    %v1512 = vld [vmem:[%s1289 + $0x1f1] sm:$0xff]
    %v1513 = vld [vmem:[%s1289 + $0x201] sm:$0xff]
    %v1514 = vld [vmem:[%s1289 + $0x211] sm:$0xff]
    %1547 = vrot.lane.b32.xlu0 %v1483, 21
    %v1548 = vpop.permute.xlu0 %1547
    %1549 = vrot.lane.b32.xlu0 %v1484, 21
    %v1550 = vpop.permute.xlu0 %1549
    %1551 = vrot.lane.b32.xlu0 %v1485, 21
    %v1552 = vpop.permute.xlu0 %1551
    %1553 = vrot.lane.b32.xlu0 %v1486, 21
    %v1554 = vpop.permute.xlu0 %1553
    %1555 = vrot.lane.b32.xlu0 %v1487, 21
    %v1556 = vpop.permute.xlu0 %1555
    %1557 = vrot.lane.b32.xlu0 %v1488, 21
    %v1558 = vpop.permute.xlu0 %1557
    %1559 = vrot.lane.b32.xlu0 %v1489, 21
    %v1560 = vpop.permute.xlu0 %1559
    %1561 = vrot.lane.b32.xlu0 %v1490, 21
    %v1562 = vpop.permute.xlu0 %1561
    %1563 = vrot.lane.b32.xlu0 %v1491, 21
    %v1564 = vpop.permute.xlu0 %1563
    %1565 = vrot.lane.b32.xlu0 %v1492, 21
    %v1566 = vpop.permute.xlu0 %1565
    %1567 = vrot.lane.b32.xlu0 %v1493, 21
    %v1568 = vpop.permute.xlu0 %1567
    %1569 = vrot.lane.b32.xlu0 %v1494, 21
    %v1570 = vpop.permute.xlu0 %1569
    %1571 = vrot.lane.b32.xlu0 %v1495, 21
    %v1572 = vpop.permute.xlu0 %1571
    %1573 = vrot.lane.b32.xlu0 %v1496, 21
    %v1574 = vpop.permute.xlu0 %1573
    %1575 = vrot.lane.b32.xlu0 %v1497, 21
    %v1576 = vpop.permute.xlu0 %1575
    %1577 = vrot.lane.b32.xlu0 %v1498, 21
    %v1578 = vpop.permute.xlu0 %1577
    %1579 = vrot.lane.b32.xlu0 %v1499, 21
    %v1580 = vpop.permute.xlu0 %1579
    %1581 = vrot.lane.b32.xlu0 %v1500, 21
    %v1582 = vpop.permute.xlu0 %1581
    %1583 = vrot.lane.b32.xlu0 %v1501, 21
    %v1584 = vpop.permute.xlu0 %1583
    %1585 = vrot.lane.b32.xlu0 %v1502, 21
    %v1586 = vpop.permute.xlu0 %1585
    %1587 = vrot.lane.b32.xlu0 %v1503, 21
    %v1588 = vpop.permute.xlu0 %1587
    %1589 = vrot.lane.b32.xlu0 %v1504, 21
    %v1590 = vpop.permute.xlu0 %1589
    %1591 = vrot.lane.b32.xlu0 %v1505, 21
    %v1592 = vpop.permute.xlu0 %1591
    %1593 = vrot.lane.b32.xlu0 %v1506, 21
    %v1594 = vpop.permute.xlu0 %1593
    %1595 = vrot.lane.b32.xlu0 %v1507, 21
    %v1596 = vpop.permute.xlu0 %1595
    %1597 = vrot.lane.b32.xlu0 %v1508, 21
    %v1598 = vpop.permute.xlu0 %1597
    %1599 = vrot.lane.b32.xlu0 %v1509, 21
    %v1600 = vpop.permute.xlu0 %1599
    %1601 = vrot.lane.b32.xlu0 %v1510, 21
    %v1602 = vpop.permute.xlu0 %1601
    %1603 = vrot.lane.b32.xlu0 %v1511, 21
    %v1604 = vpop.permute.xlu0 %1603
    %1605 = vrot.lane.b32.xlu0 %v1512, 21
    %v1606 = vpop.permute.xlu0 %1605
    %1607 = vrot.lane.b32.xlu0 %v1513, 21
    %v1608 = vpop.permute.xlu0 %1607
    %1609 = vrot.lane.b32.xlu0 %v1514, 21
    %v1610 = vpop.permute.xlu0 %1609
    %vm1643 = vcmask 195752
    %1644 = vst.msk [vmem:[#allocation3] sm:$0xff] %vm1643, %v1548
    %1645 = vst.msk [vmem:[#allocation3 + $0x8] sm:$0xff] %vm1643, %v1550
    %1646 = vst.msk [vmem:[#allocation3 + $0x10] sm:$0xff] %vm1643, %v1552
    %1647 = vst.msk [vmem:[#allocation3 + $0x18] sm:$0xff] %vm1643, %v1554
    %1648 = vst.msk [vmem:[#allocation3 + $0x20] sm:$0xff] %vm1643, %v1556
    %1649 = vst.msk [vmem:[#allocation3 + $0x28] sm:$0xff] %vm1643, %v1558
    %1650 = vst.msk [vmem:[#allocation3 + $0x30] sm:$0xff] %vm1643, %v1560
    %1651 = vst.msk [vmem:[#allocation3 + $0x38] sm:$0xff] %vm1643, %v1562
    %1652 = vst.msk [vmem:[#allocation3 + $0x40] sm:$0xff] %vm1643, %v1564
    %1653 = vst.msk [vmem:[#allocation3 + $0x48] sm:$0xff] %vm1643, %v1566
    %1654 = vst.msk [vmem:[#allocation3 + $0x50] sm:$0xff] %vm1643, %v1568
    %1655 = vst.msk [vmem:[#allocation3 + $0x58] sm:$0xff] %vm1643, %v1570
    %1656 = vst.msk [vmem:[#allocation3 + $0x60] sm:$0xff] %vm1643, %v1572
    %1657 = vst.msk [vmem:[#allocation3 + $0x68] sm:$0xff] %vm1643, %v1574
    %1658 = vst.msk [vmem:[#allocation3 + $0x70] sm:$0xff] %vm1643, %v1576
    %1659 = vst.msk [vmem:[#allocation3 + $0x78] sm:$0xff] %vm1643, %v1578
    %1660 = vst.msk [vmem:[#allocation3 + $0x80] sm:$0xff] %vm1643, %v1580
    %1661 = vst.msk [vmem:[#allocation3 + $0x88] sm:$0xff] %vm1643, %v1582
    %1662 = vst.msk [vmem:[#allocation3 + $0x90] sm:$0xff] %vm1643, %v1584
    %1663 = vst.msk [vmem:[#allocation3 + $0x98] sm:$0xff] %vm1643, %v1586
    %1664 = vst.msk [vmem:[#allocation3 + $0xa0] sm:$0xff] %vm1643, %v1588
    %1665 = vst.msk [vmem:[#allocation3 + $0xa8] sm:$0xff] %vm1643, %v1590
    %1666 = vst.msk [vmem:[#allocation3 + $0xb0] sm:$0xff] %vm1643, %v1592
    %1667 = vst.msk [vmem:[#allocation3 + $0xb8] sm:$0xff] %vm1643, %v1594
    %1668 = vst.msk [vmem:[#allocation3 + $0xc0] sm:$0xff] %vm1643, %v1596
    %1669 = vst.msk [vmem:[#allocation3 + $0xc8] sm:$0xff] %vm1643, %v1598
    %1670 = vst.msk [vmem:[#allocation3 + $0xd0] sm:$0xff] %vm1643, %v1600
    %1671 = vst.msk [vmem:[#allocation3 + $0xd8] sm:$0xff] %vm1643, %v1602
    %1672 = vst.msk [vmem:[#allocation3 + $0xe0] sm:$0xff] %vm1643, %v1604
    %1673 = vst.msk [vmem:[#allocation3 + $0xe8] sm:$0xff] %vm1643, %v1606
    %1674 = vst.msk [vmem:[#allocation3 + $0xf0] sm:$0xff] %vm1643, %v1608
    %1675 = vst.msk [vmem:[#allocation3 + $0xf8] sm:$0xff] %vm1643, %v1610
    %v1676 = vld [vmem:[%s1289 + $0x2] sm:$0xff]
    %v1677 = vld [vmem:[%s1289 + $0x12] sm:$0xff]
    %v1678 = vld [vmem:[%s1289 + $0x22] sm:$0xff]
    %v1679 = vld [vmem:[%s1289 + $0x32] sm:$0xff]
    %v1680 = vld [vmem:[%s1289 + $0x42] sm:$0xff]
    %v1681 = vld [vmem:[%s1289 + $0x52] sm:$0xff]
    %v1682 = vld [vmem:[%s1289 + $0x62] sm:$0xff]
    %v1683 = vld [vmem:[%s1289 + $0x72] sm:$0xff]
    %v1684 = vld [vmem:[%s1289 + $0x82] sm:$0xff]
    %v1685 = vld [vmem:[%s1289 + $0x92] sm:$0xff]
    %v1686 = vld [vmem:[%s1289 + $0xa2] sm:$0xff]
    %v1687 = vld [vmem:[%s1289 + $0xb2] sm:$0xff]
    %v1688 = vld [vmem:[%s1289 + $0xc2] sm:$0xff]
    %v1689 = vld [vmem:[%s1289 + $0xd2] sm:$0xff]
    %v1690 = vld [vmem:[%s1289 + $0xe2] sm:$0xff]
    %v1691 = vld [vmem:[%s1289 + $0xf2] sm:$0xff]
    %v1692 = vld [vmem:[%s1289 + $0x122] sm:$0xff]
    %v1693 = vld [vmem:[%s1289 + $0x132] sm:$0xff]
    %v1694 = vld [vmem:[%s1289 + $0x142] sm:$0xff]
    %v1695 = vld [vmem:[%s1289 + $0x152] sm:$0xff]
    %v1696 = vld [vmem:[%s1289 + $0x162] sm:$0xff]
    %v1697 = vld [vmem:[%s1289 + $0x172] sm:$0xff]
    %v1698 = vld [vmem:[%s1289 + $0x182] sm:$0xff]
    %v1699 = vld [vmem:[%s1289 + $0x192] sm:$0xff]
    %v1700 = vld [vmem:[%s1289 + $0x1a2] sm:$0xff]
    %v1701 = vld [vmem:[%s1289 + $0x1b2] sm:$0xff]
    %v1702 = vld [vmem:[%s1289 + $0x1c2] sm:$0xff]
    %v1703 = vld [vmem:[%s1289 + $0x1d2] sm:$0xff]
    %v1704 = vld [vmem:[%s1289 + $0x1e2] sm:$0xff]
    %v1705 = vld [vmem:[%s1289 + $0x1f2] sm:$0xff]
    %v1706 = vld [vmem:[%s1289 + $0x202] sm:$0xff]
    %v1707 = vld [vmem:[%s1289 + $0x212] sm:$0xff]
    %1740 = vrot.lane.b32.xlu0 %v1676, 24
    %v1741 = vpop.permute.xlu0 %1740
    %1742 = vrot.lane.b32.xlu0 %v1677, 24
    %v1743 = vpop.permute.xlu0 %1742
    %1744 = vrot.lane.b32.xlu0 %v1678, 24
    %v1745 = vpop.permute.xlu0 %1744
    %1746 = vrot.lane.b32.xlu0 %v1679, 24
    %v1747 = vpop.permute.xlu0 %1746
    %1748 = vrot.lane.b32.xlu0 %v1680, 24
    %v1749 = vpop.permute.xlu0 %1748
    %1750 = vrot.lane.b32.xlu0 %v1681, 24
    %v1751 = vpop.permute.xlu0 %1750
    %1752 = vrot.lane.b32.xlu0 %v1682, 24
    %v1753 = vpop.permute.xlu0 %1752
    %1754 = vrot.lane.b32.xlu0 %v1683, 24
    %v1755 = vpop.permute.xlu0 %1754
    %1756 = vrot.lane.b32.xlu0 %v1684, 24
    %v1757 = vpop.permute.xlu0 %1756
    %1758 = vrot.lane.b32.xlu0 %v1685, 24
    %v1759 = vpop.permute.xlu0 %1758
    %1760 = vrot.lane.b32.xlu0 %v1686, 24
    %v1761 = vpop.permute.xlu0 %1760
    %1762 = vrot.lane.b32.xlu0 %v1687, 24
    %v1763 = vpop.permute.xlu0 %1762
    %1764 = vrot.lane.b32.xlu0 %v1688, 24
    %v1765 = vpop.permute.xlu0 %1764
    %1766 = vrot.lane.b32.xlu0 %v1689, 24
    %v1767 = vpop.permute.xlu0 %1766
    %1768 = vrot.lane.b32.xlu0 %v1690, 24
    %v1769 = vpop.permute.xlu0 %1768
    %1770 = vrot.lane.b32.xlu0 %v1691, 24
    %v1771 = vpop.permute.xlu0 %1770
    %1772 = vrot.lane.b32.xlu0 %v1692, 24
    %v1773 = vpop.permute.xlu0 %1772
    %1774 = vrot.lane.b32.xlu0 %v1693, 24
    %v1775 = vpop.permute.xlu0 %1774
    %1776 = vrot.lane.b32.xlu0 %v1694, 24
    %v1777 = vpop.permute.xlu0 %1776
    %1778 = vrot.lane.b32.xlu0 %v1695, 24
    %v1779 = vpop.permute.xlu0 %1778
    %1780 = vrot.lane.b32.xlu0 %v1696, 24
    %v1781 = vpop.permute.xlu0 %1780
    %1782 = vrot.lane.b32.xlu0 %v1697, 24
    %v1783 = vpop.permute.xlu0 %1782
    %1784 = vrot.lane.b32.xlu0 %v1698, 24
    %v1785 = vpop.permute.xlu0 %1784
    %1786 = vrot.lane.b32.xlu0 %v1699, 24
    %v1787 = vpop.permute.xlu0 %1786
    %1788 = vrot.lane.b32.xlu0 %v1700, 24
    %v1789 = vpop.permute.xlu0 %1788
    %1790 = vrot.lane.b32.xlu0 %v1701, 24
    %v1791 = vpop.permute.xlu0 %1790
    %1792 = vrot.lane.b32.xlu0 %v1702, 24
    %v1793 = vpop.permute.xlu0 %1792
    %1794 = vrot.lane.b32.xlu0 %v1703, 24
    %v1795 = vpop.permute.xlu0 %1794
    %1796 = vrot.lane.b32.xlu0 %v1704, 24
    %v1797 = vpop.permute.xlu0 %1796
    %1798 = vrot.lane.b32.xlu0 %v1705, 24
    %v1799 = vpop.permute.xlu0 %1798
    %1800 = vrot.lane.b32.xlu0 %v1706, 24
    %v1801 = vpop.permute.xlu0 %1800
    %1802 = vrot.lane.b32.xlu0 %v1707, 24
    %v1803 = vpop.permute.xlu0 %1802
    %vm1836 = vcmask 220352
    %1837 = vst.msk [vmem:[#allocation3] sm:$0xff] %vm1836, %v1741
    %1838 = vst.msk [vmem:[#allocation3 + $0x8] sm:$0xff] %vm1836, %v1743
    %1839 = vst.msk [vmem:[#allocation3 + $0x10] sm:$0xff] %vm1836, %v1745
    %1840 = vst.msk [vmem:[#allocation3 + $0x18] sm:$0xff] %vm1836, %v1747
    %1841 = vst.msk [vmem:[#allocation3 + $0x20] sm:$0xff] %vm1836, %v1749
    %1842 = vst.msk [vmem:[#allocation3 + $0x28] sm:$0xff] %vm1836, %v1751
    %1843 = vst.msk [vmem:[#allocation3 + $0x30] sm:$0xff] %vm1836, %v1753
    %1844 = vst.msk [vmem:[#allocation3 + $0x38] sm:$0xff] %vm1836, %v1755
    %1845 = vst.msk [vmem:[#allocation3 + $0x40] sm:$0xff] %vm1836, %v1757
    %1846 = vst.msk [vmem:[#allocation3 + $0x48] sm:$0xff] %vm1836, %v1759
    %1847 = vst.msk [vmem:[#allocation3 + $0x50] sm:$0xff] %vm1836, %v1761
    %1848 = vst.msk [vmem:[#allocation3 + $0x58] sm:$0xff] %vm1836, %v1763
    %1849 = vst.msk [vmem:[#allocation3 + $0x60] sm:$0xff] %vm1836, %v1765
    %1850 = vst.msk [vmem:[#allocation3 + $0x68] sm:$0xff] %vm1836, %v1767
    %1851 = vst.msk [vmem:[#allocation3 + $0x70] sm:$0xff] %vm1836, %v1769
    %1852 = vst.msk [vmem:[#allocation3 + $0x78] sm:$0xff] %vm1836, %v1771
    %1853 = vst.msk [vmem:[#allocation3 + $0x80] sm:$0xff] %vm1836, %v1773
    %1854 = vst.msk [vmem:[#allocation3 + $0x88] sm:$0xff] %vm1836, %v1775
    %1855 = vst.msk [vmem:[#allocation3 + $0x90] sm:$0xff] %vm1836, %v1777
    %1856 = vst.msk [vmem:[#allocation3 + $0x98] sm:$0xff] %vm1836, %v1779
    %1857 = vst.msk [vmem:[#allocation3 + $0xa0] sm:$0xff] %vm1836, %v1781
    %1858 = vst.msk [vmem:[#allocation3 + $0xa8] sm:$0xff] %vm1836, %v1783
    %1859 = vst.msk [vmem:[#allocation3 + $0xb0] sm:$0xff] %vm1836, %v1785
    %1860 = vst.msk [vmem:[#allocation3 + $0xb8] sm:$0xff] %vm1836, %v1787
    %1861 = vst.msk [vmem:[#allocation3 + $0xc0] sm:$0xff] %vm1836, %v1789
    %1862 = vst.msk [vmem:[#allocation3 + $0xc8] sm:$0xff] %vm1836, %v1791
    %1863 = vst.msk [vmem:[#allocation3 + $0xd0] sm:$0xff] %vm1836, %v1793
    %1864 = vst.msk [vmem:[#allocation3 + $0xd8] sm:$0xff] %vm1836, %v1795
    %1865 = vst.msk [vmem:[#allocation3 + $0xe0] sm:$0xff] %vm1836, %v1797
    %1866 = vst.msk [vmem:[#allocation3 + $0xe8] sm:$0xff] %vm1836, %v1799
    %1867 = vst.msk [vmem:[#allocation3 + $0xf0] sm:$0xff] %vm1836, %v1801
    %1868 = vst.msk [vmem:[#allocation3 + $0xf8] sm:$0xff] %vm1836, %v1803
    %v1869 = vld [vmem:[#allocation3] sm:$0xff]
    %v1870 = vld [vmem:[#allocation3 + $0x8] sm:$0xff]
    %v1871 = vld [vmem:[#allocation3 + $0x10] sm:$0xff]
    %v1872 = vld [vmem:[#allocation3 + $0x18] sm:$0xff]
    %v1873 = vld [vmem:[#allocation3 + $0x20] sm:$0xff]
    %v1874 = vld [vmem:[#allocation3 + $0x28] sm:$0xff]
    %v1875 = vld [vmem:[#allocation3 + $0x30] sm:$0xff]
    %v1876 = vld [vmem:[#allocation3 + $0x38] sm:$0xff]
    %v1877 = vld [vmem:[#allocation3 + $0x40] sm:$0xff]
    %v1878 = vld [vmem:[#allocation3 + $0x48] sm:$0xff]
    %v1879 = vld [vmem:[#allocation3 + $0x50] sm:$0xff]
    %v1880 = vld [vmem:[#allocation3 + $0x58] sm:$0xff]
    %v1881 = vld [vmem:[#allocation3 + $0x60] sm:$0xff]
    %v1882 = vld [vmem:[#allocation3 + $0x68] sm:$0xff]
    %v1883 = vld [vmem:[#allocation3 + $0x70] sm:$0xff]
    %v1884 = vld [vmem:[#allocation3 + $0x78] sm:$0xff]
    %v1885 = vld [vmem:[#allocation3 + $0x80] sm:$0xff]
    %v1886 = vld [vmem:[#allocation3 + $0x88] sm:$0xff]
    %v1887 = vld [vmem:[#allocation3 + $0x90] sm:$0xff]
    %v1888 = vld [vmem:[#allocation3 + $0x98] sm:$0xff]
    %v1889 = vld [vmem:[#allocation3 + $0xa0] sm:$0xff]
    %v1890 = vld [vmem:[#allocation3 + $0xa8] sm:$0xff]
    %v1891 = vld [vmem:[#allocation3 + $0xb0] sm:$0xff]
    %v1892 = vld [vmem:[#allocation3 + $0xb8] sm:$0xff]
    %v1893 = vld [vmem:[#allocation3 + $0xc0] sm:$0xff]
    %v1894 = vld [vmem:[#allocation3 + $0xc8] sm:$0xff]
    %v1895 = vld [vmem:[#allocation3 + $0xd0] sm:$0xff]
    %v1896 = vld [vmem:[#allocation3 + $0xd8] sm:$0xff]
    %v1897 = vld [vmem:[#allocation3 + $0xe0] sm:$0xff]
    %v1898 = vld [vmem:[#allocation3 + $0xe8] sm:$0xff]
    %v1899 = vld [vmem:[#allocation3 + $0xf0] sm:$0xff]
    %v1900 = vld [vmem:[#allocation3 + $0xf8] sm:$0xff]
    %v1901 = vpack.c.bf16 %v1870, %v1869
    %v1902 = vpack.c.bf16 %v1872, %v1871
    %v1903 = vpack.c.bf16 %v1874, %v1873
    %v1904 = vpack.c.bf16 %v1876, %v1875
    %v1905 = vpack.c.bf16 %v1878, %v1877
    %v1906 = vpack.c.bf16 %v1880, %v1879
    %v1907 = vpack.c.bf16 %v1882, %v1881
    %v1908 = vpack.c.bf16 %v1884, %v1883
    %v1909 = vpack.c.bf16 %v1886, %v1885
    %v1910 = vpack.c.bf16 %v1888, %v1887
    %v1911 = vpack.c.bf16 %v1890, %v1889
    %v1912 = vpack.c.bf16 %v1892, %v1891
    %v1913 = vpack.c.bf16 %v1894, %v1893
    %v1914 = vpack.c.bf16 %v1896, %v1895
    %v1915 = vpack.c.bf16 %v1898, %v1897
    %v1916 = vpack.c.bf16 %v1900, %v1899
    %v1917 = vld [vmem:[%s3] sm:$0xf]
    %v1918 = vld [vmem:[%s3 + $0x4] sm:$0xf]
    %v1919 = vld [vmem:[%s3 + $0x8] sm:$0xf]
    %v1920 = vld [vmem:[%s3 + $0xc] sm:$0x3]
    %v1925 = vunpack.c.l.b16 %v1917
    %v1926 = vunpack.c.l.b16 %v1918
    %v1927 = vunpack.c.l.b16 %v1919
    %v1928 = vunpack.c.l.b16 %v1920
    %v1929 = vpack.c.b16 %v1926, %v1925
    %v1930 = vpack.c.b16 %v1928, %v1927
    %vm1932 = vcmask 220160
    %v1934 = vsel %vm1932, %v1901, 0
    %v1937 = vsel %vm1932, %v1902, 0
    %v1940 = vsel %vm1932, %v1903, 0
    %v1943 = vsel %vm1932, %v1904, 0
    %v1946 = vsel %vm1932, %v1905, 0
    %v1949 = vsel %vm1932, %v1906, 0
    %v1952 = vsel %vm1932, %v1907, 0
    %v1955 = vsel %vm1932, %v1908, 0
    %v1958 = vsel %vm1932, %v1909, 0
    %v1961 = vsel %vm1932, %v1910, 0
    %v1964 = vsel %vm1932, %v1911, 0
    %v1967 = vsel %vm1932, %v1912, 0
    %v1970 = vsel %vm1932, %v1913, 0
    %v1973 = vsel %vm1932, %v1914, 0
    %v1976 = vsel %vm1932, %v1915, 0
    %v1979 = vsel %vm1932, %v1916, 0
    %vm1981 = vcmask 1044480
    %vm1982 = vcmask 1045504
    %v1983 = vsel %vm1981, 4294967295, 65535
    %v1984 = vsel %vm1982, %v1983, 0
    %v1986 = vand.u32 %v1930, %v1984
    %1988 = vmatprep.subr.bf16.mxu0 0
    %1989 = vmatpush1.bf16.msra.mxu0 %v1929
    %1990 = vmatprep.subr.bf16.mxu0 0
    %1991 = vmatpush1.bf16.msra.mxu0 %v1986
    %1992 = vmatprep.subr.bf16.mxu0 0
    %1993 = vmatpush1.bf16.msra.mxu0 0
    %1994 = vmatprep.subr.bf16.mxu0 0
    %1995 = vmatpush1.bf16.msra.mxu0 0
    %1996 = vmatprep.subr.bf16.mxu0 0
    %1997 = vmatpush1.bf16.msra.mxu0 0
    %1998 = vmatprep.subr.bf16.mxu0 0
    %1999 = vmatpush1.bf16.msra.mxu0 0
    %2000 = vmatprep.subr.bf16.mxu0 0
    %2001 = vmatpush1.bf16.msra.mxu0 0
    %2002 = vmatprep.subr.bf16.mxu0 0
    %2003 = vmatpush1.bf16.msra.mxu0 0
    %2004 = vmatprep.subr.bf16.mxu0 0
    %2005 = vmatpush1.bf16.msra.mxu0 0
    %2006 = vmatprep.subr.bf16.mxu0 0
    %2007 = vmatpush1.bf16.msra.mxu0 0
    %2008 = vmatprep.subr.bf16.mxu0 0
    %2009 = vmatpush1.bf16.msra.mxu0 0
    %2010 = vmatprep.subr.bf16.mxu0 0
    %2011 = vmatpush1.bf16.msra.mxu0 0
    %2012 = vmatprep.subr.bf16.mxu0 0
    %2013 = vmatpush1.bf16.msra.mxu0 0
    %2014 = vmatprep.subr.bf16.mxu0 0
    %2015 = vmatpush1.bf16.msra.mxu0 0
    %2016 = vmatprep.subr.bf16.mxu0 0
    %2017 = vmatpush1.bf16.msra.mxu0 0
    %2018 = vmatprep.subr.bf16.mxu0 0
    %2019 = vmatpush1.bf16.msra.mxu0 0
    %2020 = vmatprep.mubr.bf16.mxu0 0
    %2021 = vmatmul.mubr.bf16.gmra.mrb[0].mxu0 %v1934
    %v2022 = vpop.f32.mrb[0].mxu0
    %v2023 = vadd.f32 0.0, %v2022
    %v2024 = vpop.f32.mrb[0].mxu0
    %v2025 = vpop.f32.mrb[0].mxu0
    %v2026 = vadd.f32 0.0, %v2025
    %v2027 = vpop.f32.mrb[0].mxu0
    %2028 = vmatprep.mubr.bf16.mxu0 0
    %2029 = vmatmul.mubr.bf16.gmra.mrb[0].mxu0 %v1937
    %v2030 = vpop.f32.mrb[0].mxu0
    %v2031 = vadd.f32 0.0, %v2030
    %v2032 = vpop.f32.mrb[0].mxu0
    %v2033 = vpop.f32.mrb[0].mxu0
    %v2034 = vadd.f32 0.0, %v2033
    %v2035 = vpop.f32.mrb[0].mxu0
    %2036 = vmatprep.mubr.bf16.mxu0 0
    %2037 = vmatmul.mubr.bf16.gmra.mrb[0].mxu0 %v1940
    %v2038 = vpop.f32.mrb[0].mxu0
    %v2039 = vadd.f32 0.0, %v2038
    %v2040 = vpop.f32.mrb[0].mxu0
    %v2041 = vpop.f32.mrb[0].mxu0
    %v2042 = vadd.f32 0.0, %v2041
    %v2043 = vpop.f32.mrb[0].mxu0
    %2044 = vmatprep.mubr.bf16.mxu0 0
    %2045 = vmatmul.mubr.bf16.gmra.mrb[0].mxu0 %v1943
    %v2046 = vpop.f32.mrb[0].mxu0
    %v2047 = vadd.f32 0.0, %v2046
    %v2048 = vpop.f32.mrb[0].mxu0
    %v2049 = vpop.f32.mrb[0].mxu0
    %v2050 = vadd.f32 0.0, %v2049
    %v2051 = vpop.f32.mrb[0].mxu0
    %2052 = vmatprep.mubr.bf16.mxu0 0
    %2053 = vmatmul.mubr.bf16.gmra.mrb[0].mxu0 %v1946
    %v2054 = vpop.f32.mrb[0].mxu0
    %v2055 = vadd.f32 0.0, %v2054
    %v2056 = vpop.f32.mrb[0].mxu0
    %v2057 = vpop.f32.mrb[0].mxu0
    %v2058 = vadd.f32 0.0, %v2057
    %v2059 = vpop.f32.mrb[0].mxu0
    %2060 = vmatprep.mubr.bf16.mxu0 0
    %2061 = vmatmul.mubr.bf16.gmra.mrb[0].mxu0 %v1949
    %v2062 = vpop.f32.mrb[0].mxu0
    %v2063 = vadd.f32 0.0, %v2062
    %v2064 = vpop.f32.mrb[0].mxu0
    %v2065 = vpop.f32.mrb[0].mxu0
    %v2066 = vadd.f32 0.0, %v2065
    %v2067 = vpop.f32.mrb[0].mxu0
    %2068 = vmatprep.mubr.bf16.mxu0 0
    %2069 = vmatmul.mubr.bf16.gmra.mrb[0].mxu0 %v1952
    %v2070 = vpop.f32.mrb[0].mxu0
    %v2071 = vadd.f32 0.0, %v2070
    %v2072 = vpop.f32.mrb[0].mxu0
    %v2073 = vpop.f32.mrb[0].mxu0
    %v2074 = vadd.f32 0.0, %v2073
    %v2075 = vpop.f32.mrb[0].mxu0
    %2076 = vmatprep.mubr.bf16.mxu0 0
    %2077 = vmatmul.mubr.bf16.gmra.mrb[0].mxu0 %v1955
    %v2078 = vpop.f32.mrb[0].mxu0
    %v2079 = vadd.f32 0.0, %v2078
    %v2080 = vpop.f32.mrb[0].mxu0
    %v2081 = vpop.f32.mrb[0].mxu0
    %v2082 = vadd.f32 0.0, %v2081
    %v2083 = vpop.f32.mrb[0].mxu0
    %2084 = vmatprep.mubr.bf16.mxu0 0
    %2085 = vmatmul.mubr.bf16.gmra.mrb[0].mxu0 %v1958
    %v2086 = vpop.f32.mrb[0].mxu0
    %v2087 = vadd.f32 0.0, %v2086
    %v2088 = vpop.f32.mrb[0].mxu0
    %v2089 = vpop.f32.mrb[0].mxu0
    %v2090 = vadd.f32 0.0, %v2089
    %v2091 = vpop.f32.mrb[0].mxu0
    %2092 = vmatprep.mubr.bf16.mxu0 0
    %2093 = vmatmul.mubr.bf16.gmra.mrb[0].mxu0 %v1961
    %v2094 = vpop.f32.mrb[0].mxu0
    %v2095 = vadd.f32 0.0, %v2094
    %v2096 = vpop.f32.mrb[0].mxu0
    %v2097 = vpop.f32.mrb[0].mxu0
    %v2098 = vadd.f32 0.0, %v2097
    %v2099 = vpop.f32.mrb[0].mxu0
    %2100 = vmatprep.mubr.bf16.mxu0 0
    %2101 = vmatmul.mubr.bf16.gmra.mrb[0].mxu0 %v1964
    %v2102 = vpop.f32.mrb[0].mxu0
    %v2103 = vadd.f32 0.0, %v2102
    %v2104 = vpop.f32.mrb[0].mxu0
    %v2105 = vpop.f32.mrb[0].mxu0
    %v2106 = vadd.f32 0.0, %v2105
    %v2107 = vpop.f32.mrb[0].mxu0
    %2108 = vmatprep.mubr.bf16.mxu0 0
    %2109 = vmatmul.mubr.bf16.gmra.mrb[0].mxu0 %v1967
    %v2110 = vpop.f32.mrb[0].mxu0
    %v2111 = vadd.f32 0.0, %v2110
    %v2112 = vpop.f32.mrb[0].mxu0
    %v2113 = vpop.f32.mrb[0].mxu0
    %v2114 = vadd.f32 0.0, %v2113
    %v2115 = vpop.f32.mrb[0].mxu0
    %2116 = vmatprep.mubr.bf16.mxu0 0
    %2117 = vmatmul.mubr.bf16.gmra.mrb[0].mxu0 %v1970
    %v2118 = vpop.f32.mrb[0].mxu0
    %v2119 = vadd.f32 0.0, %v2118
    %v2120 = vpop.f32.mrb[0].mxu0
    %v2121 = vpop.f32.mrb[0].mxu0
    %v2122 = vadd.f32 0.0, %v2121
    %v2123 = vpop.f32.mrb[0].mxu0
    %2124 = vmatprep.mubr.bf16.mxu0 0
    %2125 = vmatmul.mubr.bf16.gmra.mrb[0].mxu0 %v1973
    %v2126 = vpop.f32.mrb[0].mxu0
    %v2127 = vadd.f32 0.0, %v2126
    %v2128 = vpop.f32.mrb[0].mxu0
    %v2129 = vpop.f32.mrb[0].mxu0
    %v2130 = vadd.f32 0.0, %v2129
    %v2131 = vpop.f32.mrb[0].mxu0
    %2132 = vmatprep.mubr.bf16.mxu0 0
    %2133 = vmatmul.mubr.bf16.gmra.mrb[0].mxu0 %v1976
    %v2134 = vpop.f32.mrb[0].mxu0
    %v2135 = vadd.f32 0.0, %v2134
    %v2136 = vpop.f32.mrb[0].mxu0
    %v2137 = vpop.f32.mrb[0].mxu0
    %v2138 = vadd.f32 0.0, %v2137
    %v2139 = vpop.f32.mrb[0].mxu0
    %2140 = vmatprep.mubr.bf16.mxu0 0
    %2141 = vmatmul.mubr.bf16.gmra.mrb[0].mxu0 %v1979
    %v2142 = vpop.f32.mrb[0].mxu0
    %v2143 = vadd.f32 0.0, %v2142
    %v2144 = vpop.f32.mrb[0].mxu0
    %v2145 = vpop.f32.mrb[0].mxu0
    %v2146 = vadd.f32 0.0, %v2145
    %v2147 = vpop.f32.mrb[0].mxu0
    %2148 = vdwg.mxu0
    %v2149 = vld [vmem:[%s4] sm:$0x1]
    %v2151 = vlaneseq
    %v2152 = vshrl.u32 %v2151, 7
    %v2153 = vsub.s32 0, %v2152
    %v2154 = vrot.slane %v2149, %v2153
    %v2156 = vmul.f32 %v2023, %v2154
    %v2157 = vmul.f32 %v2026, %v2154
    %v2158 = vmul.f32 %v2031, %v2154
    %v2159 = vmul.f32 %v2034, %v2154
    %v2160 = vmul.f32 %v2039, %v2154
    %v2161 = vmul.f32 %v2042, %v2154
    %v2162 = vmul.f32 %v2047, %v2154
    %v2163 = vmul.f32 %v2050, %v2154
    %v2164 = vmul.f32 %v2055, %v2154
    %v2165 = vmul.f32 %v2058, %v2154
    %v2166 = vmul.f32 %v2063, %v2154
    %v2167 = vmul.f32 %v2066, %v2154
    %v2168 = vmul.f32 %v2071, %v2154
    %v2169 = vmul.f32 %v2074, %v2154
    %v2170 = vmul.f32 %v2079, %v2154
    %v2171 = vmul.f32 %v2082, %v2154
    %v2172 = vmul.f32 %v2087, %v2154
    %v2173 = vmul.f32 %v2090, %v2154
    %v2174 = vmul.f32 %v2095, %v2154
    %v2175 = vmul.f32 %v2098, %v2154
    %v2176 = vmul.f32 %v2103, %v2154
    %v2177 = vmul.f32 %v2106, %v2154
    %v2178 = vmul.f32 %v2111, %v2154
    %v2179 = vmul.f32 %v2114, %v2154
    %v2180 = vmul.f32 %v2119, %v2154
    %v2181 = vmul.f32 %v2122, %v2154
    %v2182 = vmul.f32 %v2127, %v2154
    %v2183 = vmul.f32 %v2130, %v2154
    %v2184 = vmul.f32 %v2135, %v2154
    %v2185 = vmul.f32 %v2138, %v2154
    %v2186 = vmul.f32 %v2143, %v2154
    %v2187 = vmul.f32 %v2146, %v2154
    %v2188 = vld [vmem:[%s5] sm:$0x1]
    %v2190 = vlaneseq
    %v2191 = vshrl.u32 %v2190, 7
    %v2192 = vsub.s32 0, %v2191
    %v2193 = vrot.slane %v2188, %v2192
    %v2195 = vadd.f32 %v2156, %v2193
    %v2196 = vadd.f32 %v2157, %v2193
    %v2197 = vadd.f32 %v2158, %v2193
    %v2198 = vadd.f32 %v2159, %v2193
    %v2199 = vadd.f32 %v2160, %v2193
    %v2200 = vadd.f32 %v2161, %v2193
    %v2201 = vadd.f32 %v2162, %v2193
    %v2202 = vadd.f32 %v2163, %v2193
    %v2203 = vadd.f32 %v2164, %v2193
    %v2204 = vadd.f32 %v2165, %v2193
    %v2205 = vadd.f32 %v2166, %v2193
    %v2206 = vadd.f32 %v2167, %v2193
    %v2207 = vadd.f32 %v2168, %v2193
    %v2208 = vadd.f32 %v2169, %v2193
    %v2209 = vadd.f32 %v2170, %v2193
    %v2210 = vadd.f32 %v2171, %v2193
    %v2211 = vadd.f32 %v2172, %v2193
    %v2212 = vadd.f32 %v2173, %v2193
    %v2213 = vadd.f32 %v2174, %v2193
    %v2214 = vadd.f32 %v2175, %v2193
    %v2215 = vadd.f32 %v2176, %v2193
    %v2216 = vadd.f32 %v2177, %v2193
    %v2217 = vadd.f32 %v2178, %v2193
    %v2218 = vadd.f32 %v2179, %v2193
    %v2219 = vadd.f32 %v2180, %v2193
    %v2220 = vadd.f32 %v2181, %v2193
    %v2221 = vadd.f32 %v2182, %v2193
    %v2222 = vadd.f32 %v2183, %v2193
    %v2223 = vadd.f32 %v2184, %v2193
    %v2224 = vadd.f32 %v2185, %v2193
    %v2225 = vadd.f32 %v2186, %v2193
    %v2226 = vadd.f32 %v2187, %v2193
    %v2227 = vmax.f32 %v2195, 0.0
    %v2228 = vmax.f32 %v2196, 0.0
    %v2229 = vmax.f32 %v2197, 0.0
    %v2230 = vmax.f32 %v2198, 0.0
    %v2231 = vmax.f32 %v2199, 0.0
    %v2232 = vmax.f32 %v2200, 0.0
    %v2233 = vmax.f32 %v2201, 0.0
    %v2234 = vmax.f32 %v2202, 0.0
    %v2235 = vmax.f32 %v2203, 0.0
    %v2236 = vmax.f32 %v2204, 0.0
    %v2237 = vmax.f32 %v2205, 0.0
    %v2238 = vmax.f32 %v2206, 0.0
    %v2239 = vmax.f32 %v2207, 0.0
    %v2240 = vmax.f32 %v2208, 0.0
    %v2241 = vmax.f32 %v2209, 0.0
    %v2242 = vmax.f32 %v2210, 0.0
    %v2243 = vmax.f32 %v2211, 0.0
    %v2244 = vmax.f32 %v2212, 0.0
    %v2245 = vmax.f32 %v2213, 0.0
    %v2246 = vmax.f32 %v2214, 0.0
    %v2247 = vmax.f32 %v2215, 0.0
    %v2248 = vmax.f32 %v2216, 0.0
    %v2249 = vmax.f32 %v2217, 0.0
    %v2250 = vmax.f32 %v2218, 0.0
    %v2251 = vmax.f32 %v2219, 0.0
    %v2252 = vmax.f32 %v2220, 0.0
    %v2253 = vmax.f32 %v2221, 0.0
    %v2254 = vmax.f32 %v2222, 0.0
    %v2255 = vmax.f32 %v2223, 0.0
    %v2256 = vmax.f32 %v2224, 0.0
    %v2257 = vmax.f32 %v2225, 0.0
    %v2258 = vmax.f32 %v2226, 0.0
    %2259 = vst [vmem:[#allocation4] sm:$0xff] 0.0
    %2260 = vst [vmem:[#allocation4 + $0x8] sm:$0x3] 0.0
    %2261 = vst [vmem:[#allocation4 + $0x10] sm:$0xff] 0.0
    %2262 = vst [vmem:[#allocation4 + $0x18] sm:$0x3] 0.0
    %2263 = vst [vmem:[#allocation4 + $0x20] sm:$0xff] 0.0
    %2264 = vst [vmem:[#allocation4 + $0x28] sm:$0x3] 0.0
    %2265 = vst [vmem:[#allocation4 + $0x30] sm:$0xff] 0.0
    %2266 = vst [vmem:[#allocation4 + $0x38] sm:$0x3] 0.0
    %2267 = vst [vmem:[#allocation4 + $0x40] sm:$0xff] 0.0
    %2268 = vst [vmem:[#allocation4 + $0x48] sm:$0x3] 0.0
    %2269 = vst [vmem:[#allocation4 + $0x50] sm:$0xff] 0.0
    %2270 = vst [vmem:[#allocation4 + $0x58] sm:$0x3] 0.0
    %2271 = vst [vmem:[#allocation4 + $0x60] sm:$0xff] 0.0
    %2272 = vst [vmem:[#allocation4 + $0x68] sm:$0x3] 0.0
    %2273 = vst [vmem:[#allocation4 + $0x70] sm:$0xff] 0.0
    %2274 = vst [vmem:[#allocation4 + $0x78] sm:$0x3] 0.0
    %2275 = vst [vmem:[#allocation4 + $0x80] sm:$0xff] 0.0
    %2276 = vst [vmem:[#allocation4 + $0x88] sm:$0x3] 0.0
    %2277 = vst [vmem:[#allocation4 + $0x90] sm:$0xff] 0.0
    %2278 = vst [vmem:[#allocation4 + $0x98] sm:$0x3] 0.0
    %2279 = vst [vmem:[#allocation4 + $0xa0] sm:$0xff] 0.0
    %2280 = vst [vmem:[#allocation4 + $0xa8] sm:$0x3] 0.0
    %2281 = vst [vmem:[#allocation4 + $0xb0] sm:$0xff] 0.0
    %2282 = vst [vmem:[#allocation4 + $0xb8] sm:$0x3] 0.0
    %2283 = vst [vmem:[#allocation4 + $0xc0] sm:$0xff] 0.0
    %2284 = vst [vmem:[#allocation4 + $0xc8] sm:$0x3] 0.0
    %2285 = vst [vmem:[#allocation4 + $0xd0] sm:$0xff] 0.0
    %2286 = vst [vmem:[#allocation4 + $0xd8] sm:$0x3] 0.0
    %2287 = vst [vmem:[#allocation4 + $0xe0] sm:$0xff] 0.0
    %2288 = vst [vmem:[#allocation4 + $0xe8] sm:$0x3] 0.0
    %2289 = vst [vmem:[#allocation4 + $0xf0] sm:$0xff] 0.0
    %2290 = vst [vmem:[#allocation4 + $0xf8] sm:$0x3] 0.0
    %2291 = vst [vmem:[#allocation4 + $0x100] sm:$0xff] 0.0
    %2292 = vst [vmem:[#allocation4 + $0x108] sm:$0x3] 0.0
    %2293 = vst [vmem:[#allocation4 + $0x110] sm:$0xff] 0.0
    %2294 = vst [vmem:[#allocation4 + $0x118] sm:$0x3] 0.0
    %2295 = vst [vmem:[#allocation4 + $0x120] sm:$0xff] 0.0
    %2296 = vst [vmem:[#allocation4 + $0x128] sm:$0x3] 0.0
    %2297 = vst [vmem:[#allocation4 + $0x130] sm:$0xff] 0.0
    %2298 = vst [vmem:[#allocation4 + $0x138] sm:$0x3] 0.0
    %2299 = vst [vmem:[#allocation4 + $0x140] sm:$0xff] 0.0
    %2300 = vst [vmem:[#allocation4 + $0x148] sm:$0x3] 0.0
    %2301 = vst [vmem:[#allocation4 + $0x150] sm:$0xff] 0.0
    %2302 = vst [vmem:[#allocation4 + $0x158] sm:$0x3] 0.0
    %2303 = vst [vmem:[#allocation4 + $0x160] sm:$0xff] 0.0
    %2304 = vst [vmem:[#allocation4 + $0x168] sm:$0x3] 0.0
    %2305 = vst [vmem:[#allocation4 + $0x170] sm:$0xff] 0.0
    %2306 = vst [vmem:[#allocation4 + $0x178] sm:$0x3] 0.0
    %2307 = vst [vmem:[#allocation4 + $0x180] sm:$0xff] 0.0
    %2308 = vst [vmem:[#allocation4 + $0x188] sm:$0x3] 0.0
    %2309 = vst [vmem:[#allocation4 + $0x190] sm:$0xff] 0.0
    %2310 = vst [vmem:[#allocation4 + $0x198] sm:$0x3] 0.0
    %2311 = vst [vmem:[#allocation4 + $0x1a0] sm:$0xff] 0.0
    %2312 = vst [vmem:[#allocation4 + $0x1a8] sm:$0x3] 0.0
    %2313 = vst [vmem:[#allocation4 + $0x1b0] sm:$0xff] 0.0
    %2314 = vst [vmem:[#allocation4 + $0x1b8] sm:$0x3] 0.0
    %2315 = vst [vmem:[#allocation4 + $0x1c0] sm:$0xff] 0.0
    %2316 = vst [vmem:[#allocation4 + $0x1c8] sm:$0x3] 0.0
    %2317 = vst [vmem:[#allocation4 + $0x1d0] sm:$0xff] 0.0
    %2318 = vst [vmem:[#allocation4 + $0x1d8] sm:$0x3] 0.0
    %2319 = vst [vmem:[#allocation4 + $0x1e0] sm:$0xff] 0.0
    %2320 = vst [vmem:[#allocation4 + $0x1e8] sm:$0x3] 0.0
    %2321 = vst [vmem:[#allocation4 + $0x1f0] sm:$0xff] 0.0
    %2322 = vst [vmem:[#allocation4 + $0x1f8] sm:$0x3] 0.0
    %2323 = vst [vmem:[#allocation4 + $0x200] sm:$0xff] 0.0
    %2324 = vst [vmem:[#allocation4 + $0x208] sm:$0x3] 0.0
    %2325 = vst [vmem:[#allocation4 + $0x210] sm:$0xff] 0.0
    %2326 = vst [vmem:[#allocation4 + $0x218] sm:$0x3] 0.0
    %2327 = vst [vmem:[#allocation4 + $0x220] sm:$0xff] 0.0
    %2328 = vst [vmem:[#allocation4 + $0x228] sm:$0x3] 0.0
    %2329 = vst [vmem:[#allocation4 + $0x230] sm:$0xff] 0.0
    %2330 = vst [vmem:[#allocation4 + $0x238] sm:$0x3] 0.0
    %s2331 = scalar_lea.vmem [#allocation4], 16
    %2332 = vst [vmem:[%s2331 + $0x1] sm:$0xff] %v2227
    %2333 = vst [vmem:[%s2331 + $0x11] sm:$0xff] %v2228
    %2334 = vst [vmem:[%s2331 + $0x21] sm:$0xff] %v2229
    %2335 = vst [vmem:[%s2331 + $0x31] sm:$0xff] %v2230
    %2336 = vst [vmem:[%s2331 + $0x41] sm:$0xff] %v2231
    %2337 = vst [vmem:[%s2331 + $0x51] sm:$0xff] %v2232
    %2338 = vst [vmem:[%s2331 + $0x61] sm:$0xff] %v2233
    %2339 = vst [vmem:[%s2331 + $0x71] sm:$0xff] %v2234
    %2340 = vst [vmem:[%s2331 + $0x81] sm:$0xff] %v2235
    %2341 = vst [vmem:[%s2331 + $0x91] sm:$0xff] %v2236
    %2342 = vst [vmem:[%s2331 + $0xa1] sm:$0xff] %v2237
    %2343 = vst [vmem:[%s2331 + $0xb1] sm:$0xff] %v2238
    %2344 = vst [vmem:[%s2331 + $0xc1] sm:$0xff] %v2239
    %2345 = vst [vmem:[%s2331 + $0xd1] sm:$0xff] %v2240
    %2346 = vst [vmem:[%s2331 + $0xe1] sm:$0xff] %v2241
    %2347 = vst [vmem:[%s2331 + $0xf1] sm:$0xff] %v2242
    %2348 = vst [vmem:[%s2331 + $0x121] sm:$0xff] %v2243
    %2349 = vst [vmem:[%s2331 + $0x131] sm:$0xff] %v2244
    %2350 = vst [vmem:[%s2331 + $0x141] sm:$0xff] %v2245
    %2351 = vst [vmem:[%s2331 + $0x151] sm:$0xff] %v2246
    %2352 = vst [vmem:[%s2331 + $0x161] sm:$0xff] %v2247
    %2353 = vst [vmem:[%s2331 + $0x171] sm:$0xff] %v2248
    %2354 = vst [vmem:[%s2331 + $0x181] sm:$0xff] %v2249
    %2355 = vst [vmem:[%s2331 + $0x191] sm:$0xff] %v2250
    %2356 = vst [vmem:[%s2331 + $0x1a1] sm:$0xff] %v2251
    %2357 = vst [vmem:[%s2331 + $0x1b1] sm:$0xff] %v2252
    %2358 = vst [vmem:[%s2331 + $0x1c1] sm:$0xff] %v2253
    %2359 = vst [vmem:[%s2331 + $0x1d1] sm:$0xff] %v2254
    %2360 = vst [vmem:[%s2331 + $0x1e1] sm:$0xff] %v2255
    %2361 = vst [vmem:[%s2331 + $0x1f1] sm:$0xff] %v2256
    %2362 = vst [vmem:[%s2331 + $0x201] sm:$0xff] %v2257
    %2363 = vst [vmem:[%s2331 + $0x211] sm:$0xff] %v2258
    %v2364 = vld [vmem:[#allocation4] ss:$2 sm:$0xf]
    %s2365 = scalar_lea.vmem [#allocation4], 32
    %v2366 = vld [vmem:[%s2365] ss:$2 sm:$0xf]
    %s2367 = scalar_lea.vmem [#allocation4], 64
    %v2368 = vld [vmem:[%s2367] ss:$2 sm:$0xf]
    %s2369 = scalar_lea.vmem [#allocation4], 96
    %v2370 = vld [vmem:[%s2369] ss:$2 sm:$0xf]
    %s2371 = scalar_lea.vmem [#allocation4], 128
    %v2372 = vld [vmem:[%s2371] ss:$2 sm:$0xf]
    %s2373 = scalar_lea.vmem [#allocation4], 160
    %v2374 = vld [vmem:[%s2373] ss:$2 sm:$0xf]
    %s2375 = scalar_lea.vmem [#allocation4], 192
    %v2376 = vld [vmem:[%s2375] ss:$2 sm:$0xf]
    %s2377 = scalar_lea.vmem [#allocation4], 224
    %v2378 = vld [vmem:[%s2377] ss:$2 sm:$0xf]
    %s2379 = scalar_lea.vmem [#allocation4], 288
    %v2380 = vld [vmem:[%s2379] ss:$2 sm:$0xf]
    %s2381 = scalar_lea.vmem [#allocation4], 320
    %v2382 = vld [vmem:[%s2381] ss:$2 sm:$0xf]
    %s2383 = scalar_lea.vmem [#allocation4], 352
    %v2384 = vld [vmem:[%s2383] ss:$2 sm:$0xf]
    %s2385 = scalar_lea.vmem [#allocation4], 384
    %v2386 = vld [vmem:[%s2385] ss:$2 sm:$0xf]
    %s2387 = scalar_lea.vmem [#allocation4], 416
    %v2388 = vld [vmem:[%s2387] ss:$2 sm:$0xf]
    %s2389 = scalar_lea.vmem [#allocation4], 448
    %v2390 = vld [vmem:[%s2389] ss:$2 sm:$0xf]
    %s2391 = scalar_lea.vmem [#allocation4], 480
    %v2392 = vld [vmem:[%s2391] ss:$2 sm:$0xf]
    %s2393 = scalar_lea.vmem [#allocation4], 512
    %v2394 = vld [vmem:[%s2393] ss:$2 sm:$0xf]
    %s2395 = scalar_lea.vmem [#allocation4], 1
    %v2396 = vld [vmem:[%s2395] ss:$2 sm:$0xf]
    %s2397 = scalar_lea.vmem [#allocation4], 33
    %v2398 = vld [vmem:[%s2397] ss:$2 sm:$0xf]
    %s2399 = scalar_lea.vmem [#allocation4], 65
    %v2400 = vld [vmem:[%s2399] ss:$2 sm:$0xf]
    %s2401 = scalar_lea.vmem [#allocation4], 97
    %v2402 = vld [vmem:[%s2401] ss:$2 sm:$0xf]
    %s2403 = scalar_lea.vmem [#allocation4], 129
    %v2404 = vld [vmem:[%s2403] ss:$2 sm:$0xf]
    %s2405 = scalar_lea.vmem [#allocation4], 161
    %v2406 = vld [vmem:[%s2405] ss:$2 sm:$0xf]
    %s2407 = scalar_lea.vmem [#allocation4], 193
    %v2408 = vld [vmem:[%s2407] ss:$2 sm:$0xf]
    %s2409 = scalar_lea.vmem [#allocation4], 225
    %v2410 = vld [vmem:[%s2409] ss:$2 sm:$0xf]
    %s2411 = scalar_lea.vmem [#allocation4], 289
    %v2412 = vld [vmem:[%s2411] ss:$2 sm:$0xf]
    %s2413 = scalar_lea.vmem [#allocation4], 321
    %v2414 = vld [vmem:[%s2413] ss:$2 sm:$0xf]
    %s2415 = scalar_lea.vmem [#allocation4], 353
    %v2416 = vld [vmem:[%s2415] ss:$2 sm:$0xf]
    %s2417 = scalar_lea.vmem [#allocation4], 385
    %v2418 = vld [vmem:[%s2417] ss:$2 sm:$0xf]
    %s2419 = scalar_lea.vmem [#allocation4], 417
    %v2420 = vld [vmem:[%s2419] ss:$2 sm:$0xf]
    %s2421 = scalar_lea.vmem [#allocation4], 449
    %v2422 = vld [vmem:[%s2421] ss:$2 sm:$0xf]
    %s2423 = scalar_lea.vmem [#allocation4], 481
    %v2424 = vld [vmem:[%s2423] ss:$2 sm:$0xf]
    %s2425 = scalar_lea.vmem [#allocation4], 513
    %v2426 = vld [vmem:[%s2425] ss:$2 sm:$0xf]
    %v2427 = vmax.f32 %v2364, %v2396
    %v2428 = vmax.f32 %v2366, %v2398
    %v2429 = vmax.f32 %v2368, %v2400
    %v2430 = vmax.f32 %v2370, %v2402
    %v2431 = vmax.f32 %v2372, %v2404
    %v2432 = vmax.f32 %v2374, %v2406
    %v2433 = vmax.f32 %v2376, %v2408
    %v2434 = vmax.f32 %v2378, %v2410
    %v2435 = vmax.f32 %v2380, %v2412
    %v2436 = vmax.f32 %v2382, %v2414
    %v2437 = vmax.f32 %v2384, %v2416
    %v2438 = vmax.f32 %v2386, %v2418
    %v2439 = vmax.f32 %v2388, %v2420
    %v2440 = vmax.f32 %v2390, %v2422
    %v2441 = vmax.f32 %v2392, %v2424
    %v2442 = vmax.f32 %v2394, %v2426
    %s2443 = scalar_lea.vmem [#allocation4], 2
    %v2444 = vld [vmem:[%s2443] ss:$2 sm:$0xf]
    %s2445 = scalar_lea.vmem [#allocation4], 34
    %v2446 = vld [vmem:[%s2445] ss:$2 sm:$0xf]
    %s2447 = scalar_lea.vmem [#allocation4], 66
    %v2448 = vld [vmem:[%s2447] ss:$2 sm:$0xf]
    %s2449 = scalar_lea.vmem [#allocation4], 98
    %v2450 = vld [vmem:[%s2449] ss:$2 sm:$0xf]
    %s2451 = scalar_lea.vmem [#allocation4], 130
    %v2452 = vld [vmem:[%s2451] ss:$2 sm:$0xf]
    %s2453 = scalar_lea.vmem [#allocation4], 162
    %v2454 = vld [vmem:[%s2453] ss:$2 sm:$0xf]
    %s2455 = scalar_lea.vmem [#allocation4], 194
    %v2456 = vld [vmem:[%s2455] ss:$2 sm:$0xf]
    %s2457 = scalar_lea.vmem [#allocation4], 226
    %v2458 = vld [vmem:[%s2457] ss:$2 sm:$0xf]
    %s2459 = scalar_lea.vmem [#allocation4], 290
    %v2460 = vld [vmem:[%s2459] ss:$2 sm:$0xf]
    %s2461 = scalar_lea.vmem [#allocation4], 322
    %v2462 = vld [vmem:[%s2461] ss:$2 sm:$0xf]
    %s2463 = scalar_lea.vmem [#allocation4], 354
    %v2464 = vld [vmem:[%s2463] ss:$2 sm:$0xf]
    %s2465 = scalar_lea.vmem [#allocation4], 386
    %v2466 = vld [vmem:[%s2465] ss:$2 sm:$0xf]
    %s2467 = scalar_lea.vmem [#allocation4], 418
    %v2468 = vld [vmem:[%s2467] ss:$2 sm:$0xf]
    %s2469 = scalar_lea.vmem [#allocation4], 450
    %v2470 = vld [vmem:[%s2469] ss:$2 sm:$0xf]
    %s2471 = scalar_lea.vmem [#allocation4], 482
    %v2472 = vld [vmem:[%s2471] ss:$2 sm:$0xf]
    %s2473 = scalar_lea.vmem [#allocation4], 514
    %v2474 = vld [vmem:[%s2473] ss:$2 sm:$0xf]
    %v2475 = vmax.f32 %v2427, %v2444
    %v2476 = vmax.f32 %v2428, %v2446
    %v2477 = vmax.f32 %v2429, %v2448
    %v2478 = vmax.f32 %v2430, %v2450
    %v2479 = vmax.f32 %v2431, %v2452
    %v2480 = vmax.f32 %v2432, %v2454
    %v2481 = vmax.f32 %v2433, %v2456
    %v2482 = vmax.f32 %v2434, %v2458
    %v2483 = vmax.f32 %v2435, %v2460
    %v2484 = vmax.f32 %v2436, %v2462
    %v2485 = vmax.f32 %v2437, %v2464
    %v2486 = vmax.f32 %v2438, %v2466
    %v2487 = vmax.f32 %v2439, %v2468
    %v2488 = vmax.f32 %v2440, %v2470
    %v2489 = vmax.f32 %v2441, %v2472
    %v2490 = vmax.f32 %v2442, %v2474
    %v2491 = vld [vmem:[%s2331] ss:$2 sm:$0xf]
    %s2492 = scalar_lea.vmem %s2331, 32 [#allocation4]
    %v2493 = vld [vmem:[%s2492] ss:$2 sm:$0xf]
    %s2494 = scalar_lea.vmem %s2331, 64 [#allocation4]
    %v2495 = vld [vmem:[%s2494] ss:$2 sm:$0xf]
    %s2496 = scalar_lea.vmem %s2331, 96 [#allocation4]
    %v2497 = vld [vmem:[%s2496] ss:$2 sm:$0xf]
    %s2498 = scalar_lea.vmem %s2331, 128 [#allocation4]
    %v2499 = vld [vmem:[%s2498] ss:$2 sm:$0xf]
    %s2500 = scalar_lea.vmem %s2331, 160 [#allocation4]
    %v2501 = vld [vmem:[%s2500] ss:$2 sm:$0xf]
    %s2502 = scalar_lea.vmem %s2331, 192 [#allocation4]
    %v2503 = vld [vmem:[%s2502] ss:$2 sm:$0xf]
    %s2504 = scalar_lea.vmem %s2331, 224 [#allocation4]
    %v2505 = vld [vmem:[%s2504] ss:$2 sm:$0xf]
    %s2506 = scalar_lea.vmem %s2331, 288 [#allocation4]
    %v2507 = vld [vmem:[%s2506] ss:$2 sm:$0xf]
    %s2508 = scalar_lea.vmem %s2331, 320 [#allocation4]
    %v2509 = vld [vmem:[%s2508] ss:$2 sm:$0xf]
    %s2510 = scalar_lea.vmem %s2331, 352 [#allocation4]
    %v2511 = vld [vmem:[%s2510] ss:$2 sm:$0xf]
    %s2512 = scalar_lea.vmem %s2331, 384 [#allocation4]
    %v2513 = vld [vmem:[%s2512] ss:$2 sm:$0xf]
    %s2514 = scalar_lea.vmem %s2331, 416 [#allocation4]
    %v2515 = vld [vmem:[%s2514] ss:$2 sm:$0xf]
    %s2516 = scalar_lea.vmem %s2331, 448 [#allocation4]
    %v2517 = vld [vmem:[%s2516] ss:$2 sm:$0xf]
    %s2518 = scalar_lea.vmem %s2331, 480 [#allocation4]
    %v2519 = vld [vmem:[%s2518] ss:$2 sm:$0xf]
    %s2520 = scalar_lea.vmem %s2331, 512 [#allocation4]
    %v2521 = vld [vmem:[%s2520] ss:$2 sm:$0xf]
    %v2522 = vmax.f32 %v2475, %v2491
    %v2523 = vmax.f32 %v2476, %v2493
    %v2524 = vmax.f32 %v2477, %v2495
    %v2525 = vmax.f32 %v2478, %v2497
    %v2526 = vmax.f32 %v2479, %v2499
    %v2527 = vmax.f32 %v2480, %v2501
    %v2528 = vmax.f32 %v2481, %v2503
    %v2529 = vmax.f32 %v2482, %v2505
    %v2530 = vmax.f32 %v2483, %v2507
    %v2531 = vmax.f32 %v2484, %v2509
    %v2532 = vmax.f32 %v2485, %v2511
    %v2533 = vmax.f32 %v2486, %v2513
    %v2534 = vmax.f32 %v2487, %v2515
    %v2535 = vmax.f32 %v2488, %v2517
    %v2536 = vmax.f32 %v2489, %v2519
    %v2537 = vmax.f32 %v2490, %v2521
    %s2538 = scalar_lea.vmem %s2331, 1 [#allocation4]
    %v2539 = vld [vmem:[%s2538] ss:$2 sm:$0xf]
    %s2540 = scalar_lea.vmem %s2331, 33 [#allocation4]
    %v2541 = vld [vmem:[%s2540] ss:$2 sm:$0xf]
    %s2542 = scalar_lea.vmem %s2331, 65 [#allocation4]
    %v2543 = vld [vmem:[%s2542] ss:$2 sm:$0xf]
    %s2544 = scalar_lea.vmem %s2331, 97 [#allocation4]
    %v2545 = vld [vmem:[%s2544] ss:$2 sm:$0xf]
    %s2546 = scalar_lea.vmem %s2331, 129 [#allocation4]
    %v2547 = vld [vmem:[%s2546] ss:$2 sm:$0xf]
    %s2548 = scalar_lea.vmem %s2331, 161 [#allocation4]
    %v2549 = vld [vmem:[%s2548] ss:$2 sm:$0xf]
    %s2550 = scalar_lea.vmem %s2331, 193 [#allocation4]
    %v2551 = vld [vmem:[%s2550] ss:$2 sm:$0xf]
    %s2552 = scalar_lea.vmem %s2331, 225 [#allocation4]
    %v2553 = vld [vmem:[%s2552] ss:$2 sm:$0xf]
    %s2554 = scalar_lea.vmem %s2331, 289 [#allocation4]
    %v2555 = vld [vmem:[%s2554] ss:$2 sm:$0xf]
    %s2556 = scalar_lea.vmem %s2331, 321 [#allocation4]
    %v2557 = vld [vmem:[%s2556] ss:$2 sm:$0xf]
    %s2558 = scalar_lea.vmem %s2331, 353 [#allocation4]
    %v2559 = vld [vmem:[%s2558] ss:$2 sm:$0xf]
    %s2560 = scalar_lea.vmem %s2331, 385 [#allocation4]
    %v2561 = vld [vmem:[%s2560] ss:$2 sm:$0xf]
    %s2562 = scalar_lea.vmem %s2331, 417 [#allocation4]
    %v2563 = vld [vmem:[%s2562] ss:$2 sm:$0xf]
    %s2564 = scalar_lea.vmem %s2331, 449 [#allocation4]
    %v2565 = vld [vmem:[%s2564] ss:$2 sm:$0xf]
    %s2566 = scalar_lea.vmem %s2331, 481 [#allocation4]
    %v2567 = vld [vmem:[%s2566] ss:$2 sm:$0xf]
    %s2568 = scalar_lea.vmem %s2331, 513 [#allocation4]
    %v2569 = vld [vmem:[%s2568] ss:$2 sm:$0xf]
    %v2570 = vmax.f32 %v2522, %v2539
    %v2571 = vmax.f32 %v2523, %v2541
    %v2572 = vmax.f32 %v2524, %v2543
    %v2573 = vmax.f32 %v2525, %v2545
    %v2574 = vmax.f32 %v2526, %v2547
    %v2575 = vmax.f32 %v2527, %v2549
    %v2576 = vmax.f32 %v2528, %v2551
    %v2577 = vmax.f32 %v2529, %v2553
    %v2578 = vmax.f32 %v2530, %v2555
    %v2579 = vmax.f32 %v2531, %v2557
    %v2580 = vmax.f32 %v2532, %v2559
    %v2581 = vmax.f32 %v2533, %v2561
    %v2582 = vmax.f32 %v2534, %v2563
    %v2583 = vmax.f32 %v2535, %v2565
    %v2584 = vmax.f32 %v2536, %v2567
    %v2585 = vmax.f32 %v2537, %v2569
    %s2586 = scalar_lea.vmem %s2331, 2 [#allocation4]
    %v2587 = vld [vmem:[%s2586] ss:$2 sm:$0xf]
    %s2588 = scalar_lea.vmem %s2331, 34 [#allocation4]
    %v2589 = vld [vmem:[%s2588] ss:$2 sm:$0xf]
    %s2590 = scalar_lea.vmem %s2331, 66 [#allocation4]
    %v2591 = vld [vmem:[%s2590] ss:$2 sm:$0xf]
    %s2592 = scalar_lea.vmem %s2331, 98 [#allocation4]
    %v2593 = vld [vmem:[%s2592] ss:$2 sm:$0xf]
    %s2594 = scalar_lea.vmem %s2331, 130 [#allocation4]
    %v2595 = vld [vmem:[%s2594] ss:$2 sm:$0xf]
    %s2596 = scalar_lea.vmem %s2331, 162 [#allocation4]
    %v2597 = vld [vmem:[%s2596] ss:$2 sm:$0xf]
    %s2598 = scalar_lea.vmem %s2331, 194 [#allocation4]
    %v2599 = vld [vmem:[%s2598] ss:$2 sm:$0xf]
    %s2600 = scalar_lea.vmem %s2331, 226 [#allocation4]
    %v2601 = vld [vmem:[%s2600] ss:$2 sm:$0xf]
    %s2602 = scalar_lea.vmem %s2331, 290 [#allocation4]
    %v2603 = vld [vmem:[%s2602] ss:$2 sm:$0xf]
    %s2604 = scalar_lea.vmem %s2331, 322 [#allocation4]
    %v2605 = vld [vmem:[%s2604] ss:$2 sm:$0xf]
    %s2606 = scalar_lea.vmem %s2331, 354 [#allocation4]
    %v2607 = vld [vmem:[%s2606] ss:$2 sm:$0xf]
    %s2608 = scalar_lea.vmem %s2331, 386 [#allocation4]
    %v2609 = vld [vmem:[%s2608] ss:$2 sm:$0xf]
    %s2610 = scalar_lea.vmem %s2331, 418 [#allocation4]
    %v2611 = vld [vmem:[%s2610] ss:$2 sm:$0xf]
    %s2612 = scalar_lea.vmem %s2331, 450 [#allocation4]
    %v2613 = vld [vmem:[%s2612] ss:$2 sm:$0xf]
    %s2614 = scalar_lea.vmem %s2331, 482 [#allocation4]
    %v2615 = vld [vmem:[%s2614] ss:$2 sm:$0xf]
    %s2616 = scalar_lea.vmem %s2331, 514 [#allocation4]
    %v2617 = vld [vmem:[%s2616] ss:$2 sm:$0xf]
    %v2618 = vmax.f32 %v2570, %v2587
    %v2619 = vmax.f32 %v2571, %v2589
    %v2620 = vmax.f32 %v2572, %v2591
    %v2621 = vmax.f32 %v2573, %v2593
    %v2622 = vmax.f32 %v2574, %v2595
    %v2623 = vmax.f32 %v2575, %v2597
    %v2624 = vmax.f32 %v2576, %v2599
    %v2625 = vmax.f32 %v2577, %v2601
    %v2626 = vmax.f32 %v2578, %v2603
    %v2627 = vmax.f32 %v2579, %v2605
    %v2628 = vmax.f32 %v2580, %v2607
    %v2629 = vmax.f32 %v2581, %v2609
    %v2630 = vmax.f32 %v2582, %v2611
    %v2631 = vmax.f32 %v2583, %v2613
    %v2632 = vmax.f32 %v2584, %v2615
    %v2633 = vmax.f32 %v2585, %v2617
    %s2634 = scalar_lea.vmem [#allocation4], 32
    %v2635 = vld [vmem:[%s2634] ss:$2 sm:$0xf]
    %s2636 = scalar_lea.vmem %s2634, 32 [#allocation4]
    %v2637 = vld [vmem:[%s2636] ss:$2 sm:$0xf]
    %s2638 = scalar_lea.vmem %s2634, 64 [#allocation4]
    %v2639 = vld [vmem:[%s2638] ss:$2 sm:$0xf]
    %s2640 = scalar_lea.vmem %s2634, 96 [#allocation4]
    %v2641 = vld [vmem:[%s2640] ss:$2 sm:$0xf]
    %s2642 = scalar_lea.vmem %s2634, 128 [#allocation4]
    %v2643 = vld [vmem:[%s2642] ss:$2 sm:$0xf]
    %s2644 = scalar_lea.vmem %s2634, 160 [#allocation4]
    %v2645 = vld [vmem:[%s2644] ss:$2 sm:$0xf]
    %s2646 = scalar_lea.vmem %s2634, 192 [#allocation4]
    %v2647 = vld [vmem:[%s2646] ss:$2 sm:$0xf]
    %s2648 = scalar_lea.vmem %s2634, 224 [#allocation4]
    %v2649 = vld [vmem:[%s2648] ss:$2 sm:$0xf]
    %s2650 = scalar_lea.vmem %s2634, 288 [#allocation4]
    %v2651 = vld [vmem:[%s2650] ss:$2 sm:$0xf]
    %s2652 = scalar_lea.vmem %s2634, 320 [#allocation4]
    %v2653 = vld [vmem:[%s2652] ss:$2 sm:$0xf]
    %s2654 = scalar_lea.vmem %s2634, 352 [#allocation4]
    %v2655 = vld [vmem:[%s2654] ss:$2 sm:$0xf]
    %s2656 = scalar_lea.vmem %s2634, 384 [#allocation4]
    %v2657 = vld [vmem:[%s2656] ss:$2 sm:$0xf]
    %s2658 = scalar_lea.vmem %s2634, 416 [#allocation4]
    %v2659 = vld [vmem:[%s2658] ss:$2 sm:$0xf]
    %s2660 = scalar_lea.vmem %s2634, 448 [#allocation4]
    %v2661 = vld [vmem:[%s2660] ss:$2 sm:$0xf]
    %s2662 = scalar_lea.vmem %s2634, 480 [#allocation4]
    %v2663 = vld [vmem:[%s2662] ss:$2 sm:$0xf]
    %s2664 = scalar_lea.vmem %s2634, 512 [#allocation4]
    %v2665 = vld [vmem:[%s2664] ss:$2 sm:$0xf]
    %v2666 = vmax.f32 %v2618, %v2635
    %v2667 = vmax.f32 %v2619, %v2637
    %v2668 = vmax.f32 %v2620, %v2639
    %v2669 = vmax.f32 %v2621, %v2641
    %v2670 = vmax.f32 %v2622, %v2643
    %v2671 = vmax.f32 %v2623, %v2645
    %v2672 = vmax.f32 %v2624, %v2647
    %v2673 = vmax.f32 %v2625, %v2649
    %v2674 = vmax.f32 %v2626, %v2651
    %v2675 = vmax.f32 %v2627, %v2653
    %v2676 = vmax.f32 %v2628, %v2655
    %v2677 = vmax.f32 %v2629, %v2657
    %v2678 = vmax.f32 %v2630, %v2659
    %v2679 = vmax.f32 %v2631, %v2661
    %v2680 = vmax.f32 %v2632, %v2663
    %v2681 = vmax.f32 %v2633, %v2665
    %s2682 = scalar_lea.vmem %s2634, 1 [#allocation4]
    %v2683 = vld [vmem:[%s2682] ss:$2 sm:$0xf]
    %s2684 = scalar_lea.vmem %s2634, 33 [#allocation4]
    %v2685 = vld [vmem:[%s2684] ss:$2 sm:$0xf]
    %s2686 = scalar_lea.vmem %s2634, 65 [#allocation4]
    %v2687 = vld [vmem:[%s2686] ss:$2 sm:$0xf]
    %s2688 = scalar_lea.vmem %s2634, 97 [#allocation4]
    %v2689 = vld [vmem:[%s2688] ss:$2 sm:$0xf]
    %s2690 = scalar_lea.vmem %s2634, 129 [#allocation4]
    %v2691 = vld [vmem:[%s2690] ss:$2 sm:$0xf]
    %s2692 = scalar_lea.vmem %s2634, 161 [#allocation4]
    %v2693 = vld [vmem:[%s2692] ss:$2 sm:$0xf]
    %s2694 = scalar_lea.vmem %s2634, 193 [#allocation4]
    %v2695 = vld [vmem:[%s2694] ss:$2 sm:$0xf]
    %s2696 = scalar_lea.vmem %s2634, 225 [#allocation4]
    %v2697 = vld [vmem:[%s2696] ss:$2 sm:$0xf]
    %s2698 = scalar_lea.vmem %s2634, 289 [#allocation4]
    %v2699 = vld [vmem:[%s2698] ss:$2 sm:$0xf]
    %s2700 = scalar_lea.vmem %s2634, 321 [#allocation4]
    %v2701 = vld [vmem:[%s2700] ss:$2 sm:$0xf]
    %s2702 = scalar_lea.vmem %s2634, 353 [#allocation4]
    %v2703 = vld [vmem:[%s2702] ss:$2 sm:$0xf]
    %s2704 = scalar_lea.vmem %s2634, 385 [#allocation4]
    %v2705 = vld [vmem:[%s2704] ss:$2 sm:$0xf]
    %s2706 = scalar_lea.vmem %s2634, 417 [#allocation4]
    %v2707 = vld [vmem:[%s2706] ss:$2 sm:$0xf]
    %s2708 = scalar_lea.vmem %s2634, 449 [#allocation4]
    %v2709 = vld [vmem:[%s2708] ss:$2 sm:$0xf]
    %s2710 = scalar_lea.vmem %s2634, 481 [#allocation4]
    %v2711 = vld [vmem:[%s2710] ss:$2 sm:$0xf]
    %s2712 = scalar_lea.vmem %s2634, 513 [#allocation4]
    %v2713 = vld [vmem:[%s2712] ss:$2 sm:$0xf]
    %v2714 = vmax.f32 %v2666, %v2683
    %v2715 = vmax.f32 %v2667, %v2685
    %v2716 = vmax.f32 %v2668, %v2687
    %v2717 = vmax.f32 %v2669, %v2689
    %v2718 = vmax.f32 %v2670, %v2691
    %v2719 = vmax.f32 %v2671, %v2693
    %v2720 = vmax.f32 %v2672, %v2695
    %v2721 = vmax.f32 %v2673, %v2697
    %v2722 = vmax.f32 %v2674, %v2699
    %v2723 = vmax.f32 %v2675, %v2701
    %v2724 = vmax.f32 %v2676, %v2703
    %v2725 = vmax.f32 %v2677, %v2705
    %v2726 = vmax.f32 %v2678, %v2707
    %v2727 = vmax.f32 %v2679, %v2709
    %v2728 = vmax.f32 %v2680, %v2711
    %v2729 = vmax.f32 %v2681, %v2713
    %s2730 = scalar_lea.vmem %s2634, 2 [#allocation4]
    %v2731 = vld [vmem:[%s2730] ss:$2 sm:$0xf]
    %s2732 = scalar_lea.vmem %s2634, 34 [#allocation4]
    %v2733 = vld [vmem:[%s2732] ss:$2 sm:$0xf]
    %s2734 = scalar_lea.vmem %s2634, 66 [#allocation4]
    %v2735 = vld [vmem:[%s2734] ss:$2 sm:$0xf]
    %s2736 = scalar_lea.vmem %s2634, 98 [#allocation4]
    %v2737 = vld [vmem:[%s2736] ss:$2 sm:$0xf]
    %s2738 = scalar_lea.vmem %s2634, 130 [#allocation4]
    %v2739 = vld [vmem:[%s2738] ss:$2 sm:$0xf]
    %s2740 = scalar_lea.vmem %s2634, 162 [#allocation4]
    %v2741 = vld [vmem:[%s2740] ss:$2 sm:$0xf]
    %s2742 = scalar_lea.vmem %s2634, 194 [#allocation4]
    %v2743 = vld [vmem:[%s2742] ss:$2 sm:$0xf]
    %s2744 = scalar_lea.vmem %s2634, 226 [#allocation4]
    %v2745 = vld [vmem:[%s2744] ss:$2 sm:$0xf]
    %s2746 = scalar_lea.vmem %s2634, 290 [#allocation4]
    %v2747 = vld [vmem:[%s2746] ss:$2 sm:$0xf]
    %s2748 = scalar_lea.vmem %s2634, 322 [#allocation4]
    %v2749 = vld [vmem:[%s2748] ss:$2 sm:$0xf]
    %s2750 = scalar_lea.vmem %s2634, 354 [#allocation4]
    %v2751 = vld [vmem:[%s2750] ss:$2 sm:$0xf]
    %s2752 = scalar_lea.vmem %s2634, 386 [#allocation4]
    %v2753 = vld [vmem:[%s2752] ss:$2 sm:$0xf]
    %s2754 = scalar_lea.vmem %s2634, 418 [#allocation4]
    %v2755 = vld [vmem:[%s2754] ss:$2 sm:$0xf]
    %s2756 = scalar_lea.vmem %s2634, 450 [#allocation4]
    %v2757 = vld [vmem:[%s2756] ss:$2 sm:$0xf]
    %s2758 = scalar_lea.vmem %s2634, 482 [#allocation4]
    %v2759 = vld [vmem:[%s2758] ss:$2 sm:$0xf]
    %s2760 = scalar_lea.vmem %s2634, 514 [#allocation4]
    %v2761 = vld [vmem:[%s2760] ss:$2 sm:$0xf]
    %v2762 = vmax.f32 %v2714, %v2731
    %v2763 = vmax.f32 %v2715, %v2733
    %v2764 = vmax.f32 %v2716, %v2735
    %v2765 = vmax.f32 %v2717, %v2737
    %v2766 = vmax.f32 %v2718, %v2739
    %v2767 = vmax.f32 %v2719, %v2741
    %v2768 = vmax.f32 %v2720, %v2743
    %v2769 = vmax.f32 %v2721, %v2745
    %v2770 = vmax.f32 %v2722, %v2747
    %v2771 = vmax.f32 %v2723, %v2749
    %v2772 = vmax.f32 %v2724, %v2751
    %v2773 = vmax.f32 %v2725, %v2753
    %v2774 = vmax.f32 %v2726, %v2755
    %v2775 = vmax.f32 %v2727, %v2757
    %v2776 = vmax.f32 %v2728, %v2759
    %v2777 = vmax.f32 %v2729, %v2761
    %2778 = vst [vmem:[#allocation5] sm:$0x3f] 0.0
    %2779 = vst [vmem:[#allocation5 + $0x8] sm:$0x3f] 0.0
    %2780 = vst [vmem:[#allocation5 + $0x10] sm:$0x3f] 0.0
    %2781 = vst [vmem:[#allocation5 + $0x18] sm:$0x3f] 0.0
    %2782 = vst [vmem:[#allocation5 + $0x20] sm:$0x3f] 0.0
    %2783 = vst [vmem:[#allocation5 + $0x28] sm:$0x3f] 0.0
    %2784 = vst [vmem:[#allocation5 + $0x30] sm:$0x3f] 0.0
    %2785 = vst [vmem:[#allocation5 + $0x38] sm:$0x3f] 0.0
    %2786 = vst [vmem:[#allocation5 + $0x40] sm:$0x3f] 0.0
    %2787 = vst [vmem:[#allocation5 + $0x48] sm:$0x3f] 0.0
    %2788 = vst [vmem:[#allocation5 + $0x50] sm:$0x3f] 0.0
    %2789 = vst [vmem:[#allocation5 + $0x58] sm:$0x3f] 0.0
    %2790 = vst [vmem:[#allocation5 + $0x60] sm:$0x3f] 0.0
    %2791 = vst [vmem:[#allocation5 + $0x68] sm:$0x3f] 0.0
    %2792 = vst [vmem:[#allocation5 + $0x70] sm:$0x3f] 0.0
    %2793 = vst [vmem:[#allocation5 + $0x78] sm:$0x3f] 0.0
    %2794 = vst [vmem:[#allocation5 + $0x80] sm:$0x3f] 0.0
    %2795 = vst [vmem:[#allocation5 + $0x88] sm:$0x3f] 0.0
    %2796 = vst [vmem:[#allocation5 + $0x90] sm:$0x3f] 0.0
    %2797 = vst [vmem:[#allocation5 + $0x98] sm:$0x3f] 0.0
    %s2798 = scalar_lea.vmem [#allocation5], 8
    %2799 = vst [vmem:[%s2798 + $0x1] sm:$0xf] %v2762
    %2800 = vst [vmem:[%s2798 + $0x9] sm:$0xf] %v2763
    %2801 = vst [vmem:[%s2798 + $0x11] sm:$0xf] %v2764
    %2802 = vst [vmem:[%s2798 + $0x19] sm:$0xf] %v2765
    %2803 = vst [vmem:[%s2798 + $0x21] sm:$0xf] %v2766
    %2804 = vst [vmem:[%s2798 + $0x29] sm:$0xf] %v2767
    %2805 = vst [vmem:[%s2798 + $0x31] sm:$0xf] %v2768
    %2806 = vst [vmem:[%s2798 + $0x39] sm:$0xf] %v2769
    %2807 = vst [vmem:[%s2798 + $0x51] sm:$0xf] %v2770
    %2808 = vst [vmem:[%s2798 + $0x59] sm:$0xf] %v2771
    %2809 = vst [vmem:[%s2798 + $0x61] sm:$0xf] %v2772
    %2810 = vst [vmem:[%s2798 + $0x69] sm:$0xf] %v2773
    %2811 = vst [vmem:[%s2798 + $0x71] sm:$0xf] %v2774
    %2812 = vst [vmem:[%s2798 + $0x79] sm:$0xf] %v2775
    %2813 = vst [vmem:[%s2798 + $0x81] sm:$0xf] %v2776
    %2814 = vst [vmem:[%s2798 + $0x89] sm:$0xf] %v2777
    %v2815 = vld [vmem:[#allocation5] ss:$2 sm:$0x3]
    %s2816 = scalar_lea.vmem [#allocation5], 16
    %v2817 = vld [vmem:[%s2816] ss:$2 sm:$0x3]
    %s2818 = scalar_lea.vmem [#allocation5], 32
    %v2819 = vld [vmem:[%s2818] ss:$2 sm:$0x3]
    %s2820 = scalar_lea.vmem [#allocation5], 48
    %v2821 = vld [vmem:[%s2820] ss:$2 sm:$0x3]
    %s2822 = scalar_lea.vmem [#allocation5], 80
    %v2823 = vld [vmem:[%s2822] ss:$2 sm:$0x3]
    %s2824 = scalar_lea.vmem [#allocation5], 96
    %v2825 = vld [vmem:[%s2824] ss:$2 sm:$0x3]
    %s2826 = scalar_lea.vmem [#allocation5], 112
    %v2827 = vld [vmem:[%s2826] ss:$2 sm:$0x3]
    %s2828 = scalar_lea.vmem [#allocation5], 128
    %v2829 = vld [vmem:[%s2828] ss:$2 sm:$0x3]
    %v2838 = vcombine.low %v2815, %v2817
    %v2839 = vcombine.low %v2819, %v2821
    %v2841 = vunpack.c.l.s4 1983009808
    %v2842 = vunpack.c.0.s8 %v2841
    %v2843 = vlaneseq
    %v2844 = vshrl.u32 %v2843, 7
    %v2845 = vsub.s32 %v2842, %v2844
    %v2846 = vrot.slane %v2838, %v2845
    %v2848 = vunpack.c.l.s4 1983009808
    %v2849 = vunpack.c.0.s8 %v2848
    %v2850 = vlaneseq
    %v2851 = vshrl.u32 %v2850, 7
    %v2852 = vsub.s32 %v2849, %v2851
    %v2853 = vrot.slane %v2839, %v2852
    %v2854 = vcombine.low %v2846, %v2853
    %v2855 = vcombine.low %v2823, %v2825
    %v2856 = vcombine.low %v2827, %v2829
    %v2858 = vunpack.c.l.s4 1983009808
    %v2859 = vunpack.c.0.s8 %v2858
    %v2860 = vlaneseq
    %v2861 = vshrl.u32 %v2860, 7
    %v2862 = vsub.s32 %v2859, %v2861
    %v2863 = vrot.slane %v2855, %v2862
    %v2865 = vunpack.c.l.s4 1983009808
    %v2866 = vunpack.c.0.s8 %v2865
    %v2867 = vlaneseq
    %v2868 = vshrl.u32 %v2867, 7
    %v2869 = vsub.s32 %v2866, %v2868
    %v2870 = vrot.slane %v2856, %v2869
    %v2871 = vcombine.low %v2863, %v2870
    %vm2874 = vcmask 130048
    %2875 = vst.msk [vmem:[#allocation6] sm:$0xff] %vm2874, %v2854
    %2876 = vst.msk [vmem:[#allocation6 + $0x10] sm:$0xff] %vm2874, %v2871
    %s2877 = scalar_lea.vmem [#allocation5], 1
    %v2878 = vld [vmem:[%s2877] ss:$2 sm:$0x3]
    %s2879 = scalar_lea.vmem [#allocation5], 17
    %v2880 = vld [vmem:[%s2879] ss:$2 sm:$0x3]
    %s2881 = scalar_lea.vmem [#allocation5], 33
    %v2882 = vld [vmem:[%s2881] ss:$2 sm:$0x3]
    %s2883 = scalar_lea.vmem [#allocation5], 49
    %v2884 = vld [vmem:[%s2883] ss:$2 sm:$0x3]
    %s2885 = scalar_lea.vmem [#allocation5], 81
    %v2886 = vld [vmem:[%s2885] ss:$2 sm:$0x3]
    %s2887 = scalar_lea.vmem [#allocation5], 97
    %v2888 = vld [vmem:[%s2887] ss:$2 sm:$0x3]
    %s2889 = scalar_lea.vmem [#allocation5], 113
    %v2890 = vld [vmem:[%s2889] ss:$2 sm:$0x3]
    %s2891 = scalar_lea.vmem [#allocation5], 129
    %v2892 = vld [vmem:[%s2891] ss:$2 sm:$0x3]
    %v2901 = vcombine.low %v2878, %v2880
    %v2902 = vcombine.low %v2882, %v2884
    %v2904 = vunpack.c.l.s4 1983009808
    %v2905 = vunpack.c.0.s8 %v2904
    %v2906 = vlaneseq
    %v2907 = vshrl.u32 %v2906, 7
    %v2908 = vsub.s32 %v2905, %v2907
    %v2909 = vrot.slane %v2901, %v2908
    %v2911 = vunpack.c.l.s4 1983009808
    %v2912 = vunpack.c.0.s8 %v2911
    %v2913 = vlaneseq
    %v2914 = vshrl.u32 %v2913, 7
    %v2915 = vsub.s32 %v2912, %v2914
    %v2916 = vrot.slane %v2902, %v2915
    %v2917 = vcombine.low %v2909, %v2916
    %v2918 = vcombine.low %v2886, %v2888
    %v2919 = vcombine.low %v2890, %v2892
    %v2921 = vunpack.c.l.s4 1983009808
    %v2922 = vunpack.c.0.s8 %v2921
    %v2923 = vlaneseq
    %v2924 = vshrl.u32 %v2923, 7
    %v2925 = vsub.s32 %v2922, %v2924
    %v2926 = vrot.slane %v2918, %v2925
    %v2928 = vunpack.c.l.s4 1983009808
    %v2929 = vunpack.c.0.s8 %v2928
    %v2930 = vlaneseq
    %v2931 = vshrl.u32 %v2930, 7
    %v2932 = vsub.s32 %v2929, %v2931
    %v2933 = vrot.slane %v2919, %v2932
    %v2934 = vcombine.low %v2926, %v2933
    %2935 = vrot.lane.b32.xlu0 %v2917, 16
    %v2936 = vpop.permute.xlu0 %2935
    %2937 = vrot.lane.b32.xlu0 %v2934, 16
    %v2938 = vpop.permute.xlu0 %2937
    %vm2941 = vcmask 261248
    %2942 = vst.msk [vmem:[#allocation6] sm:$0xff] %vm2941, %v2936
    %2943 = vst.msk [vmem:[#allocation6 + $0x10] sm:$0xff] %vm2941, %v2938
    %s2944 = scalar_lea.vmem [#allocation5], 2
    %v2945 = vld [vmem:[%s2944] ss:$2 sm:$0x3]
    %s2946 = scalar_lea.vmem [#allocation5], 18
    %v2947 = vld [vmem:[%s2946] ss:$2 sm:$0x3]
    %s2948 = scalar_lea.vmem [#allocation5], 34
    %v2949 = vld [vmem:[%s2948] ss:$2 sm:$0x3]
    %s2950 = scalar_lea.vmem [#allocation5], 50
    %v2951 = vld [vmem:[%s2950] ss:$2 sm:$0x3]
    %s2952 = scalar_lea.vmem [#allocation5], 82
    %v2953 = vld [vmem:[%s2952] ss:$2 sm:$0x3]
    %s2954 = scalar_lea.vmem [#allocation5], 98
    %v2955 = vld [vmem:[%s2954] ss:$2 sm:$0x3]
    %s2956 = scalar_lea.vmem [#allocation5], 114
    %v2957 = vld [vmem:[%s2956] ss:$2 sm:$0x3]
    %s2958 = scalar_lea.vmem [#allocation5], 130
    %v2959 = vld [vmem:[%s2958] ss:$2 sm:$0x3]
    %v2968 = vcombine.low %v2945, %v2947
    %v2969 = vcombine.low %v2949, %v2951
    %v2971 = vunpack.c.l.s4 1983009808
    %v2972 = vunpack.c.0.s8 %v2971
    %v2973 = vlaneseq
    %v2974 = vshrl.u32 %v2973, 7
    %v2975 = vsub.s32 %v2972, %v2974
    %v2976 = vrot.slane %v2968, %v2975
    %v2978 = vunpack.c.l.s4 1983009808
    %v2979 = vunpack.c.0.s8 %v2978
    %v2980 = vlaneseq
    %v2981 = vshrl.u32 %v2980, 7
    %v2982 = vsub.s32 %v2979, %v2981
    %v2983 = vrot.slane %v2969, %v2982
    %v2984 = vcombine.low %v2976, %v2983
    %v2985 = vcombine.low %v2953, %v2955
    %v2986 = vcombine.low %v2957, %v2959
    %v2988 = vunpack.c.l.s4 1983009808
    %v2989 = vunpack.c.0.s8 %v2988
    %v2990 = vlaneseq
    %v2991 = vshrl.u32 %v2990, 7
    %v2992 = vsub.s32 %v2989, %v2991
    %v2993 = vrot.slane %v2985, %v2992
    %v2995 = vunpack.c.l.s4 1983009808
    %v2996 = vunpack.c.0.s8 %v2995
    %v2997 = vlaneseq
    %v2998 = vshrl.u32 %v2997, 7
    %v2999 = vsub.s32 %v2996, %v2998
    %v3000 = vrot.slane %v2986, %v2999
    %v3001 = vcombine.low %v2993, %v3000
    %3002 = vrot.lane.b32.xlu0 %v2984, 32
    %v3003 = vpop.permute.xlu0 %3002
    %3004 = vrot.lane.b32.xlu0 %v3001, 32
    %v3005 = vpop.permute.xlu0 %3004
    %vm3008 = vcmask 392448
    %3009 = vst.msk [vmem:[#allocation6] sm:$0xff] %vm3008, %v3003
    %3010 = vst.msk [vmem:[#allocation6 + $0x10] sm:$0xff] %vm3008, %v3005
    %v3011 = vld [vmem:[%s2798] ss:$2 sm:$0x3]
    %s3012 = scalar_lea.vmem %s2798, 16 [#allocation5]
    %v3013 = vld [vmem:[%s3012] ss:$2 sm:$0x3]
    %s3014 = scalar_lea.vmem %s2798, 32 [#allocation5]
    %v3015 = vld [vmem:[%s3014] ss:$2 sm:$0x3]
    %s3016 = scalar_lea.vmem %s2798, 48 [#allocation5]
    %v3017 = vld [vmem:[%s3016] ss:$2 sm:$0x3]
    %s3018 = scalar_lea.vmem %s2798, 80 [#allocation5]
    %v3019 = vld [vmem:[%s3018] ss:$2 sm:$0x3]
    %s3020 = scalar_lea.vmem %s2798, 96 [#allocation5]
    %v3021 = vld [vmem:[%s3020] ss:$2 sm:$0x3]
    %s3022 = scalar_lea.vmem %s2798, 112 [#allocation5]
    %v3023 = vld [vmem:[%s3022] ss:$2 sm:$0x3]
    %s3024 = scalar_lea.vmem %s2798, 128 [#allocation5]
    %v3025 = vld [vmem:[%s3024] ss:$2 sm:$0x3]
    %v3034 = vcombine.low %v3011, %v3013
    %v3035 = vcombine.low %v3015, %v3017
    %v3037 = vunpack.c.l.s4 1983009808
    %v3038 = vunpack.c.0.s8 %v3037
    %v3039 = vlaneseq
    %v3040 = vshrl.u32 %v3039, 7
    %v3041 = vsub.s32 %v3038, %v3040
    %v3042 = vrot.slane %v3034, %v3041
    %v3044 = vunpack.c.l.s4 1983009808
    %v3045 = vunpack.c.0.s8 %v3044
    %v3046 = vlaneseq
    %v3047 = vshrl.u32 %v3046, 7
    %v3048 = vsub.s32 %v3045, %v3047
    %v3049 = vrot.slane %v3035, %v3048
    %v3050 = vcombine.low %v3042, %v3049
    %v3051 = vcombine.low %v3019, %v3021
    %v3052 = vcombine.low %v3023, %v3025
    %v3054 = vunpack.c.l.s4 1983009808
    %v3055 = vunpack.c.0.s8 %v3054
    %v3056 = vlaneseq
    %v3057 = vshrl.u32 %v3056, 7
    %v3058 = vsub.s32 %v3055, %v3057
    %v3059 = vrot.slane %v3051, %v3058
    %v3061 = vunpack.c.l.s4 1983009808
    %v3062 = vunpack.c.0.s8 %v3061
    %v3063 = vlaneseq
    %v3064 = vshrl.u32 %v3063, 7
    %v3065 = vsub.s32 %v3062, %v3064
    %v3066 = vrot.slane %v3052, %v3065
    %v3067 = vcombine.low %v3059, %v3066
    %3068 = vrot.lane.b32.xlu0 %v3050, 48
    %v3069 = vpop.permute.xlu0 %3068
    %3070 = vrot.lane.b32.xlu0 %v3067, 48
    %v3071 = vpop.permute.xlu0 %3070
    %vm3074 = vcmask 523648
    %3075 = vst.msk [vmem:[#allocation6] sm:$0xff] %vm3074, %v3069
    %3076 = vst.msk [vmem:[#allocation6 + $0x10] sm:$0xff] %vm3074, %v3071
    %s3077 = scalar_lea.vmem %s2798, 1 [#allocation5]
    %v3078 = vld [vmem:[%s3077] ss:$2 sm:$0x3]
    %s3079 = scalar_lea.vmem %s2798, 17 [#allocation5]
    %v3080 = vld [vmem:[%s3079] ss:$2 sm:$0x3]
    %s3081 = scalar_lea.vmem %s2798, 33 [#allocation5]
    %v3082 = vld [vmem:[%s3081] ss:$2 sm:$0x3]
    %s3083 = scalar_lea.vmem %s2798, 49 [#allocation5]
    %v3084 = vld [vmem:[%s3083] ss:$2 sm:$0x3]
    %s3085 = scalar_lea.vmem %s2798, 81 [#allocation5]
    %v3086 = vld [vmem:[%s3085] ss:$2 sm:$0x3]
    %s3087 = scalar_lea.vmem %s2798, 97 [#allocation5]
    %v3088 = vld [vmem:[%s3087] ss:$2 sm:$0x3]
    %s3089 = scalar_lea.vmem %s2798, 113 [#allocation5]
    %v3090 = vld [vmem:[%s3089] ss:$2 sm:$0x3]
    %s3091 = scalar_lea.vmem %s2798, 129 [#allocation5]
    %v3092 = vld [vmem:[%s3091] ss:$2 sm:$0x3]
    %v3101 = vcombine.low %v3078, %v3080
    %v3102 = vcombine.low %v3082, %v3084
    %v3104 = vunpack.c.l.s4 1983009808
    %v3105 = vunpack.c.0.s8 %v3104
    %v3106 = vlaneseq
    %v3107 = vshrl.u32 %v3106, 7
    %v3108 = vsub.s32 %v3105, %v3107
    %v3109 = vrot.slane %v3101, %v3108
    %v3111 = vunpack.c.l.s4 1983009808
    %v3112 = vunpack.c.0.s8 %v3111
    %v3113 = vlaneseq
    %v3114 = vshrl.u32 %v3113, 7
    %v3115 = vsub.s32 %v3112, %v3114
    %v3116 = vrot.slane %v3102, %v3115
    %v3117 = vcombine.low %v3109, %v3116
    %v3118 = vcombine.low %v3086, %v3088
    %v3119 = vcombine.low %v3090, %v3092
    %v3121 = vunpack.c.l.s4 1983009808
    %v3122 = vunpack.c.0.s8 %v3121
    %v3123 = vlaneseq
    %v3124 = vshrl.u32 %v3123, 7
    %v3125 = vsub.s32 %v3122, %v3124
    %v3126 = vrot.slane %v3118, %v3125
    %v3128 = vunpack.c.l.s4 1983009808
    %v3129 = vunpack.c.0.s8 %v3128
    %v3130 = vlaneseq
    %v3131 = vshrl.u32 %v3130, 7
    %v3132 = vsub.s32 %v3129, %v3131
    %v3133 = vrot.slane %v3119, %v3132
    %v3134 = vcombine.low %v3126, %v3133
    %3135 = vrot.lane.b32.xlu0 %v3117, 64
    %v3136 = vpop.permute.xlu0 %3135
    %3137 = vrot.lane.b32.xlu0 %v3134, 64
    %v3138 = vpop.permute.xlu0 %3137
    %vm3141 = vcmask 654848
    %3142 = vst.msk [vmem:[#allocation6] sm:$0xff] %vm3141, %v3136
    %3143 = vst.msk [vmem:[#allocation6 + $0x10] sm:$0xff] %vm3141, %v3138
    %s3144 = scalar_lea.vmem %s2798, 2 [#allocation5]
    %v3145 = vld [vmem:[%s3144] ss:$2 sm:$0x3]
    %s3146 = scalar_lea.vmem %s2798, 18 [#allocation5]
    %v3147 = vld [vmem:[%s3146] ss:$2 sm:$0x3]
    %s3148 = scalar_lea.vmem %s2798, 34 [#allocation5]
    %v3149 = vld [vmem:[%s3148] ss:$2 sm:$0x3]
    %s3150 = scalar_lea.vmem %s2798, 50 [#allocation5]
    %v3151 = vld [vmem:[%s3150] ss:$2 sm:$0x3]
    %s3152 = scalar_lea.vmem %s2798, 82 [#allocation5]
    %v3153 = vld [vmem:[%s3152] ss:$2 sm:$0x3]
    %s3154 = scalar_lea.vmem %s2798, 98 [#allocation5]
    %v3155 = vld [vmem:[%s3154] ss:$2 sm:$0x3]
    %s3156 = scalar_lea.vmem %s2798, 114 [#allocation5]
    %v3157 = vld [vmem:[%s3156] ss:$2 sm:$0x3]
    %s3158 = scalar_lea.vmem %s2798, 130 [#allocation5]
    %v3159 = vld [vmem:[%s3158] ss:$2 sm:$0x3]
    %v3168 = vcombine.low %v3145, %v3147
    %v3169 = vcombine.low %v3149, %v3151
    %v3171 = vunpack.c.l.s4 1983009808
    %v3172 = vunpack.c.0.s8 %v3171
    %v3173 = vlaneseq
    %v3174 = vshrl.u32 %v3173, 7
    %v3175 = vsub.s32 %v3172, %v3174
    %v3176 = vrot.slane %v3168, %v3175
    %v3178 = vunpack.c.l.s4 1983009808
    %v3179 = vunpack.c.0.s8 %v3178
    %v3180 = vlaneseq
    %v3181 = vshrl.u32 %v3180, 7
    %v3182 = vsub.s32 %v3179, %v3181
    %v3183 = vrot.slane %v3169, %v3182
    %v3184 = vcombine.low %v3176, %v3183
    %v3185 = vcombine.low %v3153, %v3155
    %v3186 = vcombine.low %v3157, %v3159
    %v3188 = vunpack.c.l.s4 1983009808
    %v3189 = vunpack.c.0.s8 %v3188
    %v3190 = vlaneseq
    %v3191 = vshrl.u32 %v3190, 7
    %v3192 = vsub.s32 %v3189, %v3191
    %v3193 = vrot.slane %v3185, %v3192
    %v3195 = vunpack.c.l.s4 1983009808
    %v3196 = vunpack.c.0.s8 %v3195
    %v3197 = vlaneseq
    %v3198 = vshrl.u32 %v3197, 7
    %v3199 = vsub.s32 %v3196, %v3198
    %v3200 = vrot.slane %v3186, %v3199
    %v3201 = vcombine.low %v3193, %v3200
    %3202 = vrot.lane.b32.xlu0 %v3184, 80
    %v3203 = vpop.permute.xlu0 %3202
    %3204 = vrot.lane.b32.xlu0 %v3201, 80
    %v3205 = vpop.permute.xlu0 %3204
    %vm3208 = vcmask 786048
    %3209 = vst.msk [vmem:[#allocation6] sm:$0xff] %vm3208, %v3203
    %3210 = vst.msk [vmem:[#allocation6 + $0x10] sm:$0xff] %vm3208, %v3205
    %s3211 = scalar_lea.vmem [#allocation5], 16
    %v3212 = vld [vmem:[%s3211] ss:$2 sm:$0x3]
    %s3213 = scalar_lea.vmem %s3211, 16 [#allocation5]
    %v3214 = vld [vmem:[%s3213] ss:$2 sm:$0x3]
    %s3215 = scalar_lea.vmem %s3211, 32 [#allocation5]
    %v3216 = vld [vmem:[%s3215] ss:$2 sm:$0x3]
    %s3217 = scalar_lea.vmem %s3211, 48 [#allocation5]
    %v3218 = vld [vmem:[%s3217] ss:$2 sm:$0x3]
    %s3219 = scalar_lea.vmem %s3211, 80 [#allocation5]
    %v3220 = vld [vmem:[%s3219] ss:$2 sm:$0x3]
    %s3221 = scalar_lea.vmem %s3211, 96 [#allocation5]
    %v3222 = vld [vmem:[%s3221] ss:$2 sm:$0x3]
    %s3223 = scalar_lea.vmem %s3211, 112 [#allocation5]
    %v3224 = vld [vmem:[%s3223] ss:$2 sm:$0x3]
    %s3225 = scalar_lea.vmem %s3211, 128 [#allocation5]
    %v3226 = vld [vmem:[%s3225] ss:$2 sm:$0x3]
    %v3235 = vcombine.low %v3212, %v3214
    %v3236 = vcombine.low %v3216, %v3218
    %v3238 = vunpack.c.l.s4 1983009808
    %v3239 = vunpack.c.0.s8 %v3238
    %v3240 = vlaneseq
    %v3241 = vshrl.u32 %v3240, 7
    %v3242 = vsub.s32 %v3239, %v3241
    %v3243 = vrot.slane %v3235, %v3242
    %v3245 = vunpack.c.l.s4 1983009808
    %v3246 = vunpack.c.0.s8 %v3245
    %v3247 = vlaneseq
    %v3248 = vshrl.u32 %v3247, 7
    %v3249 = vsub.s32 %v3246, %v3248
    %v3250 = vrot.slane %v3236, %v3249
    %v3251 = vcombine.low %v3243, %v3250
    %v3252 = vcombine.low %v3220, %v3222
    %v3253 = vcombine.low %v3224, %v3226
    %v3255 = vunpack.c.l.s4 1983009808
    %v3256 = vunpack.c.0.s8 %v3255
    %v3257 = vlaneseq
    %v3258 = vshrl.u32 %v3257, 7
    %v3259 = vsub.s32 %v3256, %v3258
    %v3260 = vrot.slane %v3252, %v3259
    %v3262 = vunpack.c.l.s4 1983009808
    %v3263 = vunpack.c.0.s8 %v3262
    %v3264 = vlaneseq
    %v3265 = vshrl.u32 %v3264, 7
    %v3266 = vsub.s32 %v3263, %v3265
    %v3267 = vrot.slane %v3253, %v3266
    %v3268 = vcombine.low %v3260, %v3267
    %3269 = vrot.lane.b32.xlu0 %v3251, 96
    %v3270 = vpop.permute.xlu0 %3269
    %3271 = vrot.lane.b32.xlu0 %v3268, 96
    %v3272 = vpop.permute.xlu0 %3271
    %vm3275 = vcmask 917248
    %3276 = vst.msk [vmem:[#allocation6] sm:$0xff] %vm3275, %v3270
    %3277 = vst.msk [vmem:[#allocation6 + $0x10] sm:$0xff] %vm3275, %v3272
    %s3278 = scalar_lea.vmem %s3211, 1 [#allocation5]
    %v3279 = vld [vmem:[%s3278] ss:$2 sm:$0x3]
    %s3280 = scalar_lea.vmem %s3211, 17 [#allocation5]
    %v3281 = vld [vmem:[%s3280] ss:$2 sm:$0x3]
    %s3282 = scalar_lea.vmem %s3211, 33 [#allocation5]
    %v3283 = vld [vmem:[%s3282] ss:$2 sm:$0x3]
    %s3284 = scalar_lea.vmem %s3211, 49 [#allocation5]
    %v3285 = vld [vmem:[%s3284] ss:$2 sm:$0x3]
    %s3286 = scalar_lea.vmem %s3211, 81 [#allocation5]
    %v3287 = vld [vmem:[%s3286] ss:$2 sm:$0x3]
    %s3288 = scalar_lea.vmem %s3211, 97 [#allocation5]
    %v3289 = vld [vmem:[%s3288] ss:$2 sm:$0x3]
    %s3290 = scalar_lea.vmem %s3211, 113 [#allocation5]
    %v3291 = vld [vmem:[%s3290] ss:$2 sm:$0x3]
    %s3292 = scalar_lea.vmem %s3211, 129 [#allocation5]
    %v3293 = vld [vmem:[%s3292] ss:$2 sm:$0x3]
    %v3302 = vcombine.low %v3279, %v3281
    %v3303 = vcombine.low %v3283, %v3285
    %v3305 = vunpack.c.l.s4 1983009808
    %v3306 = vunpack.c.0.s8 %v3305
    %v3307 = vlaneseq
    %v3308 = vshrl.u32 %v3307, 7
    %v3309 = vsub.s32 %v3306, %v3308
    %v3310 = vrot.slane %v3302, %v3309
    %v3312 = vunpack.c.l.s4 1983009808
    %v3313 = vunpack.c.0.s8 %v3312
    %v3314 = vlaneseq
    %v3315 = vshrl.u32 %v3314, 7
    %v3316 = vsub.s32 %v3313, %v3315
    %v3317 = vrot.slane %v3303, %v3316
    %v3318 = vcombine.low %v3310, %v3317
    %v3319 = vcombine.low %v3287, %v3289
    %v3320 = vcombine.low %v3291, %v3293
    %v3322 = vunpack.c.l.s4 1983009808
    %v3323 = vunpack.c.0.s8 %v3322
    %v3324 = vlaneseq
    %v3325 = vshrl.u32 %v3324, 7
    %v3326 = vsub.s32 %v3323, %v3325
    %v3327 = vrot.slane %v3319, %v3326
    %v3329 = vunpack.c.l.s4 1983009808
    %v3330 = vunpack.c.0.s8 %v3329
    %v3331 = vlaneseq
    %v3332 = vshrl.u32 %v3331, 7
    %v3333 = vsub.s32 %v3330, %v3332
    %v3334 = vrot.slane %v3320, %v3333
    %v3335 = vcombine.low %v3327, %v3334
    %3336 = vrot.lane.b32.xlu0 %v3318, 112
    %v3337 = vpop.permute.xlu0 %3336
    %3338 = vrot.lane.b32.xlu0 %v3335, 112
    %v3339 = vpop.permute.xlu0 %3338
    %vm3342 = vcmask 1048448
    %3343 = vst.msk [vmem:[#allocation6] sm:$0xff] %vm3342, %v3337
    %3344 = vst.msk [vmem:[#allocation6 + $0x10] sm:$0xff] %vm3342, %v3339
    %s3345 = scalar_lea.vmem %s3211, 2 [#allocation5]
    %v3346 = vld [vmem:[%s3345] ss:$2 sm:$0x3]
    %s3347 = scalar_lea.vmem %s3211, 18 [#allocation5]
    %v3348 = vld [vmem:[%s3347] ss:$2 sm:$0x3]
    %s3349 = scalar_lea.vmem %s3211, 34 [#allocation5]
    %v3350 = vld [vmem:[%s3349] ss:$2 sm:$0x3]
    %s3351 = scalar_lea.vmem %s3211, 50 [#allocation5]
    %v3352 = vld [vmem:[%s3351] ss:$2 sm:$0x3]
    %s3353 = scalar_lea.vmem %s3211, 82 [#allocation5]
    %v3354 = vld [vmem:[%s3353] ss:$2 sm:$0x3]
    %s3355 = scalar_lea.vmem %s3211, 98 [#allocation5]
    %v3356 = vld [vmem:[%s3355] ss:$2 sm:$0x3]
    %s3357 = scalar_lea.vmem %s3211, 114 [#allocation5]
    %v3358 = vld [vmem:[%s3357] ss:$2 sm:$0x3]
    %s3359 = scalar_lea.vmem %s3211, 130 [#allocation5]
    %v3360 = vld [vmem:[%s3359] ss:$2 sm:$0x3]
    %v3369 = vcombine.low %v3346, %v3348
    %v3370 = vcombine.low %v3350, %v3352
    %v3372 = vunpack.c.l.s4 1983009808
    %v3373 = vunpack.c.0.s8 %v3372
    %v3374 = vlaneseq
    %v3375 = vshrl.u32 %v3374, 7
    %v3376 = vsub.s32 %v3373, %v3375
    %v3377 = vrot.slane %v3369, %v3376
    %v3379 = vunpack.c.l.s4 1983009808
    %v3380 = vunpack.c.0.s8 %v3379
    %v3381 = vlaneseq
    %v3382 = vshrl.u32 %v3381, 7
    %v3383 = vsub.s32 %v3380, %v3382
    %v3384 = vrot.slane %v3370, %v3383
    %v3385 = vcombine.low %v3377, %v3384
    %v3386 = vcombine.low %v3354, %v3356
    %v3387 = vcombine.low %v3358, %v3360
    %v3389 = vunpack.c.l.s4 1983009808
    %v3390 = vunpack.c.0.s8 %v3389
    %v3391 = vlaneseq
    %v3392 = vshrl.u32 %v3391, 7
    %v3393 = vsub.s32 %v3390, %v3392
    %v3394 = vrot.slane %v3386, %v3393
    %v3396 = vunpack.c.l.s4 1983009808
    %v3397 = vunpack.c.0.s8 %v3396
    %v3398 = vlaneseq
    %v3399 = vshrl.u32 %v3398, 7
    %v3400 = vsub.s32 %v3397, %v3399
    %v3401 = vrot.slane %v3387, %v3400
    %v3402 = vcombine.low %v3394, %v3401
    %3405 = vst.msk [vmem:[#allocation6 + $0x8] sm:$0xff] %vm2874, %v3385
    %3406 = vst.msk [vmem:[#allocation6 + $0x18] sm:$0xff] %vm2874, %v3402
    %v3407 = vld [vmem:[#allocation6] sm:$0xff]
    %v3408 = vld [vmem:[#allocation6 + $0x8] sm:$0xff]
    %v3409 = vld [vmem:[#allocation6 + $0x10] sm:$0xff]
    %v3410 = vld [vmem:[#allocation6 + $0x18] sm:$0xff]
    %v3411 = vpack.c.bf16 %v3409, %v3407
    %v3412 = vpack.c.bf16 %v3410, %v3408
    %v3413 = vld [vmem:[%s6] sm:$0xf]
    %v3414 = vld [vmem:[%s6 + $0x4] sm:$0xf]
    %v3415 = vld [vmem:[%s6 + $0x8] sm:$0xf]
    %v3416 = vld [vmem:[%s6 + $0xc] sm:$0xf]
    %v3417 = vld [vmem:[%s6 + $0x10] sm:$0xf]
    %v3418 = vld [vmem:[%s6 + $0x14] sm:$0xf]
    %v3419 = vld [vmem:[%s6 + $0x18] sm:$0xf]
    %v3420 = vld [vmem:[%s6 + $0x1c] sm:$0xf]
    %v3421 = vld [vmem:[%s6 + $0x20] sm:$0xf]
    %v3422 = vld [vmem:[%s6 + $0x24] sm:$0xf]
    %v3423 = vld [vmem:[%s6 + $0x28] sm:$0xf]
    %v3424 = vld [vmem:[%s6 + $0x2c] sm:$0xf]
    %v3425 = vld [vmem:[%s6 + $0x30] sm:$0xf]
    %v3426 = vld [vmem:[%s6 + $0x34] sm:$0xf]
    %v3427 = vld [vmem:[%s6 + $0x38] sm:$0xf]
    %v3428 = vld [vmem:[%s6 + $0x3c] sm:$0xf]
    %v3429 = vld [vmem:[%s6 + $0x40] sm:$0xf]
    %v3430 = vld [vmem:[%s6 + $0x44] sm:$0xf]
    %v3449 = vunpack.c.l.b16 %v3413
    %v3450 = vunpack.c.l.b16 %v3414
    %v3451 = vunpack.c.l.b16 %v3415
    %v3452 = vunpack.c.l.b16 %v3416
    %v3453 = vunpack.c.l.b16 %v3417
    %v3454 = vunpack.c.l.b16 %v3418
    %v3455 = vunpack.c.l.b16 %v3419
    %v3456 = vunpack.c.l.b16 %v3420
    %v3457 = vunpack.c.l.b16 %v3421
    %v3458 = vunpack.c.l.b16 %v3422
    %v3459 = vunpack.c.l.b16 %v3423
    %v3460 = vunpack.c.l.b16 %v3424
    %v3461 = vunpack.c.l.b16 %v3425
    %v3462 = vunpack.c.l.b16 %v3426
    %v3463 = vunpack.c.l.b16 %v3427
    %v3464 = vunpack.c.l.b16 %v3428
    %v3465 = vunpack.c.l.b16 %v3429
    %v3466 = vunpack.c.l.b16 %v3430
    %v3467 = vpack.c.b16 %v3450, %v3449
    %v3468 = vpack.c.b16 %v3452, %v3451
    %v3469 = vpack.c.b16 %v3454, %v3453
    %v3470 = vpack.c.b16 %v3456, %v3455
    %v3471 = vpack.c.b16 %v3458, %v3457
    %v3472 = vpack.c.b16 %v3460, %v3459
    %v3473 = vpack.c.b16 %v3462, %v3461
    %v3474 = vpack.c.b16 %v3464, %v3463
    %v3475 = vpack.c.b16 %v3466, %v3465
    %v3486 = vsel %vm2874, %v3412, 0
    %3488 = vmatprep.subr.bf16.mxu0 0
    %3489 = vmatpush1.bf16.msra.mxu0 %v3467
    %3490 = vmatprep.subr.bf16.mxu0 0
    %3491 = vmatpush1.bf16.msra.mxu0 %v3468
    %3492 = vmatprep.subr.bf16.mxu0 0
    %3493 = vmatpush1.bf16.msra.mxu0 %v3469
    %3494 = vmatprep.subr.bf16.mxu0 0
    %3495 = vmatpush1.bf16.msra.mxu0 %v3470
    %3496 = vmatprep.subr.bf16.mxu0 0
    %3497 = vmatpush1.bf16.msra.mxu0 %v3471
    %3498 = vmatprep.subr.bf16.mxu0 0
    %3499 = vmatpush1.bf16.msra.mxu0 %v3472
    %3500 = vmatprep.subr.bf16.mxu0 0
    %3501 = vmatpush1.bf16.msra.mxu0 %v3473
    %3502 = vmatprep.subr.bf16.mxu0 0
    %3503 = vmatpush1.bf16.msra.mxu0 %v3474
    %3504 = vmatprep.subr.bf16.mxu0 0
    %3505 = vmatpush1.bf16.msra.mxu0 %v3475
    %3506 = vmatprep.subr.bf16.mxu0 0
    %3507 = vmatpush1.bf16.msra.mxu0 0
    %3508 = vmatprep.subr.bf16.mxu0 0
    %3509 = vmatpush1.bf16.msra.mxu0 0
    %3510 = vmatprep.subr.bf16.mxu0 0
    %3511 = vmatpush1.bf16.msra.mxu0 0
    %3512 = vmatprep.subr.bf16.mxu0 0
    %3513 = vmatpush1.bf16.msra.mxu0 0
    %3514 = vmatprep.subr.bf16.mxu0 0
    %3515 = vmatpush1.bf16.msra.mxu0 0
    %3516 = vmatprep.subr.bf16.mxu0 0
    %3517 = vmatpush1.bf16.msra.mxu0 0
    %3518 = vmatprep.subr.bf16.mxu0 0
    %3519 = vmatpush1.bf16.msra.mxu0 0
    %3520 = vmatprep.mubr.bf16.mxu0 %v3486
    %3521 = vmatmul.mubr.bf16.gmra.mrb[0].mxu0 %v3411
    %v3522 = vpop.f32.mrb[0].mxu0
    %v3523 = vadd.f32 0.0, %v3522
    %v3524 = vpop.f32.mrb[0].mxu0
    %v3525 = vpop.f32.mrb[0].mxu0
    %v3526 = vadd.f32 0.0, %v3525
    %v3527 = vpop.f32.mrb[0].mxu0
    %3528 = vdwg.mxu0
    %v3529 = vld [vmem:[%s7] sm:$0x1]
    %v3531 = vlaneseq
    %v3532 = vshrl.u32 %v3531, 7
    %v3533 = vsub.s32 0, %v3532
    %v3534 = vrot.slane %v3529, %v3533
    %v3536 = vmul.f32 %v3523, %v3534
    %v3537 = vmul.f32 %v3526, %v3534
    %v3538 = vld [vmem:[%s8] sm:$0x1]
    %v3540 = vlaneseq
    %v3541 = vshrl.u32 %v3540, 7
    %v3542 = vsub.s32 0, %v3541
    %v3543 = vrot.slane %v3538, %v3542
    %v3545 = vadd.f32 %v3536, %v3543
    %v3546 = vadd.f32 %v3537, %v3543
    %v3547 = vmax.f32 %v3545, 0.0
    %v3548 = vmax.f32 %v3546, 0.0
    %3549 = vst [vmem:[#allocation7] sm:$0xf] 0.0
    %3550 = vst [vmem:[#allocation7 + $0x4] sm:$0xf] 0.0
    %3551 = vst [vmem:[#allocation7 + $0x8] sm:$0xf] 0.0
    %3552 = vst [vmem:[#allocation7 + $0xc] sm:$0xf] 0.0
    %3553 = vst [vmem:[#allocation7 + $0x10] sm:$0xf] 0.0
    %3554 = vst [vmem:[#allocation7 + $0x14] sm:$0xf] 0.0
    %3555 = vst [vmem:[#allocation7 + $0x18] sm:$0xf] 0.0
    %3556 = vst [vmem:[#allocation7 + $0x1c] sm:$0xf] 0.0
    %3557 = vst [vmem:[#allocation7 + $0x20] sm:$0xf] 0.0
    %3558 = vst [vmem:[#allocation7 + $0x24] sm:$0xf] 0.0
    %3559 = vst [vmem:[#allocation7 + $0x28] sm:$0xf] 0.0
    %3560 = vst [vmem:[#allocation7 + $0x2c] sm:$0xf] 0.0
    %v3563 = vcombine.high %v3547, %v3547
    %v3565 = vunpack.c.l.s4 1983009808
    %v3566 = vunpack.c.0.s8 %v3565
    %v3567 = vlaneseq
    %v3568 = vshrl.u32 %v3567, 7
    %v3569 = vsub.s32 %v3566, %v3568
    %v3570 = vrot.slane %v3547, %v3569
    %v3572 = vunpack.c.l.s4 1983009808
    %v3573 = vunpack.c.0.s8 %v3572
    %v3574 = vlaneseq
    %v3575 = vshrl.u32 %v3574, 7
    %v3576 = vsub.s32 %v3573, %v3575
    %v3577 = vrot.slane %v3563, %v3576
    %v3578 = vcombine.high %v3570, %v3570
    %v3579 = vcombine.high %v3577, %v3577
    %v3580 = vcombine.high %v3548, %v3548
    %v3582 = vunpack.c.l.s4 1983009808
    %v3583 = vunpack.c.0.s8 %v3582
    %v3584 = vlaneseq
    %v3585 = vshrl.u32 %v3584, 7
    %v3586 = vsub.s32 %v3583, %v3585
    %v3587 = vrot.slane %v3548, %v3586
    %v3589 = vunpack.c.l.s4 1983009808
    %v3590 = vunpack.c.0.s8 %v3589
    %v3591 = vlaneseq
    %v3592 = vshrl.u32 %v3591, 7
    %v3593 = vsub.s32 %v3590, %v3592
    %v3594 = vrot.slane %v3580, %v3593
    %v3595 = vcombine.high %v3587, %v3587
    %v3596 = vcombine.high %v3594, %v3594
    %s3605 = scalar_lea.vmem [#allocation7], 4
    %3606 = vst [vmem:[%s3605 + $0x1] sm:$0x3] %v3570
    %3607 = vst [vmem:[%s3605 + $0x5] sm:$0x3] %v3578
    %3608 = vst [vmem:[%s3605 + $0x9] sm:$0x3] %v3577
    %3609 = vst [vmem:[%s3605 + $0xd] sm:$0x3] %v3579
    %3610 = vst [vmem:[%s3605 + $0x19] sm:$0x3] %v3587
    %3611 = vst [vmem:[%s3605 + $0x1d] sm:$0x3] %v3595
    %3612 = vst [vmem:[%s3605 + $0x21] sm:$0x3] %v3594
    %3613 = vst [vmem:[%s3605 + $0x25] sm:$0x3] %v3596
    %v3614 = vld [vmem:[#allocation7] sm:$0x3]
    %v3615 = vld [vmem:[#allocation7 + $0x4] sm:$0x3]
    %v3616 = vld [vmem:[#allocation7 + $0x8] sm:$0x3]
    %v3617 = vld [vmem:[#allocation7 + $0xc] sm:$0x3]
    %v3618 = vld [vmem:[#allocation7 + $0x18] sm:$0x3]
    %v3619 = vld [vmem:[#allocation7 + $0x1c] sm:$0x3]
    %v3620 = vld [vmem:[#allocation7 + $0x20] sm:$0x3]
    %v3621 = vld [vmem:[#allocation7 + $0x24] sm:$0x3]
    %v3630 = vcombine.low %v3614, %v3615
    %v3631 = vcombine.low %v3616, %v3617
    %v3633 = vunpack.c.l.s4 1983009808
    %v3634 = vunpack.c.0.s8 %v3633
    %v3635 = vlaneseq
    %v3636 = vshrl.u32 %v3635, 7
    %v3637 = vsub.s32 %v3634, %v3636
    %v3638 = vrot.slane %v3630, %v3637
    %v3640 = vunpack.c.l.s4 1983009808
    %v3641 = vunpack.c.0.s8 %v3640
    %v3642 = vlaneseq
    %v3643 = vshrl.u32 %v3642, 7
    %v3644 = vsub.s32 %v3641, %v3643
    %v3645 = vrot.slane %v3631, %v3644
    %v3646 = vcombine.low %v3638, %v3645
    %v3647 = vcombine.low %v3618, %v3619
    %v3648 = vcombine.low %v3620, %v3621
    %v3650 = vunpack.c.l.s4 1983009808
    %v3651 = vunpack.c.0.s8 %v3650
    %v3652 = vlaneseq
    %v3653 = vshrl.u32 %v3652, 7
    %v3654 = vsub.s32 %v3651, %v3653
    %v3655 = vrot.slane %v3647, %v3654
    %v3657 = vunpack.c.l.s4 1983009808
    %v3658 = vunpack.c.0.s8 %v3657
    %v3659 = vlaneseq
    %v3660 = vshrl.u32 %v3659, 7
    %v3661 = vsub.s32 %v3658, %v3660
    %v3662 = vrot.slane %v3648, %v3661
    %v3663 = vcombine.low %v3655, %v3662
    %vm3666 = vcmask 261120
    %3667 = vst.msk [vmem:[#allocation8] sm:$0xff] %vm3666, %v3646
    %3668 = vst.msk [vmem:[#allocation8 + $0x18] sm:$0xff] %vm3666, %v3663
    %v3669 = vld [vmem:[#allocation7 + $0x1] sm:$0x3]
    %v3670 = vld [vmem:[#allocation7 + $0x5] sm:$0x3]
    %v3671 = vld [vmem:[#allocation7 + $0x9] sm:$0x3]
    %v3672 = vld [vmem:[#allocation7 + $0xd] sm:$0x3]
    %v3673 = vld [vmem:[#allocation7 + $0x19] sm:$0x3]
    %v3674 = vld [vmem:[#allocation7 + $0x1d] sm:$0x3]
    %v3675 = vld [vmem:[#allocation7 + $0x21] sm:$0x3]
    %v3676 = vld [vmem:[#allocation7 + $0x25] sm:$0x3]
    %v3685 = vcombine.low %v3669, %v3670
    %v3686 = vcombine.low %v3671, %v3672
    %v3688 = vunpack.c.l.s4 1983009808
    %v3689 = vunpack.c.0.s8 %v3688
    %v3690 = vlaneseq
    %v3691 = vshrl.u32 %v3690, 7
    %v3692 = vsub.s32 %v3689, %v3691
    %v3693 = vrot.slane %v3685, %v3692
    %v3695 = vunpack.c.l.s4 1983009808
    %v3696 = vunpack.c.0.s8 %v3695
    %v3697 = vlaneseq
    %v3698 = vshrl.u32 %v3697, 7
    %v3699 = vsub.s32 %v3696, %v3698
    %v3700 = vrot.slane %v3686, %v3699
    %v3701 = vcombine.low %v3693, %v3700
    %v3702 = vcombine.low %v3673, %v3674
    %v3703 = vcombine.low %v3675, %v3676
    %v3705 = vunpack.c.l.s4 1983009808
    %v3706 = vunpack.c.0.s8 %v3705
    %v3707 = vlaneseq
    %v3708 = vshrl.u32 %v3707, 7
    %v3709 = vsub.s32 %v3706, %v3708
    %v3710 = vrot.slane %v3702, %v3709
    %v3712 = vunpack.c.l.s4 1983009808
    %v3713 = vunpack.c.0.s8 %v3712
    %v3714 = vlaneseq
    %v3715 = vshrl.u32 %v3714, 7
    %v3716 = vsub.s32 %v3713, %v3715
    %v3717 = vrot.slane %v3703, %v3716
    %v3718 = vcombine.low %v3710, %v3717
    %3719 = vrot.lane.b32.xlu0 %v3701, 32
    %v3720 = vpop.permute.xlu0 %3719
    %3721 = vrot.lane.b32.xlu0 %v3718, 32
    %v3722 = vpop.permute.xlu0 %3721
    %vm3725 = vcmask 523520
    %3726 = vst.msk [vmem:[#allocation8] sm:$0xff] %vm3725, %v3720
    %3727 = vst.msk [vmem:[#allocation8 + $0x18] sm:$0xff] %vm3725, %v3722
    %v3728 = vld [vmem:[#allocation7 + $0x2] sm:$0x3]
    %v3729 = vld [vmem:[#allocation7 + $0x6] sm:$0x3]
    %v3730 = vld [vmem:[#allocation7 + $0xa] sm:$0x3]
    %v3731 = vld [vmem:[#allocation7 + $0xe] sm:$0x3]
    %v3732 = vld [vmem:[#allocation7 + $0x1a] sm:$0x3]
    %v3733 = vld [vmem:[#allocation7 + $0x1e] sm:$0x3]
    %v3734 = vld [vmem:[#allocation7 + $0x22] sm:$0x3]
    %v3735 = vld [vmem:[#allocation7 + $0x26] sm:$0x3]
    %v3744 = vcombine.low %v3728, %v3729
    %v3745 = vcombine.low %v3730, %v3731
    %v3747 = vunpack.c.l.s4 1983009808
    %v3748 = vunpack.c.0.s8 %v3747
    %v3749 = vlaneseq
    %v3750 = vshrl.u32 %v3749, 7
    %v3751 = vsub.s32 %v3748, %v3750
    %v3752 = vrot.slane %v3744, %v3751
    %v3754 = vunpack.c.l.s4 1983009808
    %v3755 = vunpack.c.0.s8 %v3754
    %v3756 = vlaneseq
    %v3757 = vshrl.u32 %v3756, 7
    %v3758 = vsub.s32 %v3755, %v3757
    %v3759 = vrot.slane %v3745, %v3758
    %v3760 = vcombine.low %v3752, %v3759
    %v3761 = vcombine.low %v3732, %v3733
    %v3762 = vcombine.low %v3734, %v3735
    %v3764 = vunpack.c.l.s4 1983009808
    %v3765 = vunpack.c.0.s8 %v3764
    %v3766 = vlaneseq
    %v3767 = vshrl.u32 %v3766, 7
    %v3768 = vsub.s32 %v3765, %v3767
    %v3769 = vrot.slane %v3761, %v3768
    %v3771 = vunpack.c.l.s4 1983009808
    %v3772 = vunpack.c.0.s8 %v3771
    %v3773 = vlaneseq
    %v3774 = vshrl.u32 %v3773, 7
    %v3775 = vsub.s32 %v3772, %v3774
    %v3776 = vrot.slane %v3762, %v3775
    %v3777 = vcombine.low %v3769, %v3776
    %3778 = vrot.lane.b32.xlu0 %v3760, 64
    %v3779 = vpop.permute.xlu0 %3778
    %3780 = vrot.lane.b32.xlu0 %v3777, 64
    %v3781 = vpop.permute.xlu0 %3780
    %vm3784 = vcmask 785920
    %3785 = vst.msk [vmem:[#allocation8] sm:$0xff] %vm3784, %v3779
    %3786 = vst.msk [vmem:[#allocation8 + $0x18] sm:$0xff] %vm3784, %v3781
    %v3787 = vld [vmem:[%s3605] sm:$0x3]
    %v3788 = vld [vmem:[%s3605 + $0x4] sm:$0x3]
    %v3789 = vld [vmem:[%s3605 + $0x8] sm:$0x3]
    %v3790 = vld [vmem:[%s3605 + $0xc] sm:$0x3]
    %v3791 = vld [vmem:[%s3605 + $0x18] sm:$0x3]
    %v3792 = vld [vmem:[%s3605 + $0x1c] sm:$0x3]
    %v3793 = vld [vmem:[%s3605 + $0x20] sm:$0x3]
    %v3794 = vld [vmem:[%s3605 + $0x24] sm:$0x3]
    %v3803 = vcombine.low %v3787, %v3788
    %v3804 = vcombine.low %v3789, %v3790
    %v3806 = vunpack.c.l.s4 1983009808
    %v3807 = vunpack.c.0.s8 %v3806
    %v3808 = vlaneseq
    %v3809 = vshrl.u32 %v3808, 7
    %v3810 = vsub.s32 %v3807, %v3809
    %v3811 = vrot.slane %v3803, %v3810
    %v3813 = vunpack.c.l.s4 1983009808
    %v3814 = vunpack.c.0.s8 %v3813
    %v3815 = vlaneseq
    %v3816 = vshrl.u32 %v3815, 7
    %v3817 = vsub.s32 %v3814, %v3816
    %v3818 = vrot.slane %v3804, %v3817
    %v3819 = vcombine.low %v3811, %v3818
    %v3820 = vcombine.low %v3791, %v3792
    %v3821 = vcombine.low %v3793, %v3794
    %v3823 = vunpack.c.l.s4 1983009808
    %v3824 = vunpack.c.0.s8 %v3823
    %v3825 = vlaneseq
    %v3826 = vshrl.u32 %v3825, 7
    %v3827 = vsub.s32 %v3824, %v3826
    %v3828 = vrot.slane %v3820, %v3827
    %v3830 = vunpack.c.l.s4 1983009808
    %v3831 = vunpack.c.0.s8 %v3830
    %v3832 = vlaneseq
    %v3833 = vshrl.u32 %v3832, 7
    %v3834 = vsub.s32 %v3831, %v3833
    %v3835 = vrot.slane %v3821, %v3834
    %v3836 = vcombine.low %v3828, %v3835
    %3837 = vrot.lane.b32.xlu0 %v3819, 96
    %v3838 = vpop.permute.xlu0 %3837
    %3839 = vrot.lane.b32.xlu0 %v3836, 96
    %v3840 = vpop.permute.xlu0 %3839
    %vm3843 = vcmask 1048320
    %3844 = vst.msk [vmem:[#allocation8] sm:$0xff] %vm3843, %v3838
    %3845 = vst.msk [vmem:[#allocation8 + $0x18] sm:$0xff] %vm3843, %v3840
    %v3846 = vld [vmem:[%s3605 + $0x1] sm:$0x3]
    %v3847 = vld [vmem:[%s3605 + $0x5] sm:$0x3]
    %v3848 = vld [vmem:[%s3605 + $0x9] sm:$0x3]
    %v3849 = vld [vmem:[%s3605 + $0xd] sm:$0x3]
    %v3850 = vld [vmem:[%s3605 + $0x19] sm:$0x3]
    %v3851 = vld [vmem:[%s3605 + $0x1d] sm:$0x3]
    %v3852 = vld [vmem:[%s3605 + $0x21] sm:$0x3]
    %v3853 = vld [vmem:[%s3605 + $0x25] sm:$0x3]
    %v3862 = vcombine.low %v3846, %v3847
    %v3863 = vcombine.low %v3848, %v3849
    %v3865 = vunpack.c.l.s4 1983009808
    %v3866 = vunpack.c.0.s8 %v3865
    %v3867 = vlaneseq
    %v3868 = vshrl.u32 %v3867, 7
    %v3869 = vsub.s32 %v3866, %v3868
    %v3870 = vrot.slane %v3862, %v3869
    %v3872 = vunpack.c.l.s4 1983009808
    %v3873 = vunpack.c.0.s8 %v3872
    %v3874 = vlaneseq
    %v3875 = vshrl.u32 %v3874, 7
    %v3876 = vsub.s32 %v3873, %v3875
    %v3877 = vrot.slane %v3863, %v3876
    %v3878 = vcombine.low %v3870, %v3877
    %v3879 = vcombine.low %v3850, %v3851
    %v3880 = vcombine.low %v3852, %v3853
    %v3882 = vunpack.c.l.s4 1983009808
    %v3883 = vunpack.c.0.s8 %v3882
    %v3884 = vlaneseq
    %v3885 = vshrl.u32 %v3884, 7
    %v3886 = vsub.s32 %v3883, %v3885
    %v3887 = vrot.slane %v3879, %v3886
    %v3889 = vunpack.c.l.s4 1983009808
    %v3890 = vunpack.c.0.s8 %v3889
    %v3891 = vlaneseq
    %v3892 = vshrl.u32 %v3891, 7
    %v3893 = vsub.s32 %v3890, %v3892
    %v3894 = vrot.slane %v3880, %v3893
    %v3895 = vcombine.low %v3887, %v3894
    %3898 = vst.msk [vmem:[#allocation8 + $0x8] sm:$0xff] %vm3666, %v3878
    %3899 = vst.msk [vmem:[#allocation8 + $0x20] sm:$0xff] %vm3666, %v3895
    %v3900 = vld [vmem:[%s3605 + $0x2] sm:$0x3]
    %v3901 = vld [vmem:[%s3605 + $0x6] sm:$0x3]
    %v3902 = vld [vmem:[%s3605 + $0xa] sm:$0x3]
    %v3903 = vld [vmem:[%s3605 + $0xe] sm:$0x3]
    %v3904 = vld [vmem:[%s3605 + $0x1a] sm:$0x3]
    %v3905 = vld [vmem:[%s3605 + $0x1e] sm:$0x3]
    %v3906 = vld [vmem:[%s3605 + $0x22] sm:$0x3]
    %v3907 = vld [vmem:[%s3605 + $0x26] sm:$0x3]
    %v3916 = vcombine.low %v3900, %v3901
    %v3917 = vcombine.low %v3902, %v3903
    %v3919 = vunpack.c.l.s4 1983009808
    %v3920 = vunpack.c.0.s8 %v3919
    %v3921 = vlaneseq
    %v3922 = vshrl.u32 %v3921, 7
    %v3923 = vsub.s32 %v3920, %v3922
    %v3924 = vrot.slane %v3916, %v3923
    %v3926 = vunpack.c.l.s4 1983009808
    %v3927 = vunpack.c.0.s8 %v3926
    %v3928 = vlaneseq
    %v3929 = vshrl.u32 %v3928, 7
    %v3930 = vsub.s32 %v3927, %v3929
    %v3931 = vrot.slane %v3917, %v3930
    %v3932 = vcombine.low %v3924, %v3931
    %v3933 = vcombine.low %v3904, %v3905
    %v3934 = vcombine.low %v3906, %v3907
    %v3936 = vunpack.c.l.s4 1983009808
    %v3937 = vunpack.c.0.s8 %v3936
    %v3938 = vlaneseq
    %v3939 = vshrl.u32 %v3938, 7
    %v3940 = vsub.s32 %v3937, %v3939
    %v3941 = vrot.slane %v3933, %v3940
    %v3943 = vunpack.c.l.s4 1983009808
    %v3944 = vunpack.c.0.s8 %v3943
    %v3945 = vlaneseq
    %v3946 = vshrl.u32 %v3945, 7
    %v3947 = vsub.s32 %v3944, %v3946
    %v3948 = vrot.slane %v3934, %v3947
    %v3949 = vcombine.low %v3941, %v3948
    %3950 = vrot.lane.b32.xlu0 %v3932, 32
    %v3951 = vpop.permute.xlu0 %3950
    %3952 = vrot.lane.b32.xlu0 %v3949, 32
    %v3953 = vpop.permute.xlu0 %3952
    %3956 = vst.msk [vmem:[#allocation8 + $0x8] sm:$0xff] %vm3725, %v3951
    %3957 = vst.msk [vmem:[#allocation8 + $0x20] sm:$0xff] %vm3725, %v3953
    %s3958 = scalar_lea.vmem [#allocation7], 8
    %v3959 = vld [vmem:[%s3958] sm:$0x3]
    %v3960 = vld [vmem:[%s3958 + $0x4] sm:$0x3]
    %v3961 = vld [vmem:[%s3958 + $0x8] sm:$0x3]
    %v3962 = vld [vmem:[%s3958 + $0xc] sm:$0x3]
    %v3963 = vld [vmem:[%s3958 + $0x18] sm:$0x3]
    %v3964 = vld [vmem:[%s3958 + $0x1c] sm:$0x3]
    %v3965 = vld [vmem:[%s3958 + $0x20] sm:$0x3]
    %v3966 = vld [vmem:[%s3958 + $0x24] sm:$0x3]
    %v3975 = vcombine.low %v3959, %v3960
    %v3976 = vcombine.low %v3961, %v3962
    %v3978 = vunpack.c.l.s4 1983009808
    %v3979 = vunpack.c.0.s8 %v3978
    %v3980 = vlaneseq
    %v3981 = vshrl.u32 %v3980, 7
    %v3982 = vsub.s32 %v3979, %v3981
    %v3983 = vrot.slane %v3975, %v3982
    %v3985 = vunpack.c.l.s4 1983009808
    %v3986 = vunpack.c.0.s8 %v3985
    %v3987 = vlaneseq
    %v3988 = vshrl.u32 %v3987, 7
    %v3989 = vsub.s32 %v3986, %v3988
    %v3990 = vrot.slane %v3976, %v3989
    %v3991 = vcombine.low %v3983, %v3990
    %v3992 = vcombine.low %v3963, %v3964
    %v3993 = vcombine.low %v3965, %v3966
    %v3995 = vunpack.c.l.s4 1983009808
    %v3996 = vunpack.c.0.s8 %v3995
    %v3997 = vlaneseq
    %v3998 = vshrl.u32 %v3997, 7
    %v3999 = vsub.s32 %v3996, %v3998
    %v4000 = vrot.slane %v3992, %v3999
    %v4002 = vunpack.c.l.s4 1983009808
    %v4003 = vunpack.c.0.s8 %v4002
    %v4004 = vlaneseq
    %v4005 = vshrl.u32 %v4004, 7
    %v4006 = vsub.s32 %v4003, %v4005
    %v4007 = vrot.slane %v3993, %v4006
    %v4008 = vcombine.low %v4000, %v4007
    %4009 = vrot.lane.b32.xlu0 %v3991, 64
    %v4010 = vpop.permute.xlu0 %4009
    %4011 = vrot.lane.b32.xlu0 %v4008, 64
    %v4012 = vpop.permute.xlu0 %4011
    %4015 = vst.msk [vmem:[#allocation8 + $0x8] sm:$0xff] %vm3784, %v4010
    %4016 = vst.msk [vmem:[#allocation8 + $0x20] sm:$0xff] %vm3784, %v4012
    %v4017 = vld [vmem:[%s3958 + $0x1] sm:$0x3]
    %v4018 = vld [vmem:[%s3958 + $0x5] sm:$0x3]
    %v4019 = vld [vmem:[%s3958 + $0x9] sm:$0x3]
    %v4020 = vld [vmem:[%s3958 + $0xd] sm:$0x3]
    %v4021 = vld [vmem:[%s3958 + $0x19] sm:$0x3]
    %v4022 = vld [vmem:[%s3958 + $0x1d] sm:$0x3]
    %v4023 = vld [vmem:[%s3958 + $0x21] sm:$0x3]
    %v4024 = vld [vmem:[%s3958 + $0x25] sm:$0x3]
    %v4033 = vcombine.low %v4017, %v4018
    %v4034 = vcombine.low %v4019, %v4020
    %v4036 = vunpack.c.l.s4 1983009808
    %v4037 = vunpack.c.0.s8 %v4036
    %v4038 = vlaneseq
    %v4039 = vshrl.u32 %v4038, 7
    %v4040 = vsub.s32 %v4037, %v4039
    %v4041 = vrot.slane %v4033, %v4040
    %v4043 = vunpack.c.l.s4 1983009808
    %v4044 = vunpack.c.0.s8 %v4043
    %v4045 = vlaneseq
    %v4046 = vshrl.u32 %v4045, 7
    %v4047 = vsub.s32 %v4044, %v4046
    %v4048 = vrot.slane %v4034, %v4047
    %v4049 = vcombine.low %v4041, %v4048
    %v4050 = vcombine.low %v4021, %v4022
    %v4051 = vcombine.low %v4023, %v4024
    %v4053 = vunpack.c.l.s4 1983009808
    %v4054 = vunpack.c.0.s8 %v4053
    %v4055 = vlaneseq
    %v4056 = vshrl.u32 %v4055, 7
    %v4057 = vsub.s32 %v4054, %v4056
    %v4058 = vrot.slane %v4050, %v4057
    %v4060 = vunpack.c.l.s4 1983009808
    %v4061 = vunpack.c.0.s8 %v4060
    %v4062 = vlaneseq
    %v4063 = vshrl.u32 %v4062, 7
    %v4064 = vsub.s32 %v4061, %v4063
    %v4065 = vrot.slane %v4051, %v4064
    %v4066 = vcombine.low %v4058, %v4065
    %4067 = vrot.lane.b32.xlu0 %v4049, 96
    %v4068 = vpop.permute.xlu0 %4067
    %4069 = vrot.lane.b32.xlu0 %v4066, 96
    %v4070 = vpop.permute.xlu0 %4069
    %4073 = vst.msk [vmem:[#allocation8 + $0x8] sm:$0xff] %vm3843, %v4068
    %4074 = vst.msk [vmem:[#allocation8 + $0x20] sm:$0xff] %vm3843, %v4070
    %v4075 = vld [vmem:[%s3958 + $0x2] sm:$0x3]
    %v4076 = vld [vmem:[%s3958 + $0x6] sm:$0x3]
    %v4077 = vld [vmem:[%s3958 + $0xa] sm:$0x3]
    %v4078 = vld [vmem:[%s3958 + $0xe] sm:$0x3]
    %v4079 = vld [vmem:[%s3958 + $0x1a] sm:$0x3]
    %v4080 = vld [vmem:[%s3958 + $0x1e] sm:$0x3]
    %v4081 = vld [vmem:[%s3958 + $0x22] sm:$0x3]
    %v4082 = vld [vmem:[%s3958 + $0x26] sm:$0x3]
    %v4091 = vcombine.low %v4075, %v4076
    %v4092 = vcombine.low %v4077, %v4078
    %v4094 = vunpack.c.l.s4 1983009808
    %v4095 = vunpack.c.0.s8 %v4094
    %v4096 = vlaneseq
    %v4097 = vshrl.u32 %v4096, 7
    %v4098 = vsub.s32 %v4095, %v4097
    %v4099 = vrot.slane %v4091, %v4098
    %v4101 = vunpack.c.l.s4 1983009808
    %v4102 = vunpack.c.0.s8 %v4101
    %v4103 = vlaneseq
    %v4104 = vshrl.u32 %v4103, 7
    %v4105 = vsub.s32 %v4102, %v4104
    %v4106 = vrot.slane %v4092, %v4105
    %v4107 = vcombine.low %v4099, %v4106
    %v4108 = vcombine.low %v4079, %v4080
    %v4109 = vcombine.low %v4081, %v4082
    %v4111 = vunpack.c.l.s4 1983009808
    %v4112 = vunpack.c.0.s8 %v4111
    %v4113 = vlaneseq
    %v4114 = vshrl.u32 %v4113, 7
    %v4115 = vsub.s32 %v4112, %v4114
    %v4116 = vrot.slane %v4108, %v4115
    %v4118 = vunpack.c.l.s4 1983009808
    %v4119 = vunpack.c.0.s8 %v4118
    %v4120 = vlaneseq
    %v4121 = vshrl.u32 %v4120, 7
    %v4122 = vsub.s32 %v4119, %v4121
    %v4123 = vrot.slane %v4109, %v4122
    %v4124 = vcombine.low %v4116, %v4123
    %4127 = vst.msk [vmem:[#allocation8 + $0x10] sm:$0xff] %vm3666, %v4107
    %4128 = vst.msk [vmem:[#allocation8 + $0x28] sm:$0xff] %vm3666, %v4124
    %v4129 = vld [vmem:[#allocation8] sm:$0xff]
    %v4130 = vld [vmem:[#allocation8 + $0x8] sm:$0xff]
    %v4131 = vld [vmem:[#allocation8 + $0x10] sm:$0xff]
    %v4132 = vld [vmem:[#allocation8 + $0x18] sm:$0xff]
    %v4133 = vld [vmem:[#allocation8 + $0x20] sm:$0xff]
    %v4134 = vld [vmem:[#allocation8 + $0x28] sm:$0xff]
    %v4135 = vpack.c.bf16 %v4132, %v4129
    %v4136 = vpack.c.bf16 %v4133, %v4130
    %v4137 = vpack.c.bf16 %v4134, %v4131
    %v4138 = vld [vmem:[%s9] sm:$0xf]
    %v4139 = vld [vmem:[%s9 + $0x4] sm:$0xf]
    %v4140 = vld [vmem:[%s9 + $0x8] sm:$0xf]
    %v4141 = vld [vmem:[%s9 + $0xc] sm:$0xf]
    %v4142 = vld [vmem:[%s9 + $0x10] sm:$0xf]
    %v4143 = vld [vmem:[%s9 + $0x14] sm:$0xf]
    %v4144 = vld [vmem:[%s9 + $0x18] sm:$0xf]
    %v4145 = vld [vmem:[%s9 + $0x1c] sm:$0xf]
    %v4146 = vld [vmem:[%s9 + $0x20] sm:$0xf]
    %v4147 = vld [vmem:[%s9 + $0x24] sm:$0xf]
    %v4148 = vld [vmem:[%s9 + $0x28] sm:$0xf]
    %v4149 = vld [vmem:[%s9 + $0x2c] sm:$0xf]
    %v4150 = vld [vmem:[%s9 + $0x30] sm:$0xf]
    %v4151 = vld [vmem:[%s9 + $0x34] sm:$0xf]
    %v4152 = vld [vmem:[%s9 + $0x38] sm:$0xf]
    %v4153 = vld [vmem:[%s9 + $0x3c] sm:$0xf]
    %v4154 = vld [vmem:[%s9 + $0x40] sm:$0xf]
    %v4155 = vld [vmem:[%s9 + $0x44] sm:$0xf]
    %v4156 = vld [vmem:[%s9 + $0x48] sm:$0xf]
    %v4157 = vld [vmem:[%s9 + $0x4c] sm:$0xf]
    %v4158 = vld [vmem:[%s9 + $0x50] sm:$0xf]
    %v4159 = vld [vmem:[%s9 + $0x54] sm:$0xf]
    %v4160 = vld [vmem:[%s9 + $0x58] sm:$0xf]
    %v4161 = vld [vmem:[%s9 + $0x5c] sm:$0xf]
    %v4162 = vld [vmem:[%s9 + $0x60] sm:$0xf]
    %v4163 = vld [vmem:[%s9 + $0x64] sm:$0xf]
    %v4164 = vld [vmem:[%s9 + $0x68] sm:$0xf]
    %v4165 = vld [vmem:[%s9 + $0x6c] sm:$0xf]
    %v4166 = vld [vmem:[%s9 + $0x70] sm:$0xf]
    %v4167 = vld [vmem:[%s9 + $0x74] sm:$0xf]
    %v4168 = vld [vmem:[%s9 + $0x78] sm:$0xf]
    %v4169 = vld [vmem:[%s9 + $0x7c] sm:$0xf]
    %v4170 = vld [vmem:[%s9 + $0x80] sm:$0xf]
    %v4171 = vld [vmem:[%s9 + $0x84] sm:$0xf]
    %v4172 = vld [vmem:[%s9 + $0x88] sm:$0xf]
    %v4173 = vld [vmem:[%s9 + $0x8c] sm:$0xf]
    %v4210 = vunpack.c.l.b16 %v4138
    %v4211 = vunpack.c.l.b16 %v4139
    %v4212 = vunpack.c.l.b16 %v4140
    %v4213 = vunpack.c.l.b16 %v4141
    %v4214 = vunpack.c.l.b16 %v4142
    %v4215 = vunpack.c.l.b16 %v4143
    %v4216 = vunpack.c.l.b16 %v4144
    %v4217 = vunpack.c.l.b16 %v4145
    %v4218 = vunpack.c.l.b16 %v4146
    %v4219 = vunpack.c.l.b16 %v4147
    %v4220 = vunpack.c.l.b16 %v4148
    %v4221 = vunpack.c.l.b16 %v4149
    %v4222 = vunpack.c.l.b16 %v4150
    %v4223 = vunpack.c.l.b16 %v4151
    %v4224 = vunpack.c.l.b16 %v4152
    %v4225 = vunpack.c.l.b16 %v4153
    %v4226 = vunpack.c.l.b16 %v4154
    %v4227 = vunpack.c.l.b16 %v4155
    %v4228 = vunpack.c.l.b16 %v4156
    %v4229 = vunpack.c.l.b16 %v4157
    %v4230 = vunpack.c.l.b16 %v4158
    %v4231 = vunpack.c.l.b16 %v4159
    %v4232 = vunpack.c.l.b16 %v4160
    %v4233 = vunpack.c.l.b16 %v4161
    %v4234 = vunpack.c.l.b16 %v4162
    %v4235 = vunpack.c.l.b16 %v4163
    %v4236 = vunpack.c.l.b16 %v4164
    %v4237 = vunpack.c.l.b16 %v4165
    %v4238 = vunpack.c.l.b16 %v4166
    %v4239 = vunpack.c.l.b16 %v4167
    %v4240 = vunpack.c.l.b16 %v4168
    %v4241 = vunpack.c.l.b16 %v4169
    %v4242 = vunpack.c.l.b16 %v4170
    %v4243 = vunpack.c.l.b16 %v4171
    %v4244 = vunpack.c.l.b16 %v4172
    %v4245 = vunpack.c.l.b16 %v4173
    %v4246 = vpack.c.b16 %v4211, %v4210
    %v4247 = vpack.c.b16 %v4213, %v4212
    %v4248 = vpack.c.b16 %v4215, %v4214
    %v4249 = vpack.c.b16 %v4217, %v4216
    %v4250 = vpack.c.b16 %v4219, %v4218
    %v4251 = vpack.c.b16 %v4221, %v4220
    %v4252 = vpack.c.b16 %v4223, %v4222
    %v4253 = vpack.c.b16 %v4225, %v4224
    %v4254 = vpack.c.b16 %v4227, %v4226
    %v4255 = vpack.c.b16 %v4229, %v4228
    %v4256 = vpack.c.b16 %v4231, %v4230
    %v4257 = vpack.c.b16 %v4233, %v4232
    %v4258 = vpack.c.b16 %v4235, %v4234
    %v4259 = vpack.c.b16 %v4237, %v4236
    %v4260 = vpack.c.b16 %v4239, %v4238
    %v4261 = vpack.c.b16 %v4241, %v4240
    %v4262 = vpack.c.b16 %v4243, %v4242
    %v4263 = vpack.c.b16 %v4245, %v4244
    %v4283 = vsel %vm3666, %v4137, 0
    %4285 = vmatprep.subr.bf16.mxu0 0
    %4286 = vmatpush1.bf16.msra.mxu0 %v4246
    %4287 = vmatprep.subr.bf16.mxu0 0
    %4288 = vmatpush1.bf16.msra.mxu0 %v4247
    %4289 = vmatprep.subr.bf16.mxu0 0
    %4290 = vmatpush1.bf16.msra.mxu0 %v4248
    %4291 = vmatprep.subr.bf16.mxu0 0
    %4292 = vmatpush1.bf16.msra.mxu0 %v4249
    %4293 = vmatprep.subr.bf16.mxu0 0
    %4294 = vmatpush1.bf16.msra.mxu0 %v4250
    %4295 = vmatprep.subr.bf16.mxu0 0
    %4296 = vmatpush1.bf16.msra.mxu0 %v4251
    %4297 = vmatprep.subr.bf16.mxu0 0
    %4298 = vmatpush1.bf16.msra.mxu0 %v4252
    %4299 = vmatprep.subr.bf16.mxu0 0
    %4300 = vmatpush1.bf16.msra.mxu0 %v4253
    %4301 = vmatprep.subr.bf16.mxu0 0
    %4302 = vmatpush1.bf16.msra.mxu0 %v4254
    %4303 = vmatprep.subr.bf16.mxu0 0
    %4304 = vmatpush1.bf16.msra.mxu0 %v4255
    %4305 = vmatprep.subr.bf16.mxu0 0
    %4306 = vmatpush1.bf16.msra.mxu0 %v4256
    %4307 = vmatprep.subr.bf16.mxu0 0
    %4308 = vmatpush1.bf16.msra.mxu0 %v4257
    %4309 = vmatprep.subr.bf16.mxu0 0
    %4310 = vmatpush1.bf16.msra.mxu0 %v4258
    %4311 = vmatprep.subr.bf16.mxu0 0
    %4312 = vmatpush1.bf16.msra.mxu0 %v4259
    %4313 = vmatprep.subr.bf16.mxu0 0
    %4314 = vmatpush1.bf16.msra.mxu0 %v4260
    %4315 = vmatprep.subr.bf16.mxu0 0
    %4316 = vmatpush1.bf16.msra.mxu0 %v4261
    %4317 = vmatprep.mubr.bf16.mxu0 %v4136
    %4318 = vmatmul.mubr.bf16.gmra.mrb[0].mxu0 %v4135
    %v4319 = vpop.f32.mrb[0].mxu0
    %v4320 = vadd.f32 0.0, %v4319
    %v4321 = vpop.f32.mrb[0].mxu0
    %v4322 = vpop.f32.mrb[0].mxu0
    %v4323 = vadd.f32 0.0, %v4322
    %v4324 = vpop.f32.mrb[0].mxu0
    %4325 = vdwg.mxu0
    %4326 = vmatprep.subr.bf16.mxu0 0
    %4327 = vmatpush1.bf16.msra.mxu0 %v4262
    %4328 = vmatprep.subr.bf16.mxu0 0
    %4329 = vmatpush1.bf16.msra.mxu0 %v4263
    %4330 = vmatprep.subr.bf16.mxu0 0
    %4331 = vmatpush1.bf16.msra.mxu0 0
    %4332 = vmatprep.subr.bf16.mxu0 0
    %4333 = vmatpush1.bf16.msra.mxu0 0
    %4334 = vmatprep.subr.bf16.mxu0 0
    %4335 = vmatpush1.bf16.msra.mxu0 0
    %4336 = vmatprep.subr.bf16.mxu0 0
    %4337 = vmatpush1.bf16.msra.mxu0 0
    %4338 = vmatprep.subr.bf16.mxu0 0
    %4339 = vmatpush1.bf16.msra.mxu0 0
    %4340 = vmatprep.subr.bf16.mxu0 0
    %4341 = vmatpush1.bf16.msra.mxu0 0
    %4342 = vmatprep.subr.bf16.mxu0 0
    %4343 = vmatpush1.bf16.msra.mxu0 0
    %4344 = vmatprep.subr.bf16.mxu0 0
    %4345 = vmatpush1.bf16.msra.mxu0 0
    %4346 = vmatprep.subr.bf16.mxu0 0
    %4347 = vmatpush1.bf16.msra.mxu0 0
    %4348 = vmatprep.subr.bf16.mxu0 0
    %4349 = vmatpush1.bf16.msra.mxu0 0
    %4350 = vmatprep.subr.bf16.mxu0 0
    %4351 = vmatpush1.bf16.msra.mxu0 0
    %4352 = vmatprep.subr.bf16.mxu0 0
    %4353 = vmatpush1.bf16.msra.mxu0 0
    %4354 = vmatprep.subr.bf16.mxu0 0
    %4355 = vmatpush1.bf16.msra.mxu0 0
    %4356 = vmatprep.subr.bf16.mxu0 0
    %4357 = vmatpush1.bf16.msra.mxu0 0
    %4358 = vmatprep.mubr.bf16.mxu0 0
    %4359 = vmatmul.mubr.bf16.gmra.mrb[0].mxu0 %v4283
    %v4360 = vpop.f32.mrb[0].mxu0
    %v4361 = vadd.f32 %v4320, %v4360
    %v4362 = vpop.f32.mrb[0].mxu0
    %v4363 = vpop.f32.mrb[0].mxu0
    %v4364 = vadd.f32 %v4323, %v4363
    %v4365 = vpop.f32.mrb[0].mxu0
    %4366 = vdwg.mxu0
    %v4367 = vld [vmem:[%s10] sm:$0x1]
    %v4369 = vlaneseq
    %v4370 = vshrl.u32 %v4369, 7
    %v4371 = vsub.s32 0, %v4370
    %v4372 = vrot.slane %v4367, %v4371
    %v4374 = vmul.f32 %v4361, %v4372
    %v4375 = vmul.f32 %v4364, %v4372
    %v4376 = vld [vmem:[%s11] sm:$0x1]
    %v4378 = vlaneseq
    %v4379 = vshrl.u32 %v4378, 7
    %v4380 = vsub.s32 0, %v4379
    %v4381 = vrot.slane %v4376, %v4380
    %v4383 = vadd.f32 %v4374, %v4381
    %v4384 = vadd.f32 %v4375, %v4381
    %v4385 = vmax.f32 %v4383, 0.0
    %v4386 = vmax.f32 %v4384, 0.0
    %v4387 = vrot.slane %v4385, 4
    %v4388 = vadd.f32 %v4385, %v4387
    %v4389 = vrot.slane %v4388, 2
    %v4390 = vadd.f32 %v4388, %v4389
    %v4391 = vrot.slane %v4390, 1
    %v4392 = vadd.f32 %v4390, %v4391
    %v4393 = vrot.slane %v4386, 4
    %v4394 = vadd.f32 %v4386, %v4393
    %v4395 = vrot.slane %v4394, 2
    %v4396 = vadd.f32 %v4394, %v4395
    %v4397 = vrot.slane %v4396, 1
    %v4398 = vadd.f32 %v4396, %v4397
    %v4399 = vmul.f32 %v4392, 0.125
    %v4400 = vmul.f32 %v4398, 0.125
    %v4401 = vmul.f32 %v4399, %v4399
    %v4402 = vmul.f32 %v4400, %v4400
    %vm4405 = vcmask 1041409
    %v4406 = vsel %vm4405, %v4402, %v4401
    %vm4408 = vcmask 517120
    %v4409 = vsel %vm4408, %v4406, 0.0
    %4410 = vadd.xlane.f32.xlu0 %v4409
    %v4411 = vpop.xlane.xlu0 %4410
    %v4412 = vmax.f32 %v4411, 1e-24
    %v4413 = vrsqrt.pop %v4412
    %v4415 = vrot.slane %v4413, 1
    %v4418 = vmul.f32 %v4399, %v4413
    %v4419 = vmul.f32 %v4400, %v4415
    %v4422 = vrot.slane %v4419, 7
    %v4423 = vsel %vm4405, %v4422, %v4418
    %4425 = vst.msk [vmem:[#allocation9] sm:$0x3] %vm4408, %v4423
    // Predicated region
    $region50: #{_lambda_.1} parent=1 // pred_check
      _
    $region51: #{_lambda_.1} parent=1 // pred_check_branch
      %4427 = sbr.rel (0) target = $region53
    $region52: #{_lambda_.1} parent=1 // pred_region
      %s4429 = ssub.s32 32, 32
      %4430 = vsyncadd [#allocation10], %s4429
      %s4432 = sshll.u32 [#allocation9], 4
      %s4433 = int_to_ptr.vmem [resolvable:$true] %s4432
      %4435 = dma.vmem_to_hbm [thread:$0]  %s4433, 32, %s12, [#allocation10]
    $region53: #{_lambda_.1} parent=1 // pred_fallthru
      _
    // Predicated region
    $region54: #{_lambda_.1} parent=1 // pred_check
      _
    $region55: #{_lambda_.1} parent=1 // pred_check_branch
      %4437 = sbr.rel (0) target = $region57
    $region56: #{_lambda_.1} parent=1 // pred_region
      %4438 = dma.done [#allocation10], 32
    $region57: #{_lambda_.1} parent=1 // pred_fallthru
      _
    %4439 = vsyncpa [#allocation10], 1

</llo_original>
